<compile_context>
chip_gen: v7x
topology: tpu7x:2x2x1
jax: 0.10.0
libtpu: 0.0.40
codegen_flags: <defaults>
</compile_context>

<pallas_src>
import numpy as np
import jax
import jax.numpy as jnp
from jax.experimental import pallas as pl
from jax.experimental.pallas import tpu as pltpu

# ----------------------------- module constants -----------------------------
VERTEXNUM = np.array([45, 61, 43, 45, 92, 34, 41, 62, 44, 44,
                      58, 42, 40, 60, 41, 35, 64, 28, 50, 62], dtype=np.int32)
N_EDGES = 20
N_VERTS_PART = int(VERTEXNUM.sum())      # 991
NV_OUT = 778                             # rows of pinverse(Diag_Vertex) (MANO verts)
NV_PAD = 896                             # 778 padded to 7 * 128 lanes
POS_DIM = 140                            # positional-encoding width
GLO_DIM = 60                             # gloinfo width (20 edges * 3 coords)
FEAT_Z = 100                             # GlobalNet output width
FEAT_IN = 256                            # kernel-1 feature slab: pos(140)|z(100)|pad(16)
HID = 256
OUT_MLP = 100                            # ProjectionNet output width
OUT_PAD = 128                            # padded to one full lane tile
SLOT_PAD = 128                           # per-edge slot stride in kernel-2's K axis
K2 = N_EDGES * SLOT_PAD + 128            # 2688 = 20*128 projection slots + 128 mids slot

# Hand kinematic tree.  Scanning i<=j over the symmetric adjacency built from
# these edges reproduces exactly the edge order used by joints_cam_to_pose().
_EDGE_SET = [(0, 1), (1, 2), (2, 3), (3, 4), (0, 5), (5, 6), (6, 7), (7, 8),
             (0, 9), (9, 10), (10, 11), (11, 12), (0, 13), (13, 14), (14, 15),
             (15, 16), (0, 17), (17, 18), (18, 19), (19, 20)]


def _edge_order():
    adj = np.zeros((21, 21), np.int32)
    for i, j in _EDGE_SET:
        adj[i, j] = adj[j, i] = 1
    a, b = [], []
    for i in range(21):
        for j in range(i, 21):
            if adj[i, j] == 1:
                a.append(i)
                b.append(j)
    return np.asarray(a, np.int32), np.asarray(b, np.int32)


EDGE_A, EDGE_B = _edge_order()
assert EDGE_A.shape[0] == N_EDGES

# vertex -> (edge, local slot) map implementing the ragged per-part concat
VERT_EDGE = np.concatenate([np.full(int(n), e, np.int32)
                            for e, n in enumerate(VERTEXNUM)])
VERT_SLOT = np.concatenate([np.arange(int(n), dtype=np.int32) for n in VERTEXNUM])


def _round_up(x, m):
    return ((x + m - 1) // m) * m


# ----------------------------- Pallas kernel 1 -------------------------------
def _proj_mlp_kernel(feat_ref, w1_ref, b1_ref, w2_ref, b2_ref, w3_ref, b3_ref,
                     out_ref):
    """One (row-tile, projection-net) step: 3-layer linear chain on the MXU.

    All dot operands are bf16 (f32 accumulation); bias adds stay f32 on the VPU.
    ProjectionNet has no activations between its Linear layers (per the spec).
    """
    feat = feat_ref[...]                                               # (TR, 256) bf16
    h1 = jnp.dot(feat, w1_ref[0], preferred_element_type=jnp.float32) + b1_ref[0]
    h2 = jnp.dot(h1.astype(jnp.bfloat16), w2_ref[0],
                 preferred_element_type=jnp.float32) + b2_ref[0]
    h3 = jnp.dot(h2.astype(jnp.bfloat16), w3_ref[0],
                 preferred_element_type=jnp.float32) + b3_ref[0]
    out_ref[0] = h3.astype(out_ref.dtype)                              # (TR, 128) bf16


def _run_proj_mlp(feat_rows, params, row_tile):
    r_pad = feat_rows.shape[0]
    assert r_pad % row_tile == 0
    n_tiles = r_pad // row_tile

    def _rows(t, n):
        return (t, 0)

    def _per_net(t, n):
        return (n, 0, 0)

    return pl.pallas_call(
        _proj_mlp_kernel,
        out_shape=jax.ShapeDtypeStruct((3, r_pad, OUT_PAD), jnp.bfloat16),
        grid=(n_tiles, 3),          # row tiles lead -> balanced megacore split
        in_specs=[
            pl.BlockSpec((row_tile, FEAT_IN), _rows),
            pl.BlockSpec((1, FEAT_IN, HID), _per_net),
            pl.BlockSpec((1, 1, HID), _per_net),
            pl.BlockSpec((1, HID, HID), _per_net),
            pl.BlockSpec((1, 1, HID), _per_net),
            pl.BlockSpec((1, HID, OUT_PAD), _per_net),
            pl.BlockSpec((1, 1, OUT_PAD), _per_net),
        ],
        out_specs=pl.BlockSpec((1, row_tile, OUT_PAD), lambda t, n: (n, t, 0)),
        compiler_params=pltpu.CompilerParams(
            dimension_semantics=("parallel", "parallel")),
    )(feat_rows,
      params["k1_w1"], params["k1_b1"], params["k1_w2"], params["k1_b2"],
      params["k1_w3"], params["k1_b3"])


# ----------------------------- Pallas kernel 2 -------------------------------
def _vertex_matmul_kernel(pred_ref, s_ref, out_ref):
    """(row_tile, 2688) @ (2688, 128) bf16 -> lane-dense f32 output tile.

    The S matrix already fuses: per-edge slot selection (2000->991 ragged gather),
    the edge-midpoint offset (rows 2560..2579), and pinverse(Diag_Vertex)^T.
    """
    out_ref[...] = jnp.dot(pred_ref[...], s_ref[...],
                           preferred_element_type=jnp.float32)


def _run_vertex_matmul(pred_rows, s_full, row_tile):
    rp, k2 = pred_rows.shape
    nvp = s_full.shape[1]
    assert rp % row_tile == 0 and nvp % 128 == 0
    m_tiles = rp // row_tile
    n_tiles = nvp // 128
    return pl.pallas_call(
        _vertex_matmul_kernel,
        out_shape=jax.ShapeDtypeStruct((rp, nvp), jnp.float32),
        grid=(n_tiles, m_tiles),    # N tiles lead -> S stream split across both TCs
        in_specs=[
            pl.BlockSpec((row_tile, k2), lambda j, i: (i, 0)),
            pl.BlockSpec((k2, 128), lambda j, i: (0, j)),
        ],
        out_specs=pl.BlockSpec((row_tile, 128), lambda j, i: (i, j)),
        compiler_params=pltpu.CompilerParams(
            dimension_semantics=("parallel", "parallel")),
    )(pred_rows, s_full)


# ----------------------------- JAX glue --------------------------------------
def _position_encoder(joint_cams):
    """Position_encoder: (B, 20, 26) -> (B, 20, 140), same column layout as PyTorch."""
    pi = np.float32(np.pi)
    xyz = joint_cams[..., :6]                                    # joint_a / joint_b xyz
    onehot = joint_cams[..., 6:]                                 # 20 edge one-hot cols
    f5 = (2.0 ** np.arange(5)).astype(np.float32) * pi
    f2 = (2.0 ** np.arange(2)).astype(np.float32) * pi
    a = xyz[..., None] * f5                                      # (B, 20, 6, 5)
    b = onehot[..., None] * f2                                   # (B, 20, 20, 2)
    enc_a = jnp.stack([jnp.sin(a), jnp.cos(a)], axis=-1).reshape(*a.shape[:-2], 60)
    enc_b = jnp.stack([jnp.sin(b), jnp.cos(b)], axis=-1).reshape(*b.shape[:-2], 80)
    return jnp.concatenate([enc_a, enc_b], axis=-1)              # (B, 20, 140)


def _global_net(params, gloinfo):
    """GlobalNet (60 -> 256 -> 100 with ReLUs): tiny, runs once per batch in XLA."""
    hp = jax.lax.Precision.HIGHEST
    h = jax.nn.relu(jnp.dot(gloinfo, params["wg1"], precision=hp) + params["bg1"])
    return jax.nn.relu(jnp.dot(h, params["wg2"], precision=hp) + params["bg2"])


def mlp_hand_forward(params, batch_pose):
    """JAX/Pallas equivalent of MLPHand.forward: (B, 21, 3) -> (B, 778, 3)."""
    batch_pose = batch_pose.astype(jnp.float32)
    b = batch_pose.shape[0]
    root = batch_pose[:, 0, :]                                   # (B, 3)
    # intended semantics of `batch_pose - root`: root-relative per batch element
    pose_rel = batch_pose - root[:, None, :]

    # joints_cam_to_pose: per edge cat(joint_a, joint_b, onehot(edge_order, 20))
    ja = pose_rel[:, EDGE_A, :]                                  # (B, 20, 3)
    jb = pose_rel[:, EDGE_B, :]                                  # (B, 20, 3)
    gloinfo = jb.reshape(b, GLO_DIM)                             # == joint_cams[:, :, 3:6].reshape
    onehot = jnp.broadcast_to(jnp.eye(N_EDGES, dtype=jnp.float32),
                              (b, N_EDGES, N_EDGES))
    joint_cams = jnp.concatenate([ja, jb, onehot], axis=-1)      # (B, 20, 26)

    pos = _position_encoder(joint_cams)                          # (B, 20, 140)
    z = _global_net(params, gloinfo)                             # (B, 100) hoisted GlobalNet

    # 256-wide feature slab per (batch, edge) row: [pos | z | zeros]; rows padded
    rows = b * N_EDGES
    if rows <= 1024:
        row_tile = max(16, _round_up(rows // 2, 16))             # >=2 row tiles (megacore)
    else:
        row_tile = 512
    r_pad = _round_up(rows, row_tile)
    feat = jnp.zeros((r_pad, FEAT_IN), jnp.float32)
    feat = feat.at[:rows, :POS_DIM].set(pos.reshape(rows, POS_DIM))
    feat = feat.at[:rows, POS_DIM:POS_DIM + FEAT_Z].set(
        jnp.broadcast_to(z[:, None, :], (b, N_EDGES, FEAT_Z)).reshape(rows, FEAT_Z))

    proj = _run_proj_mlp(feat.astype(jnp.bfloat16), params, row_tile)  # (3, r_pad, 128) bf16

    # fused {ragged vertex gather + mids offset + pinverse bmm}: one matmul against
    # the precomputed selection matrix k2_s (see _prepare_kernel_params).
    mids = 0.5 * (ja + jb)                                       # (B, 20, 3)
    rows3 = 3 * b
    row_tile2 = min(256, _round_up(rows3, 16))
    rp2 = _round_up(rows3, row_tile2)
    proj_flat = proj[:, :rows, :].reshape(rows3, N_EDGES * SLOT_PAD)      # (3B, 2560)
    mids_rows = jnp.transpose(mids, (2, 0, 1)).reshape(rows3, N_EDGES)    # (3B, 20)
    pred_rows = jnp.zeros((rp2, K2), jnp.bfloat16)
    pred_rows = pred_rows.at[:rows3, :N_EDGES * SLOT_PAD].set(proj_flat)
    pred_rows = pred_rows.at[
        :rows3, N_EDGES * SLOT_PAD:N_EDGES * SLOT_PAD + N_EDGES].set(
            mids_rows.astype(jnp.bfloat16))

    outT = _run_vertex_matmul(pred_rows, params["k2_s"], row_tile2)       # (rp2, 896) f32
    verts = outT[:rows3, :NV_OUT].reshape(3, b, NV_OUT)
    return jnp.transpose(verts, (1, 2, 0)) + root[:, None, :]             # (B, 778, 3)


# ----------------------------- parameters ------------------------------------
def _linear(key, fan_in, fan_out):
    kw, kb = jax.random.split(key)
    bound = 1.0 / np.sqrt(fan_in)
    w = jax.random.uniform(kw, (fan_in, fan_out), jnp.float32, -bound, bound)
    b = jax.random.uniform(kb, (fan_out,), jnp.float32, -bound, bound)
    return w, b


def _prepare_kernel_params(p):
    """bf16 / padded / fused tensors the Pallas kernels consume (built once at init)."""
    bf16 = jnp.bfloat16
    # kernel 1: merged W1 ([pose rows | z rows | zero pad]) and lane-padded W3/b3
    w1 = jnp.zeros((3, FEAT_IN, HID), jnp.float32)
    w1 = w1.at[:, :POS_DIM + FEAT_Z, :].set(p["w1"])
    w3 = jnp.zeros((3, HID, OUT_PAD), jnp.float32).at[:, :, :OUT_MLP].set(p["w3"])
    b3 = jnp.zeros((3, 1, OUT_PAD), jnp.float32).at[:, :, :OUT_MLP].set(p["b3"])

    # kernel 2: fused matrix.  Row e*128+s selects projection slot s of edge e and
    # carries pinverse column for vertex(e, s); row 2560+e carries the summed mids
    # weight for edge e.  Padded slots / rows / output columns are zero-filled.
    invT = p["inv_diag_vertex_T"]                                # (991, 778)
    flat_idx = jnp.asarray(VERT_EDGE * SLOT_PAD + VERT_SLOT)     # unique per vertex
    s_sel = jnp.zeros((N_EDGES * SLOT_PAD, NV_OUT), jnp.float32).at[flat_idx].set(invT)
    m_sum = jnp.zeros((N_EDGES, NV_OUT), jnp.float32).at[jnp.asarray(VERT_EDGE)].add(invT)
    s_full = jnp.zeros((K2, NV_PAD), jnp.float32)
    s_full = s_full.at[:N_EDGES * SLOT_PAD, :NV_OUT].set(s_sel)
    s_full = s_full.at[N_EDGES * SLOT_PAD:N_EDGES * SLOT_PAD + N_EDGES, :NV_OUT].set(m_sum)

    return {
        "k1_w1": w1.astype(bf16), "k1_b1": p["b1"],
        "k1_w2": p["w2"].astype(bf16), "k1_b2": p["b2"],
        "k1_w3": w3.astype(bf16), "k1_b3": b3,
        "k2_s": s_full.astype(bf16),
    }


def init_params(key):
    ks = jax.random.split(key, 12)
    wg1, bg1 = _linear(ks[0], GLO_DIM, HID)                      # GlobalNet
    wg2, bg2 = _linear(ks[1], HID, FEAT_Z)
    w1s, b1s, w2s, b2s, w3s, b3s = [], [], [], [], [], []
    for n in range(3):                                           # projection_x / _y / _z
        w1, b1 = _linear(ks[2 + 3 * n], POS_DIM + FEAT_Z, HID)
        w2, b2 = _linear(ks[3 + 3 * n], HID, HID)
        w3, b3 = _linear(ks[4 + 3 * n], HID, OUT_MLP)
        w1s.append(w1); b1s.append(b1)
        w2s.append(w2); b2s.append(b2)
        w3s.append(w3); b3s.append(b3)
    # stand-in for pinverse(Diag_Vertex), stored transposed: (991, 778)
    invT = 0.05 * jax.random.normal(ks[11], (N_VERTS_PART, NV_OUT), jnp.float32)
    params = {
        "wg1": wg1, "bg1": bg1, "wg2": wg2, "bg2": bg2,
        "w1": jnp.stack(w1s), "b1": jnp.stack(b1s)[:, None, :],
        "w2": jnp.stack(w2s), "b2": jnp.stack(b2s)[:, None, :],
        "w3": jnp.stack(w3s), "b3": jnp.stack(b3s)[:, None, :],
        "inv_diag_vertex_T": invT,
    }
    params.update(_prepare_kernel_params(params))
    return params


# ----------------------------- pure-JAX reference ----------------------------
def _reference_forward(params, batch_pose):
    hp = jax.lax.Precision.HIGHEST
    b = batch_pose.shape[0]
    root = batch_pose[:, 0, :]
    pose_rel = batch_pose - root[:, None, :]
    ja = pose_rel[:, EDGE_A, :]
    jb = pose_rel[:, EDGE_B, :]
    gloinfo = jb.reshape(b, GLO_DIM)
    onehot = jnp.broadcast_to(jnp.eye(N_EDGES, dtype=jnp.float32), (b, N_EDGES, N_EDGES))
    joint_cams = jnp.concatenate([ja, jb, onehot], axis=-1)
    pos = _position_encoder(joint_cams)
    h = jax.nn.relu(jnp.dot(gloinfo, params["wg1"], precision=hp) + params["bg1"])
    z = jax.nn.relu(jnp.dot(h, params["wg2"], precision=hp) + params["bg2"])
    feat = jnp.concatenate(
        [pos, jnp.broadcast_to(z[:, None, :], (b, N_EDGES, FEAT_Z))], axis=-1)
    outs = []
    for n in range(3):
        h1 = jnp.einsum("bef,fh->beh", feat, params["w1"][n], precision=hp) + params["b1"][n]
        h2 = jnp.einsum("beh,hk->bek", h1, params["w2"][n], precision=hp) + params["b2"][n]
        outs.append(jnp.einsum("bek,ko->beo", h2, params["w3"][n], precision=hp)
                    + params["b3"][n])
    proj = jnp.stack(outs, axis=0)                               # (3, B, 20, 100)
    mids = 0.5 * (ja + jb)
    pred991 = (jnp.transpose(proj[:, :, VERT_EDGE, VERT_SLOT], (1, 2, 0))
               + mids[:, VERT_EDGE, :])                          # (B, 991, 3)
    inv = params["inv_diag_vertex_T"].T                          # (778, 991)
    pred = jnp.einsum("vk,bko->bvo", inv, pred991, precision=hp)
    return pred + root[:, None, :]


# ----------------------------- demo ------------------------------------------
if __name__ == "__main__":
    key = jax.random.PRNGKey(0)
    kp, kx = jax.random.split(key)
    params = init_params(kp)
    batch_pose = 0.1 * jax.random.normal(kx, (2, 21, 3), dtype=jnp.float32)

    out = jax.jit(mlp_hand_forward)(params, batch_pose)
    out = jax.block_until_ready(out)
    assert out.shape == (2, NV_OUT, 3)
    assert bool(jnp.all(jnp.isfinite(out)))

    ref = jax.jit(_reference_forward)(params, batch_pose)
    err = float(jnp.max(jnp.abs(out - ref)))
    scale = float(jnp.max(jnp.abs(ref))) + 1.0
    assert err <= 2e-2 * scale, f"kernel/reference mismatch: {err} (scale {scale})"

    print("KERNEL_OK")
</pallas_src>

<mosaic_0001>
module attributes {stable_mosaic.version = 11 : i64} {
  func.func @_proj_mlp_kernel(%arg0: i32, %arg1: i32, %arg2: memref<32x256xbf16, #tpu.memory_space<vmem>>, %arg3: memref<1x256x256xbf16, #tpu.memory_space<vmem>>, %arg4: memref<1x1x256xf32, #tpu.memory_space<vmem>>, %arg5: memref<1x256x256xbf16, #tpu.memory_space<vmem>>, %arg6: memref<1x1x256xf32, #tpu.memory_space<vmem>>, %arg7: memref<1x256x128xbf16, #tpu.memory_space<vmem>>, %arg8: memref<1x1x128xf32, #tpu.memory_space<vmem>>, %arg9: memref<1x32x128xbf16, #tpu.memory_space<vmem>>) attributes {dimension_semantics = [#tpu.dimension_semantics<parallel>, #tpu.dimension_semantics<parallel>], iteration_bounds = array<i64: 2, 3>, scalar_prefetch = 0 : i64, scratch_operands = 0 : i64, tpu.core_type = #tpu.core_type<tc>, window_params = [{transform_indices = @transform_0, window_bounds = array<i64: 32, 256>}, {transform_indices = @transform_1, window_bounds = array<i64: 1, 256, 256>}, {transform_indices = @transform_2, window_bounds = array<i64: 1, 1, 256>}, {transform_indices = @transform_3, window_bounds = array<i64: 1, 256, 256>}, {transform_indices = @transform_4, window_bounds = array<i64: 1, 1, 256>}, {transform_indices = @transform_5, window_bounds = array<i64: 1, 256, 128>}, {transform_indices = @transform_6, window_bounds = array<i64: 1, 1, 128>}, {transform_indices = @transform_7, window_bounds = array<i64: 1, 32, 128>}]} {
    %c0 = arith.constant 0 : index
    %c0_0 = arith.constant 0 : index
    %0 = vector.load %arg2[%c0, %c0_0] : memref<32x256xbf16, #tpu.memory_space<vmem>>, vector<32x256xbf16>
    %c0_1 = arith.constant 0 : index
    %c0_2 = arith.constant 0 : index
    %c0_3 = arith.constant 0 : index
    %1 = vector.load %arg3[%c0_1, %c0_2, %c0_3] : memref<1x256x256xbf16, #tpu.memory_space<vmem>>, vector<1x256x256xbf16>
    %2 = vector.shape_cast %1 : vector<1x256x256xbf16> to vector<256x256xbf16>
    %cst = arith.constant dense<0.000000e+00> : vector<32x256xf32>
    %3 = tpu.matmul %0, %2, %cst {dimension_numbers = #tpu.dot_dimension_numbers<[1], [0], [0], [1], [0, 0, 1, 1], [], []>} : vector<32x256xbf16>, vector<256x256xbf16>, vector<32x256xf32> -> vector<32x256xf32>
    %c0_4 = arith.constant 0 : index
    %c0_5 = arith.constant 0 : index
    %c0_6 = arith.constant 0 : index
    %4 = vector.load %arg4[%c0_4, %c0_5, %c0_6] : memref<1x1x256xf32, #tpu.memory_space<vmem>>, vector<1x1x256xf32>
    %5 = vector.shape_cast %4 : vector<1x1x256xf32> to vector<1x256xf32>
    %6 = vector.broadcast %5 : vector<1x256xf32> to vector<32x256xf32>
    %7 = arith.addf %3, %6 : vector<32x256xf32>
    %8 = arith.truncf %7 : vector<32x256xf32> to vector<32x256xbf16>
    %c0_7 = arith.constant 0 : index
    %c0_8 = arith.constant 0 : index
    %c0_9 = arith.constant 0 : index
    %9 = vector.load %arg5[%c0_7, %c0_8, %c0_9] : memref<1x256x256xbf16, #tpu.memory_space<vmem>>, vector<1x256x256xbf16>
    %10 = vector.shape_cast %9 : vector<1x256x256xbf16> to vector<256x256xbf16>
    %cst_10 = arith.constant dense<0.000000e+00> : vector<32x256xf32>
    %11 = tpu.matmul %8, %10, %cst_10 {dimension_numbers = #tpu.dot_dimension_numbers<[1], [0], [0], [1], [0, 0, 1, 1], [], []>} : vector<32x256xbf16>, vector<256x256xbf16>, vector<32x256xf32> -> vector<32x256xf32>
    %c0_11 = arith.constant 0 : index
    %c0_12 = arith.constant 0 : index
    %c0_13 = arith.constant 0 : index
    %12 = vector.load %arg6[%c0_11, %c0_12, %c0_13] : memref<1x1x256xf32, #tpu.memory_space<vmem>>, vector<1x1x256xf32>
    %13 = vector.shape_cast %12 : vector<1x1x256xf32> to vector<1x256xf32>
    %14 = vector.broadcast %13 : vector<1x256xf32> to vector<32x256xf32>
    %15 = arith.addf %11, %14 : vector<32x256xf32>
    %16 = arith.truncf %15 : vector<32x256xf32> to vector<32x256xbf16>
    %c0_14 = arith.constant 0 : index
    %c0_15 = arith.constant 0 : index
    %c0_16 = arith.constant 0 : index
    %17 = vector.load %arg7[%c0_14, %c0_15, %c0_16] : memref<1x256x128xbf16, #tpu.memory_space<vmem>>, vector<1x256x128xbf16>
    %18 = vector.shape_cast %17 : vector<1x256x128xbf16> to vector<256x128xbf16>
    %cst_17 = arith.constant dense<0.000000e+00> : vector<32x128xf32>
    %19 = tpu.matmul %16, %18, %cst_17 {dimension_numbers = #tpu.dot_dimension_numbers<[1], [0], [0], [1], [0, 0, 1, 1], [], []>} : vector<32x256xbf16>, vector<256x128xbf16>, vector<32x128xf32> -> vector<32x128xf32>
    %c0_18 = arith.constant 0 : index
    %c0_19 = arith.constant 0 : index
    %c0_20 = arith.constant 0 : index
    %20 = vector.load %arg8[%c0_18, %c0_19, %c0_20] : memref<1x1x128xf32, #tpu.memory_space<vmem>>, vector<1x1x128xf32>
    %21 = vector.shape_cast %20 : vector<1x1x128xf32> to vector<1x128xf32>
    %22 = vector.broadcast %21 : vector<1x128xf32> to vector<32x128xf32>
    %23 = arith.addf %19, %22 : vector<32x128xf32>
    %24 = arith.truncf %23 : vector<32x128xf32> to vector<32x128xbf16>
    %c0_21 = arith.constant 0 : index
    %c0_22 = arith.constant 0 : index
    %c0_23 = arith.constant 0 : index
    %25 = vector.load %arg9[%c0_21, %c0_22, %c0_23] : memref<1x32x128xbf16, #tpu.memory_space<vmem>>, vector<1x32x128xbf16>
    %26 = vector.shape_cast %25 : vector<1x32x128xbf16> to vector<32x128xbf16>
    %27 = vector.shape_cast %24 : vector<32x128xbf16> to vector<1x32x128xbf16>
    tpu.vector_store %arg9[%c0_21, %c0_22, %c0_23], %27 {strides = array<i32>} : memref<1x32x128xbf16, #tpu.memory_space<vmem>>, vector<1x32x128xbf16>,
    return
  }
  func.func @transform_0(%arg0: i32, %arg1: i32) -> (i32, i32) {
    %c0_i32 = arith.constant 0 : i32
    %c0_i32_0 = arith.constant 0 : i32
    return %arg0, %c0_i32 : i32, i32
  }
  func.func @transform_1(%arg0: i32, %arg1: i32) -> (i32, i32, i32) {
    %c0_i32 = arith.constant 0 : i32
    %c0_i32_0 = arith.constant 0 : i32
    %c0_i32_1 = arith.constant 0 : i32
    return %arg1, %c0_i32, %c0_i32_0 : i32, i32, i32
  }
  func.func @transform_2(%arg0: i32, %arg1: i32) -> (i32, i32, i32) {
    %c0_i32 = arith.constant 0 : i32
    %c0_i32_0 = arith.constant 0 : i32
    %c0_i32_1 = arith.constant 0 : i32
    return %arg1, %c0_i32, %c0_i32_0 : i32, i32, i32
  }
  func.func @transform_3(%arg0: i32, %arg1: i32) -> (i32, i32, i32) {
    %c0_i32 = arith.constant 0 : i32
    %c0_i32_0 = arith.constant 0 : i32
    %c0_i32_1 = arith.constant 0 : i32
    return %arg1, %c0_i32, %c0_i32_0 : i32, i32, i32
  }
  func.func @transform_4(%arg0: i32, %arg1: i32) -> (i32, i32, i32) {
    %c0_i32 = arith.constant 0 : i32
    %c0_i32_0 = arith.constant 0 : i32
    %c0_i32_1 = arith.constant 0 : i32
    return %arg1, %c0_i32, %c0_i32_0 : i32, i32, i32
  }
  func.func @transform_5(%arg0: i32, %arg1: i32) -> (i32, i32, i32) {
    %c0_i32 = arith.constant 0 : i32
    %c0_i32_0 = arith.constant 0 : i32
    %c0_i32_1 = arith.constant 0 : i32
    return %arg1, %c0_i32, %c0_i32_0 : i32, i32, i32
  }
  func.func @transform_6(%arg0: i32, %arg1: i32) -> (i32, i32, i32) {
    %c0_i32 = arith.constant 0 : i32
    %c0_i32_0 = arith.constant 0 : i32
    %c0_i32_1 = arith.constant 0 : i32
    return %arg1, %c0_i32, %c0_i32_0 : i32, i32, i32
  }
  func.func @transform_7(%arg0: i32, %arg1: i32) -> (i32, i32, i32) {
    %c0_i32 = arith.constant 0 : i32
    %c0_i32_0 = arith.constant 0 : i32
    return %arg1, %arg0, %c0_i32 : i32, i32, i32
  }
}

module attributes {stable_mosaic.version = 11 : i64} {
  func.func @_vertex_matmul_kernel(%arg0: i32, %arg1: i32, %arg2: memref<16x2688xbf16, #tpu.memory_space<vmem>>, %arg3: memref<2688x128xbf16, #tpu.memory_space<vmem>>, %arg4: memref<16x128xf32, #tpu.memory_space<vmem>>) attributes {dimension_semantics = [#tpu.dimension_semantics<parallel>, #tpu.dimension_semantics<parallel>], iteration_bounds = array<i64: 7, 1>, scalar_prefetch = 0 : i64, scratch_operands = 0 : i64, tpu.core_type = #tpu.core_type<tc>, window_params = [{transform_indices = @transform_0, window_bounds = array<i64: 16, 2688>}, {transform_indices = @transform_1, window_bounds = array<i64: 2688, 128>}, {transform_indices = @transform_2, window_bounds = array<i64: 16, 128>}]} {
    %c0 = arith.constant 0 : index
    %c0_0 = arith.constant 0 : index
    %0 = vector.load %arg2[%c0, %c0_0] : memref<16x2688xbf16, #tpu.memory_space<vmem>>, vector<16x2688xbf16>
    %c0_1 = arith.constant 0 : index
    %c0_2 = arith.constant 0 : index
    %1 = vector.load %arg3[%c0_1, %c0_2] : memref<2688x128xbf16, #tpu.memory_space<vmem>>, vector<2688x128xbf16>
    %cst = arith.constant dense<0.000000e+00> : vector<16x128xf32>
    %2 = tpu.matmul %0, %1, %cst {dimension_numbers = #tpu.dot_dimension_numbers<[1], [0], [0], [1], [0, 0, 1, 1], [], []>} : vector<16x2688xbf16>, vector<2688x128xbf16>, vector<16x128xf32> -> vector<16x128xf32>
    %c0_3 = arith.constant 0 : index
    %c0_4 = arith.constant 0 : index
    %3 = vector.load %arg4[%c0_3, %c0_4] : memref<16x128xf32, #tpu.memory_space<vmem>>, vector<16x128xf32>
    tpu.vector_store %arg4[%c0_3, %c0_4], %2 {strides = array<i32>} : memref<16x128xf32, #tpu.memory_space<vmem>>, vector<16x128xf32>,
    return
  }
  func.func @transform_0(%arg0: i32, %arg1: i32) -> (i32, i32) {
    %c0_i32 = arith.constant 0 : i32
    %c0_i32_0 = arith.constant 0 : i32
    return %arg1, %c0_i32 : i32, i32
  }
  func.func @transform_1(%arg0: i32, %arg1: i32) -> (i32, i32) {
    %c0_i32 = arith.constant 0 : i32
    %c0_i32_0 = arith.constant 0 : i32
    return %c0_i32, %arg0 : i32, i32
  }
  func.func @transform_2(%arg0: i32, %arg1: i32) -> (i32, i32) {
    %c0_i32 = arith.constant 0 : i32
    return %arg1, %arg0 : i32, i32
  }
}

</mosaic_0001>

<llo_original>
// kernel: mlp_hand_forward.2
$region0: #{mlp_hand_forward.2}
  #allocation0 [shape = 'u32[]', space=smem, size = 0x4, offset = 0x4, fixed_abs, tag = 'smem constant byte address 0x4 - core index']
  #allocation1 [shape = 'u32[144,128]{1,0:T(1,128)}', space=vmem, size = 0x12000, scoped, tag = 'internal scratch']
  %s0 = inlined_call_operand.vmem [shape: bf16[64,256], index: 0, kind: input, shape index: {}]
  %s1 = inlined_call_operand.hbm [shape: bf16[3,256,256], index: 1, kind: input, shape index: {}]
  %s2 = inlined_call_operand.hbm [shape: f32[3,1,256], index: 2, kind: input, shape index: {}]
  %s3 = inlined_call_operand.hbm [shape: bf16[3,256,256], index: 3, kind: input, shape index: {}]
  %s4 = inlined_call_operand.hbm [shape: f32[3,1,256], index: 4, kind: input, shape index: {}]
  %s5 = inlined_call_operand.hbm [shape: bf16[3,256,128], index: 5, kind: input, shape index: {}]
  %s6 = inlined_call_operand.hbm [shape: f32[3,1,128], index: 6, kind: input, shape index: {}]
  %s7 = inlined_call_operand.vmem [shape: bf16[3,64,128], index: 7, kind: output, shape index: {}]
  %s8 = sld [smem:[#allocation0]]
  $region85: #{mlp_hand_forward.2} parent=0
    _
  %s10 = ssub.s32 1, %s8
  %s11 = scalar_select 0, %s10, %s8
  $region1: #{mlp_hand_forward.2} parent=0
    #allocation2 [shape = 'u8[262144]{0}', space=vmem, size = 0x40000, scoped, tag = 'input window, operand 1']
    #allocation3 [shape = 's32[2]{0}', space=sflag, size = 0x8, scoped, tag = 'scoped memory for mlp_hand_forward.2']
    #allocation4 [shape = 'u8[2048]{0}', space=vmem, size = 0x800, scoped, tag = 'input window, operand 2']
    #allocation5 [shape = 's32[2]{0}', space=sflag, size = 0x8, scoped, tag = 'scoped memory for mlp_hand_forward.2']
    #allocation6 [shape = 'u8[262144]{0}', space=vmem, size = 0x40000, scoped, tag = 'input window, operand 3']
    #allocation7 [shape = 'u8[2048]{0}', space=vmem, size = 0x800, scoped, tag = 'input window, operand 4']
    #allocation8 [shape = 's32[2]{0}', space=sflag, size = 0x8, scoped, tag = 'scoped memory for mlp_hand_forward.2']
    #allocation9 [shape = 'u8[131072]{0}', space=vmem, size = 0x20000, scoped, tag = 'input window, operand 5']
    #allocation10 [shape = 'u8[1024]{0}', space=vmem, size = 0x400, scoped, tag = 'input window, operand 6']
    #allocation11 [shape = 's32[2]{0}', space=sflag, size = 0x8, scoped, tag = 'scoped memory for mlp_hand_forward.2']
    %12 = vsyncpa [#allocation3], 0
    %s13 = scalar_lea.sflag [#allocation3], 1
    %14 = vsyncpa %s13, 0
    %15 = vsyncpa [#allocation5], 0
    %s16 = scalar_lea.sflag [#allocation5], 1
    %17 = vsyncpa %s16, 0
    %18 = vsyncpa [#allocation8], 0
    %s19 = scalar_lea.sflag [#allocation8], 1
    %20 = vsyncpa %s19, 0
    %21 = vsyncpa [#allocation11], 0
    %s22 = scalar_lea.sflag [#allocation11], 1
    %23 = vsyncpa %s22, 0
    loop: start=0, step=1, limit=8
    $region2: #{mlp_hand_forward.2} parent=1 // loop_pre_header
      _
    $region3: #{mlp_hand_forward.2} parent=1 // loop_header
      %s25 = sphi 0, %s29
      %p26 = scmp.ge.s32.totalorder %s25, 8
      %s32 = sphi 0, %s44
      %s33 = sphi 0, %s40
      %s34 = sphi 0, %s32
      %s35 = sphi 0, %s33
      %s36 = sphi 0, %s34
      %s37 = sphi 0, %s35
      %s47 = sphi 0, %s49
      %s50 = sphi 0, %s47
      %s51 = sphi 0, %s50
      %s67 = sphi 0, %s51
      %s73 = sphi 0, %s75
      %s76 = sphi 0, %s73
      %s77 = sphi 0, %s76
      %s93 = sphi 0, %s77
      %s99 = sphi 0, %s101
      %s102 = sphi 0, %s99
      %s103 = sphi 0, %s102
      %s119 = sphi 0, %s103
      %s125 = sphi 0, %s127
      %s128 = sphi 0, %s125
      %s129 = sphi 0, %s128
      %s145 = sphi 0, %s129
      %s151 = sphi 0, %s153
      %s154 = sphi 0, %s151
      %s155 = sphi 0, %s154
      %s171 = sphi 0, %s155
      %s177 = sphi 0, %s179
      %s180 = sphi 0, %s177
      %s181 = sphi 0, %s180
      %s197 = sphi 0, %s181
      %s203 = sphi 0, %s205
      %s206 = sphi 0, %s203
      %s207 = sphi 0, %s206
      %s223 = sphi 0, %s207
      %s231 = sphi 0, %s233
      %s234 = sphi 0, %s231
      %s235 = sphi 0, %s234
      %s251 = sphi 0, %s235
    $region4: #{mlp_hand_forward.2} parent=1 // loop_header_branch
      %28 = sbr.rel (%p26) target = $region8
    $region5: #{mlp_hand_forward.2} parent=1 // loop_body
      %s30 = ssub.s32 %s25, 1
      %s31 = ssub.s32 %s25, 2
      %s38 = sadd.s32 1, %s33
      %p39 = scmp.ge.s32.totalorder %s38, 3
      %s40 = scalar_select %p39, 0, %s38
      %s41 = sadd.s32 1, %s32
      %s42 = scalar_select %p39, %s41, %s32
      %p43 = scmp.ge.s32.totalorder %s42, 2
      %s44 = scalar_select %p43, 0, %s42
      %s45 = ssub.s32 %s32, %s44
      %p46 = scmp.eq.s32.totalorder %s45, 0
      %s48 = sadd.s32 %s47, 1
      %s49 = scalar_select %p46, %s47, %s48
      %p52 = pneg %p46
      %p53 = scmp.eq.s32.totalorder %s25, 5
      %p54 = por %p52, %p53
      %p55 = scmp.ne.s32.totalorder %s47, %s50
      %p56 = scmp.eq.s32.totalorder %s25, 0
      %p57 = por %p55, %p56
      %p58 = scmp.ne.s32.totalorder %s47, %s50
      %p59 = scmp.eq.s32.totalorder %s30, 5
      %p60 = por %p58, %p59
      %p61 = scmp.ne.s32.totalorder %s50, %s51
      %p62 = scmp.eq.s32.totalorder %s30, 0
      %p63 = por %p61, %p62
      %p64 = scmp.ne.s32.totalorder %s50, %s51
      %p65 = scmp.eq.s32.totalorder %s31, 5
      %p66 = por %p64, %p65
      %p68 = scmp.ne.s32.totalorder %s51, %s67
      %p69 = scmp.eq.s32.totalorder %s31, 0
      %p70 = por %p68, %p69
      %s71 = ssub.s32 %s33, %s40
      %p72 = scmp.eq.s32.totalorder %s71, 0
      %s74 = sadd.s32 %s73, 1
      %s75 = scalar_select %p72, %s73, %s74
      %p78 = pneg %p72
      %p79 = scmp.eq.s32.totalorder %s25, 5
      %p80 = por %p78, %p79
      %p81 = scmp.ne.s32.totalorder %s73, %s76
      %p82 = scmp.eq.s32.totalorder %s25, 0
      %p83 = por %p81, %p82
      %p84 = scmp.ne.s32.totalorder %s73, %s76
      %p85 = scmp.eq.s32.totalorder %s30, 5
      %p86 = por %p84, %p85
      %p87 = scmp.ne.s32.totalorder %s76, %s77
      %p88 = scmp.eq.s32.totalorder %s30, 0
      %p89 = por %p87, %p88
      %p90 = scmp.ne.s32.totalorder %s76, %s77
      %p91 = scmp.eq.s32.totalorder %s31, 5
      %p92 = por %p90, %p91
      %p94 = scmp.ne.s32.totalorder %s77, %s93
      %p95 = scmp.eq.s32.totalorder %s31, 0
      %p96 = por %p94, %p95
      %s97 = ssub.s32 %s33, %s40
      %p98 = scmp.eq.s32.totalorder %s97, 0
      %s100 = sadd.s32 %s99, 1
      %s101 = scalar_select %p98, %s99, %s100
      %p104 = pneg %p98
      %p105 = scmp.eq.s32.totalorder %s25, 5
      %p106 = por %p104, %p105
      %p107 = scmp.ne.s32.totalorder %s99, %s102
      %p108 = scmp.eq.s32.totalorder %s25, 0
      %p109 = por %p107, %p108
      %p110 = scmp.ne.s32.totalorder %s99, %s102
      %p111 = scmp.eq.s32.totalorder %s30, 5
      %p112 = por %p110, %p111
      %p113 = scmp.ne.s32.totalorder %s102, %s103
      %p114 = scmp.eq.s32.totalorder %s30, 0
      %p115 = por %p113, %p114
      %p116 = scmp.ne.s32.totalorder %s102, %s103
      %p117 = scmp.eq.s32.totalorder %s31, 5
      %p118 = por %p116, %p117
      %p120 = scmp.ne.s32.totalorder %s103, %s119
      %p121 = scmp.eq.s32.totalorder %s31, 0
      %p122 = por %p120, %p121
      %s123 = ssub.s32 %s33, %s40
      %p124 = scmp.eq.s32.totalorder %s123, 0
      %s126 = sadd.s32 %s125, 1
      %s127 = scalar_select %p124, %s125, %s126
      %p130 = pneg %p124
      %p131 = scmp.eq.s32.totalorder %s25, 5
      %p132 = por %p130, %p131
      %p133 = scmp.ne.s32.totalorder %s125, %s128
      %p134 = scmp.eq.s32.totalorder %s25, 0
      %p135 = por %p133, %p134
      %p136 = scmp.ne.s32.totalorder %s125, %s128
      %p137 = scmp.eq.s32.totalorder %s30, 5
      %p138 = por %p136, %p137
      %p139 = scmp.ne.s32.totalorder %s128, %s129
      %p140 = scmp.eq.s32.totalorder %s30, 0
      %p141 = por %p139, %p140
      %p142 = scmp.ne.s32.totalorder %s128, %s129
      %p143 = scmp.eq.s32.totalorder %s31, 5
      %p144 = por %p142, %p143
      %p146 = scmp.ne.s32.totalorder %s129, %s145
      %p147 = scmp.eq.s32.totalorder %s31, 0
      %p148 = por %p146, %p147
      %s149 = ssub.s32 %s33, %s40
      %p150 = scmp.eq.s32.totalorder %s149, 0
      %s152 = sadd.s32 %s151, 1
      %s153 = scalar_select %p150, %s151, %s152
      %p156 = pneg %p150
      %p157 = scmp.eq.s32.totalorder %s25, 5
      %p158 = por %p156, %p157
      %p159 = scmp.ne.s32.totalorder %s151, %s154
      %p160 = scmp.eq.s32.totalorder %s25, 0
      %p161 = por %p159, %p160
      %p162 = scmp.ne.s32.totalorder %s151, %s154
      %p163 = scmp.eq.s32.totalorder %s30, 5
      %p164 = por %p162, %p163
      %p165 = scmp.ne.s32.totalorder %s154, %s155
      %p166 = scmp.eq.s32.totalorder %s30, 0
      %p167 = por %p165, %p166
      %p168 = scmp.ne.s32.totalorder %s154, %s155
      %p169 = scmp.eq.s32.totalorder %s31, 5
      %p170 = por %p168, %p169
      %p172 = scmp.ne.s32.totalorder %s155, %s171
      %p173 = scmp.eq.s32.totalorder %s31, 0
      %p174 = por %p172, %p173
      %s175 = ssub.s32 %s33, %s40
      %p176 = scmp.eq.s32.totalorder %s175, 0
      %s178 = sadd.s32 %s177, 1
      %s179 = scalar_select %p176, %s177, %s178
      %p182 = pneg %p176
      %p183 = scmp.eq.s32.totalorder %s25, 5
      %p184 = por %p182, %p183
      %p185 = scmp.ne.s32.totalorder %s177, %s180
      %p186 = scmp.eq.s32.totalorder %s25, 0
      %p187 = por %p185, %p186
      %p188 = scmp.ne.s32.totalorder %s177, %s180
      %p189 = scmp.eq.s32.totalorder %s30, 5
      %p190 = por %p188, %p189
      %p191 = scmp.ne.s32.totalorder %s180, %s181
      %p192 = scmp.eq.s32.totalorder %s30, 0
      %p193 = por %p191, %p192
      %p194 = scmp.ne.s32.totalorder %s180, %s181
      %p195 = scmp.eq.s32.totalorder %s31, 5
      %p196 = por %p194, %p195
      %p198 = scmp.ne.s32.totalorder %s181, %s197
      %p199 = scmp.eq.s32.totalorder %s31, 0
      %p200 = por %p198, %p199
      %s201 = ssub.s32 %s33, %s40
      %p202 = scmp.eq.s32.totalorder %s201, 0
      %s204 = sadd.s32 %s203, 1
      %s205 = scalar_select %p202, %s203, %s204
      %p208 = pneg %p202
      %p209 = scmp.eq.s32.totalorder %s25, 5
      %p210 = por %p208, %p209
      %p211 = scmp.ne.s32.totalorder %s203, %s206
      %p212 = scmp.eq.s32.totalorder %s25, 0
      %p213 = por %p211, %p212
      %p214 = scmp.ne.s32.totalorder %s203, %s206
      %p215 = scmp.eq.s32.totalorder %s30, 5
      %p216 = por %p214, %p215
      %p217 = scmp.ne.s32.totalorder %s206, %s207
      %p218 = scmp.eq.s32.totalorder %s30, 0
      %p219 = por %p217, %p218
      %p220 = scmp.ne.s32.totalorder %s206, %s207
      %p221 = scmp.eq.s32.totalorder %s31, 5
      %p222 = por %p220, %p221
      %p224 = scmp.ne.s32.totalorder %s207, %s223
      %p225 = scmp.eq.s32.totalorder %s31, 0
      %p226 = por %p224, %p225
      %s227 = ssub.s32 %s33, %s40
      %s228 = ssub.s32 %s32, %s44
      %s229 = sor.u32 %s227, %s228
      %p230 = scmp.eq.s32.totalorder %s229, 0
      %s232 = sadd.s32 %s231, 1
      %s233 = scalar_select %p230, %s231, %s232
      %p236 = pneg %p230
      %p237 = scmp.eq.s32.totalorder %s25, 5
      %p238 = por %p236, %p237
      %p239 = scmp.ne.s32.totalorder %s231, %s234
      %p240 = scmp.eq.s32.totalorder %s25, 0
      %p241 = por %p239, %p240
      %p242 = scmp.ne.s32.totalorder %s231, %s234
      %p243 = scmp.eq.s32.totalorder %s30, 5
      %p244 = por %p242, %p243
      %p245 = scmp.ne.s32.totalorder %s234, %s235
      %p246 = scmp.eq.s32.totalorder %s30, 0
      %p247 = por %p245, %p246
      %p248 = scmp.ne.s32.totalorder %s234, %s235
      %p249 = scmp.eq.s32.totalorder %s31, 5
      %p250 = por %p248, %p249
      %p252 = scmp.ne.s32.totalorder %s235, %s251
      %p253 = scmp.eq.s32.totalorder %s31, 0
      %p254 = por %p252, %p253
      %p255 = scmp.le.s32.totalorder 1, %s25
      %p256 = scmp.lt.s32.totalorder %s25, 7
      %p257 = pnand %p255, %p256
      %p258 = pneg %p257
      // Predicated region
      $region9: #{mlp_hand_forward.2} parent=5 // pred_check
        _
      $region10: #{mlp_hand_forward.2} parent=5 // pred_check_branch
        %260 = sbr.rel (%p257) target = $region12
      $region11: #{mlp_hand_forward.2} parent=5 // pred_region
        %s261 = ssub.s32 %s25, 1
      $region12: #{mlp_hand_forward.2} parent=5 // pred_fallthru
        _
      %p262 = scmp.lt.s32.totalorder %s25, 6
      // Predicated region
      $region13: #{mlp_hand_forward.2} parent=5 // pred_check
        %p263 = pneg %p262
      $region14: #{mlp_hand_forward.2} parent=5 // pred_check_branch
        %265 = sbr.rel (%p263) target = $region16
      $region15: #{mlp_hand_forward.2} parent=5 // pred_region
        // Predicated region
        $region17: #{mlp_hand_forward.2} parent=15 // pred_check
          %p266 = pneg %p57
        $region18: #{mlp_hand_forward.2} parent=15 // pred_check_branch
          %268 = sbr.rel (%p266) target = $region20
        $region19: #{mlp_hand_forward.2} parent=15 // pred_region
          %s269 = smul.u32 4, %s32
          %p270 = scmp.lt.s32.totalorder %s269, 7
          %s271 = scalar_select %p270, %s269, 7
          %s272 = smul.addr %s271, 2
          %s273 = smul.addr %s272, 4
          %s274 = scalar_lea.vmem %s0, %s273
          %s275 = smul.u32 4, %s32
        $region20: #{mlp_hand_forward.2} parent=15 // pred_fallthru
          _
        // Predicated region
        $region21: #{mlp_hand_forward.2} parent=15 // pred_check
          %p276 = pneg %p83
        $region22: #{mlp_hand_forward.2} parent=15 // pred_check_branch
          %278 = sbr.rel (%p276) target = $region24
        $region23: #{mlp_hand_forward.2} parent=15 // pred_region
          %s279 = sand.u32 %s73, 1
          %s280 = scalar_lea.sflag [#allocation3], %s279
          %s281 = sand.u32 %s73, 1
          %s282 = smul.addr %s281, 256
          %s283 = scalar_lea.vmem [#allocation2], %s282
          %s285 = ssub.s32 4096, 4096
          %286 = vsyncadd %s280, %s285
          %s287 = smul.addr %s33, 64
          %s288 = smul.addr %s287, 64
          %s289 = scalar_lea.hbm %s1, %s288
          %s290 = sshll.u32 %s283, 4
          %s291 = int_to_ptr.vmem [resolvable:$true] %s290
          %296 = dma.hbm_to_vmem [thread:$0]  %s289, 4096, %s291, %s280, 128, 128, 8
        $region24: #{mlp_hand_forward.2} parent=15 // pred_fallthru
          _
        // Predicated region
        $region25: #{mlp_hand_forward.2} parent=15 // pred_check
          %p297 = pneg %p109
        $region26: #{mlp_hand_forward.2} parent=15 // pred_check_branch
          %299 = sbr.rel (%p297) target = $region28
        $region27: #{mlp_hand_forward.2} parent=15 // pred_region
          %s300 = sand.u32 %s25, 1
          %s301 = scalar_lea.sflag [#allocation5], %s300
          %s302 = sand.u32 %s99, 1
          %s303 = smul.addr %s302, 2
          %s304 = scalar_lea.vmem [#allocation4], %s303
          %s306 = ssub.s32 32, 32
          %307 = vsyncadd %s301, %s306
          %s308 = smul.addr %s33, 2
          %s309 = smul.addr %s308, 16
          %s310 = scalar_lea.hbm %s2, %s309
          %s312 = sshll.u32 %s304, 4
          %s313 = int_to_ptr.vmem [resolvable:$true] %s312
          %315 = dma.hbm_to_vmem [thread:$0]  %s310, 32, %s313, %s301
        $region28: #{mlp_hand_forward.2} parent=15 // pred_fallthru
          _
        // Predicated region
        $region29: #{mlp_hand_forward.2} parent=15 // pred_check
          %p316 = pneg %p135
        $region30: #{mlp_hand_forward.2} parent=15 // pred_check_branch
          %318 = sbr.rel (%p316) target = $region32
        $region31: #{mlp_hand_forward.2} parent=15 // pred_region
          %s319 = sand.u32 %s25, 1
          %s320 = scalar_lea.sflag [#allocation5], %s319
          %s321 = sand.u32 %s125, 1
          %s322 = smul.addr %s321, 256
          %s323 = scalar_lea.vmem [#allocation6], %s322
          %s325 = ssub.s32 4096, 4096
          %326 = vsyncadd %s320, %s325
          %s327 = smul.addr %s33, 64
          %s328 = smul.addr %s327, 64
          %s329 = scalar_lea.hbm %s3, %s328
          %s330 = sshll.u32 %s323, 4
          %s331 = int_to_ptr.vmem [resolvable:$true] %s330
          %336 = dma.hbm_to_vmem [thread:$0]  %s329, 4096, %s331, %s320, 128, 128, 8
        $region32: #{mlp_hand_forward.2} parent=15 // pred_fallthru
          _
        // Predicated region
        $region33: #{mlp_hand_forward.2} parent=15 // pred_check
          %p337 = pneg %p161
        $region34: #{mlp_hand_forward.2} parent=15 // pred_check_branch
          %339 = sbr.rel (%p337) target = $region36
        $region35: #{mlp_hand_forward.2} parent=15 // pred_region
          %s340 = sand.u32 %s25, 1
          %s341 = scalar_lea.sflag [#allocation8], %s340
          %s342 = sand.u32 %s151, 1
          %s343 = smul.addr %s342, 2
          %s344 = scalar_lea.vmem [#allocation7], %s343
          %s346 = ssub.s32 32, 32
          %347 = vsyncadd %s341, %s346
          %s348 = smul.addr %s33, 2
          %s349 = smul.addr %s348, 16
          %s350 = scalar_lea.hbm %s4, %s349
          %s352 = sshll.u32 %s344, 4
          %s353 = int_to_ptr.vmem [resolvable:$true] %s352
          %355 = dma.hbm_to_vmem [thread:$0]  %s350, 32, %s353, %s341
        $region36: #{mlp_hand_forward.2} parent=15 // pred_fallthru
          _
        // Predicated region
        $region37: #{mlp_hand_forward.2} parent=15 // pred_check
          %p356 = pneg %p187
        $region38: #{mlp_hand_forward.2} parent=15 // pred_check_branch
          %358 = sbr.rel (%p356) target = $region40
        $region39: #{mlp_hand_forward.2} parent=15 // pred_region
          %s359 = sand.u32 %s25, 1
          %s360 = scalar_lea.sflag [#allocation8], %s359
          %s361 = sand.u32 %s177, 1
          %s362 = smul.addr %s361, 128
          %s363 = scalar_lea.vmem [#allocation9], %s362
          %s365 = ssub.s32 2048, 2048
          %366 = vsyncadd %s360, %s365
          %s367 = smul.addr %s33, 32
          %s368 = smul.addr %s367, 64
          %s369 = scalar_lea.hbm %s5, %s368
          %s370 = sshll.u32 %s363, 4
          %s371 = int_to_ptr.vmem [resolvable:$true] %s370
          %376 = dma.hbm_to_vmem [thread:$0]  %s369, 2048, %s371, %s360, 64, 64, 4
        $region40: #{mlp_hand_forward.2} parent=15 // pred_fallthru
          _
        // Predicated region
        $region41: #{mlp_hand_forward.2} parent=15 // pred_check
          %p377 = pneg %p213
        $region42: #{mlp_hand_forward.2} parent=15 // pred_check_branch
          %379 = sbr.rel (%p377) target = $region44
        $region43: #{mlp_hand_forward.2} parent=15 // pred_region
          %s380 = sand.u32 %s203, 1
          %s381 = scalar_lea.sflag [#allocation11], %s380
          %s382 = sand.u32 %s203, 1
          %s383 = scalar_lea.vmem [#allocation10], %s382
          %s385 = ssub.s32 16, 16
          %386 = vsyncadd %s381, %s385
          %s387 = smul.addr %s33, 16
          %s388 = scalar_lea.hbm %s6, %s387
          %s390 = sshll.u32 %s383, 4
          %s391 = int_to_ptr.vmem [resolvable:$true] %s390
          %393 = dma.hbm_to_vmem [thread:$0]  %s388, 16, %s391, %s381
        $region44: #{mlp_hand_forward.2} parent=15 // pred_fallthru
          _
      $region16: #{mlp_hand_forward.2} parent=5 // pred_fallthru
        _
      %p394 = scmp.le.s32.totalorder 1, %s25
      %p395 = scmp.lt.s32.totalorder %s25, 7
      %p396 = pnand %p394, %p395
      %p397 = pneg %p396
      // Predicated region
      $region45: #{mlp_hand_forward.2} parent=5 // pred_check
        _
      $region46: #{mlp_hand_forward.2} parent=5 // pred_check_branch
        %399 = sbr.rel (%p396) target = $region48
      $region47: #{mlp_hand_forward.2} parent=5 // pred_region
        %s400 = ssub.s32 %s25, 1
        %s401 = sand.u32 %s76, 1
        %s402 = scalar_lea.sflag [#allocation3], %s401
        %s403 = sand.u32 %s76, 1
        %s404 = smul.addr %s403, 256
        %s405 = scalar_lea.vmem [#allocation2], %s404
        // Predicated region
        $region49: #{mlp_hand_forward.2} parent=47 // pred_check
          %p406 = pneg %p89
        $region50: #{mlp_hand_forward.2} parent=47 // pred_check_branch
          %408 = sbr.rel (%p406) target = $region52
        $region51: #{mlp_hand_forward.2} parent=47 // pred_region
          %409 = dma.done %s402, 4096
        $region52: #{mlp_hand_forward.2} parent=47 // pred_fallthru
          _
        %s410 = sand.u32 %s30, 1
        %s411 = scalar_lea.sflag [#allocation5], %s410
        %s412 = sand.u32 %s102, 1
        %s413 = smul.addr %s412, 2
        %s414 = scalar_lea.vmem [#allocation4], %s413
        // Predicated region
        $region53: #{mlp_hand_forward.2} parent=47 // pred_check
          %p415 = pneg %p115
        $region54: #{mlp_hand_forward.2} parent=47 // pred_check_branch
          %417 = sbr.rel (%p415) target = $region56
        $region55: #{mlp_hand_forward.2} parent=47 // pred_region
          %418 = dma.done %s411, 32
        $region56: #{mlp_hand_forward.2} parent=47 // pred_fallthru
          _
        %s419 = sand.u32 %s30, 1
        %s420 = scalar_lea.sflag [#allocation5], %s419
        %s421 = sand.u32 %s128, 1
        %s422 = smul.addr %s421, 256
        %s423 = scalar_lea.vmem [#allocation6], %s422
        // Predicated region
        $region57: #{mlp_hand_forward.2} parent=47 // pred_check
          %p424 = pneg %p141
        $region58: #{mlp_hand_forward.2} parent=47 // pred_check_branch
          %426 = sbr.rel (%p424) target = $region60
        $region59: #{mlp_hand_forward.2} parent=47 // pred_region
          %427 = dma.done %s420, 4096
        $region60: #{mlp_hand_forward.2} parent=47 // pred_fallthru
          _
        %s428 = sand.u32 %s30, 1
        %s429 = scalar_lea.sflag [#allocation8], %s428
        %s430 = sand.u32 %s154, 1
        %s431 = smul.addr %s430, 2
        %s432 = scalar_lea.vmem [#allocation7], %s431
        // Predicated region
        $region61: #{mlp_hand_forward.2} parent=47 // pred_check
          %p433 = pneg %p167
        $region62: #{mlp_hand_forward.2} parent=47 // pred_check_branch
          %435 = sbr.rel (%p433) target = $region64
        $region63: #{mlp_hand_forward.2} parent=47 // pred_region
          %436 = dma.done %s429, 32
        $region64: #{mlp_hand_forward.2} parent=47 // pred_fallthru
          _
        %s437 = sand.u32 %s30, 1
        %s438 = scalar_lea.sflag [#allocation8], %s437
        %s439 = sand.u32 %s180, 1
        %s440 = smul.addr %s439, 128
        %s441 = scalar_lea.vmem [#allocation9], %s440
        // Predicated region
        $region65: #{mlp_hand_forward.2} parent=47 // pred_check
          %p442 = pneg %p193
        $region66: #{mlp_hand_forward.2} parent=47 // pred_check_branch
          %444 = sbr.rel (%p442) target = $region68
        $region67: #{mlp_hand_forward.2} parent=47 // pred_region
          %445 = dma.done %s438, 2048
        $region68: #{mlp_hand_forward.2} parent=47 // pred_fallthru
          _
        %s446 = sand.u32 %s206, 1
        %s447 = scalar_lea.sflag [#allocation11], %s446
        %s448 = sand.u32 %s206, 1
        %s449 = scalar_lea.vmem [#allocation10], %s448
        // Predicated region
        $region69: #{mlp_hand_forward.2} parent=47 // pred_check
          %p450 = pneg %p219
        $region70: #{mlp_hand_forward.2} parent=47 // pred_check_branch
          %452 = sbr.rel (%p450) target = $region72
        $region71: #{mlp_hand_forward.2} parent=47 // pred_region
          %453 = dma.done %s447, 16
        $region72: #{mlp_hand_forward.2} parent=47 // pred_fallthru
          _
        %s454 = smul.u32 4, %s34
        %p455 = scmp.lt.s32.totalorder %s454, 7
        %s456 = scalar_select %p455, %s454, 7
        %s457 = smul.addr %s456, 2
        %s458 = smul.addr %s457, 4
        %s459 = scalar_lea.vmem %s0, %s458
        %p460 = pneg %p63
        %p461 = pneg %p60
        %s462 = sand.u32 %s76, 1
        %s463 = scalar_lea.sflag [#allocation3], %s462
        %s464 = sand.u32 %s76, 1
        %s465 = smul.addr %s464, 256
        %s466 = scalar_lea.vmem [#allocation2], %s465
        %p467 = pneg %p89
        %p468 = pneg %p86
        %s469 = sand.u32 %s30, 1
        %s470 = scalar_lea.sflag [#allocation5], %s469
        %s471 = sand.u32 %s102, 1
        %s472 = smul.addr %s471, 2
        %s473 = scalar_lea.vmem [#allocation4], %s472
        %p474 = pneg %p115
        %p475 = pneg %p112
        %s476 = sand.u32 %s30, 1
        %s477 = scalar_lea.sflag [#allocation5], %s476
        %s478 = sand.u32 %s128, 1
        %s479 = smul.addr %s478, 256
        %s480 = scalar_lea.vmem [#allocation6], %s479
        %p481 = pneg %p141
        %p482 = pneg %p138
        %s483 = sand.u32 %s30, 1
        %s484 = scalar_lea.sflag [#allocation8], %s483
        %s485 = sand.u32 %s154, 1
        %s486 = smul.addr %s485, 2
        %s487 = scalar_lea.vmem [#allocation7], %s486
        %p488 = pneg %p167
        %p489 = pneg %p164
        %s490 = sand.u32 %s30, 1
        %s491 = scalar_lea.sflag [#allocation8], %s490
        %s492 = sand.u32 %s180, 1
        %s493 = smul.addr %s492, 128
        %s494 = scalar_lea.vmem [#allocation9], %s493
        %p495 = pneg %p193
        %p496 = pneg %p190
        %s497 = sand.u32 %s206, 1
        %s498 = scalar_lea.sflag [#allocation11], %s497
        %s499 = sand.u32 %s206, 1
        %s500 = scalar_lea.vmem [#allocation10], %s499
        %p501 = pneg %p219
        %p502 = pneg %p216
        %p503 = pneg %p247
        %p504 = pneg %p244
        %s505 = smul.u32 4, %s34
        %p506 = scmp.lt.s32.totalorder %s35, 2
        %s507 = scalar_select %p506, %s35, 2
        %p508 = scmp.lt.s32.totalorder %s505, 7
        %s509 = scalar_select %p508, %s505, 7
        %s510 = smul.addr %s507, 8
        %s511 = sadd.s32 %s509, %s510
        %s512 = smul.addr %s511, 4
        %s513 = scalar_lea.vmem %s7, %s512
        %s514 = smul.u32 4, %s34
        %p515 = scmp.lt.s32.totalorder %s514, 7
        %s516 = scalar_select %p515, %s514, 7
        %s517 = smul.addr %s516, 2
        %s518 = smul.addr %s517, 4
        %s519 = scalar_lea.vmem %s0, %s518
        %s520 = smul.u32 4, %s34
        %s521 = smul.u32 4, %s34
        %p522 = scmp.lt.s32.totalorder %s35, 2
        %s523 = scalar_select %p522, %s35, 2
        %p524 = scmp.lt.s32.totalorder %s521, 7
        %s525 = scalar_select %p524, %s521, 7
        %s526 = smul.addr %s523, 8
        %s527 = sadd.s32 %s525, %s526
        %s528 = smul.addr %s527, 4
        %s529 = scalar_lea.vmem %s7, %s528
        %s530 = smul.u32 4, %s34
        %v532 = vld [vmem:[%s519] sm:$0xff]
        %v533 = vld [vmem:[%s519 + $0x8] sm:$0xff]
        %v534 = vld [vmem:[%s519 + $0x10] sm:$0xff]
        %v535 = vld [vmem:[%s519 + $0x18] sm:$0xff]
        %v536 = vld [vmem:[%s405] sm:$0xff]
        %v537 = vld [vmem:[%s405 + $0x8] sm:$0xff]
        %v538 = vld [vmem:[%s405 + $0x10] sm:$0xff]
        %v539 = vld [vmem:[%s405 + $0x18] sm:$0xff]
        %v540 = vld [vmem:[%s405 + $0x20] sm:$0xff]
        %v541 = vld [vmem:[%s405 + $0x28] sm:$0xff]
        %v542 = vld [vmem:[%s405 + $0x30] sm:$0xff]
        %v543 = vld [vmem:[%s405 + $0x38] sm:$0xff]
        %v544 = vld [vmem:[%s405 + $0x40] sm:$0xff]
        %v545 = vld [vmem:[%s405 + $0x48] sm:$0xff]
        %v546 = vld [vmem:[%s405 + $0x50] sm:$0xff]
        %v547 = vld [vmem:[%s405 + $0x58] sm:$0xff]
        %v548 = vld [vmem:[%s405 + $0x60] sm:$0xff]
        %v549 = vld [vmem:[%s405 + $0x68] sm:$0xff]
        %v550 = vld [vmem:[%s405 + $0x70] sm:$0xff]
        %v551 = vld [vmem:[%s405 + $0x78] sm:$0xff]
        %v552 = vld [vmem:[%s405 + $0x80] sm:$0xff]
        %v553 = vld [vmem:[%s405 + $0x88] sm:$0xff]
        %v554 = vld [vmem:[%s405 + $0x90] sm:$0xff]
        %v555 = vld [vmem:[%s405 + $0x98] sm:$0xff]
        %v556 = vld [vmem:[%s405 + $0xa0] sm:$0xff]
        %v557 = vld [vmem:[%s405 + $0xa8] sm:$0xff]
        %v558 = vld [vmem:[%s405 + $0xb0] sm:$0xff]
        %v559 = vld [vmem:[%s405 + $0xb8] sm:$0xff]
        %v560 = vld [vmem:[%s405 + $0xc0] sm:$0xff]
        %v561 = vld [vmem:[%s405 + $0xc8] sm:$0xff]
        %v562 = vld [vmem:[%s405 + $0xd0] sm:$0xff]
        %v563 = vld [vmem:[%s405 + $0xd8] sm:$0xff]
        %v564 = vld [vmem:[%s405 + $0xe0] sm:$0xff]
        %v565 = vld [vmem:[%s405 + $0xe8] sm:$0xff]
        %v566 = vld [vmem:[%s405 + $0xf0] sm:$0xff]
        %v567 = vld [vmem:[%s405 + $0xf8] sm:$0xff]
        %v568 = vld [vmem:[%s414] sm:$0x3]
        %v570 = vlaneseq
        %v571 = vshrl.u32 %v570, 7
        %v572 = vsub.s32 0, %v571
        %v573 = vrot.slane %v568, %v572
        %v574 = vlaneseq
        %v575 = vshrl.u32 %v574, 7
        %v576 = vsub.s32 1, %v575
        %v577 = vrot.slane %v568, %v576
        %v584 = vunpack.c.l.b16 %v532
        %v585 = vunpack.c.h.b16 %v532
        %v586 = vunpack.c.l.b16 %v533
        %v587 = vunpack.c.h.b16 %v533
        %v588 = vunpack.c.l.b16 %v534
        %v589 = vunpack.c.h.b16 %v534
        %v590 = vunpack.c.l.b16 %v535
        %v591 = vunpack.c.h.b16 %v535
        %v592 = vpack.c.b16 %v586, %v584
        %v593 = vpack.c.b16 %v587, %v585
        %v594 = vpack.c.b16 %v590, %v588
        %v595 = vpack.c.b16 %v591, %v589
        %v632 = vunpack.c.l.b16 %v536
        %v633 = vunpack.c.h.b16 %v536
        %v634 = vunpack.c.l.b16 %v537
        %v635 = vunpack.c.h.b16 %v537
        %v636 = vunpack.c.l.b16 %v538
        %v637 = vunpack.c.h.b16 %v538
        %v638 = vunpack.c.l.b16 %v539
        %v639 = vunpack.c.h.b16 %v539
        %v640 = vunpack.c.l.b16 %v540
        %v641 = vunpack.c.h.b16 %v540
        %v642 = vunpack.c.l.b16 %v541
        %v643 = vunpack.c.h.b16 %v541
        %v644 = vunpack.c.l.b16 %v542
        %v645 = vunpack.c.h.b16 %v542
        %v646 = vunpack.c.l.b16 %v543
        %v647 = vunpack.c.h.b16 %v543
        %v648 = vunpack.c.l.b16 %v544
        %v649 = vunpack.c.h.b16 %v544
        %v650 = vunpack.c.l.b16 %v545
        %v651 = vunpack.c.h.b16 %v545
        %v652 = vunpack.c.l.b16 %v546
        %v653 = vunpack.c.h.b16 %v546
        %v654 = vunpack.c.l.b16 %v547
        %v655 = vunpack.c.h.b16 %v547
        %v656 = vunpack.c.l.b16 %v548
        %v657 = vunpack.c.h.b16 %v548
        %v658 = vunpack.c.l.b16 %v549
        %v659 = vunpack.c.h.b16 %v549
        %v660 = vunpack.c.l.b16 %v550
        %v661 = vunpack.c.h.b16 %v550
        %v662 = vunpack.c.l.b16 %v551
        %v663 = vunpack.c.h.b16 %v551
        %v664 = vunpack.c.l.b16 %v552
        %v665 = vunpack.c.h.b16 %v552
        %v666 = vunpack.c.l.b16 %v553
        %v667 = vunpack.c.h.b16 %v553
        %v668 = vunpack.c.l.b16 %v554
        %v669 = vunpack.c.h.b16 %v554
        %v670 = vunpack.c.l.b16 %v555
        %v671 = vunpack.c.h.b16 %v555
        %v672 = vunpack.c.l.b16 %v556
        %v673 = vunpack.c.h.b16 %v556
        %v674 = vunpack.c.l.b16 %v557
        %v675 = vunpack.c.h.b16 %v557
        %v676 = vunpack.c.l.b16 %v558
        %v677 = vunpack.c.h.b16 %v558
        %v678 = vunpack.c.l.b16 %v559
        %v679 = vunpack.c.h.b16 %v559
        %v680 = vunpack.c.l.b16 %v560
        %v681 = vunpack.c.h.b16 %v560
        %v682 = vunpack.c.l.b16 %v561
        %v683 = vunpack.c.h.b16 %v561
        %v684 = vunpack.c.l.b16 %v562
        %v685 = vunpack.c.h.b16 %v562
        %v686 = vunpack.c.l.b16 %v563
        %v687 = vunpack.c.h.b16 %v563
        %v688 = vunpack.c.l.b16 %v564
        %v689 = vunpack.c.h.b16 %v564
        %v690 = vunpack.c.l.b16 %v565
        %v691 = vunpack.c.h.b16 %v565
        %v692 = vunpack.c.l.b16 %v566
        %v693 = vunpack.c.h.b16 %v566
        %v694 = vunpack.c.l.b16 %v567
        %v695 = vunpack.c.h.b16 %v567
        %v696 = vpack.c.b16 %v634, %v632
        %v697 = vpack.c.b16 %v635, %v633
        %v698 = vpack.c.b16 %v638, %v636
        %v699 = vpack.c.b16 %v639, %v637
        %v700 = vpack.c.b16 %v642, %v640
        %v701 = vpack.c.b16 %v643, %v641
        %v702 = vpack.c.b16 %v646, %v644
        %v703 = vpack.c.b16 %v647, %v645
        %v704 = vpack.c.b16 %v650, %v648
        %v705 = vpack.c.b16 %v651, %v649
        %v706 = vpack.c.b16 %v654, %v652
        %v707 = vpack.c.b16 %v655, %v653
        %v708 = vpack.c.b16 %v658, %v656
        %v709 = vpack.c.b16 %v659, %v657
        %v710 = vpack.c.b16 %v662, %v660
        %v711 = vpack.c.b16 %v663, %v661
        %v712 = vpack.c.b16 %v666, %v664
        %v713 = vpack.c.b16 %v667, %v665
        %v714 = vpack.c.b16 %v670, %v668
        %v715 = vpack.c.b16 %v671, %v669
        %v716 = vpack.c.b16 %v674, %v672
        %v717 = vpack.c.b16 %v675, %v673
        %v718 = vpack.c.b16 %v678, %v676
        %v719 = vpack.c.b16 %v679, %v677
        %v720 = vpack.c.b16 %v682, %v680
        %v721 = vpack.c.b16 %v683, %v681
        %v722 = vpack.c.b16 %v686, %v684
        %v723 = vpack.c.b16 %v687, %v685
        %v724 = vpack.c.b16 %v690, %v688
        %v725 = vpack.c.b16 %v691, %v689
        %v726 = vpack.c.b16 %v694, %v692
        %v727 = vpack.c.b16 %v695, %v693
        %760 = vmatprep.subr.bf16.mxu0 %v697
        %761 = vmatpush1.bf16.msra.mxu0 %v696
        %762 = vmatprep.subr.bf16.mxu0 %v699
        %763 = vmatpush1.bf16.msra.mxu0 %v698
        %764 = vmatprep.subr.bf16.mxu0 %v701
        %765 = vmatpush1.bf16.msra.mxu0 %v700
        %766 = vmatprep.subr.bf16.mxu0 %v703
        %767 = vmatpush1.bf16.msra.mxu0 %v702
        %768 = vmatprep.subr.bf16.mxu0 %v705
        %769 = vmatpush1.bf16.msra.mxu0 %v704
        %770 = vmatprep.subr.bf16.mxu0 %v707
        %771 = vmatpush1.bf16.msra.mxu0 %v706
        %772 = vmatprep.subr.bf16.mxu0 %v709
        %773 = vmatpush1.bf16.msra.mxu0 %v708
        %774 = vmatprep.subr.bf16.mxu0 %v711
        %775 = vmatpush1.bf16.msra.mxu0 %v710
        %776 = vmatprep.subr.bf16.mxu0 %v713
        %777 = vmatpush1.bf16.msra.mxu0 %v712
        %778 = vmatprep.subr.bf16.mxu0 %v715
        %779 = vmatpush1.bf16.msra.mxu0 %v714
        %780 = vmatprep.subr.bf16.mxu0 %v717
        %781 = vmatpush1.bf16.msra.mxu0 %v716
        %782 = vmatprep.subr.bf16.mxu0 %v719
        %783 = vmatpush1.bf16.msra.mxu0 %v718
        %784 = vmatprep.subr.bf16.mxu0 %v721
        %785 = vmatpush1.bf16.msra.mxu0 %v720
        %786 = vmatprep.subr.bf16.mxu0 %v723
        %787 = vmatpush1.bf16.msra.mxu0 %v722
        %788 = vmatprep.subr.bf16.mxu0 %v725
        %789 = vmatpush1.bf16.msra.mxu0 %v724
        %790 = vmatprep.subr.bf16.mxu0 %v727
        %791 = vmatpush1.bf16.msra.mxu0 %v726
        %792 = vmatprep.mubr.bf16.mxu0 %v593
        %793 = vmatmul.mubr.bf16.gmra.mrb[0].mxu0 %v592
        %v794 = vpop.f32.mrb[0].mxu0
        %v795 = vadd.f32 %v573, %v794
        %v796 = vpop.f32.mrb[0].mxu0
        %v797 = vadd.f32 %v577, %v796
        %v798 = vpop.f32.mrb[0].mxu0
        %v799 = vadd.f32 %v573, %v798
        %v800 = vpop.f32.mrb[0].mxu0
        %v801 = vadd.f32 %v577, %v800
        %802 = vmatprep.mubr.bf16.mxu0 %v595
        %803 = vmatmul.mubr.bf16.gmra.mrb[0].mxu0 %v594
        %v804 = vpop.f32.mrb[0].mxu0
        %v805 = vadd.f32 %v573, %v804
        %v806 = vpop.f32.mrb[0].mxu0
        %v807 = vadd.f32 %v577, %v806
        %v808 = vpop.f32.mrb[0].mxu0
        %v809 = vadd.f32 %v573, %v808
        %v810 = vpop.f32.mrb[0].mxu0
        %v811 = vadd.f32 %v577, %v810
        %812 = vdwg.mxu0
        %v813 = vpack.c.bf16 %v799, %v795
        %v814 = vpack.c.bf16 %v801, %v797
        %v815 = vpack.c.bf16 %v809, %v805
        %v816 = vpack.c.bf16 %v811, %v807
        %v817 = vld [vmem:[%s423] sm:$0xff]
        %v818 = vld [vmem:[%s423 + $0x8] sm:$0xff]
        %v819 = vld [vmem:[%s423 + $0x10] sm:$0xff]
        %v820 = vld [vmem:[%s423 + $0x18] sm:$0xff]
        %v821 = vld [vmem:[%s423 + $0x20] sm:$0xff]
        %v822 = vld [vmem:[%s423 + $0x28] sm:$0xff]
        %v823 = vld [vmem:[%s423 + $0x30] sm:$0xff]
        %v824 = vld [vmem:[%s423 + $0x38] sm:$0xff]
        %v825 = vld [vmem:[%s423 + $0x40] sm:$0xff]
        %v826 = vld [vmem:[%s423 + $0x48] sm:$0xff]
        %v827 = vld [vmem:[%s423 + $0x50] sm:$0xff]
        %v828 = vld [vmem:[%s423 + $0x58] sm:$0xff]
        %v829 = vld [vmem:[%s423 + $0x60] sm:$0xff]
        %v830 = vld [vmem:[%s423 + $0x68] sm:$0xff]
        %v831 = vld [vmem:[%s423 + $0x70] sm:$0xff]
        %v832 = vld [vmem:[%s423 + $0x78] sm:$0xff]
        %v833 = vld [vmem:[%s423 + $0x80] sm:$0xff]
        %v834 = vld [vmem:[%s423 + $0x88] sm:$0xff]
        %v835 = vld [vmem:[%s423 + $0x90] sm:$0xff]
        %v836 = vld [vmem:[%s423 + $0x98] sm:$0xff]
        %v837 = vld [vmem:[%s423 + $0xa0] sm:$0xff]
        %v838 = vld [vmem:[%s423 + $0xa8] sm:$0xff]
        %v839 = vld [vmem:[%s423 + $0xb0] sm:$0xff]
        %v840 = vld [vmem:[%s423 + $0xb8] sm:$0xff]
        %v841 = vld [vmem:[%s423 + $0xc0] sm:$0xff]
        %v842 = vld [vmem:[%s423 + $0xc8] sm:$0xff]
        %v843 = vld [vmem:[%s423 + $0xd0] sm:$0xff]
        %v844 = vld [vmem:[%s423 + $0xd8] sm:$0xff]
        %v845 = vld [vmem:[%s423 + $0xe0] sm:$0xff]
        %v846 = vld [vmem:[%s423 + $0xe8] sm:$0xff]
        %v847 = vld [vmem:[%s423 + $0xf0] sm:$0xff]
        %v848 = vld [vmem:[%s423 + $0xf8] sm:$0xff]
        %v849 = vld [vmem:[%s432] sm:$0x3]
        %v851 = vlaneseq
        %v852 = vshrl.u32 %v851, 7
        %v853 = vsub.s32 0, %v852
        %v854 = vrot.slane %v849, %v853
        %v855 = vlaneseq
        %v856 = vshrl.u32 %v855, 7
        %v857 = vsub.s32 1, %v856
        %v858 = vrot.slane %v849, %v857
        %v893 = vunpack.c.l.b16 %v817
        %v894 = vunpack.c.h.b16 %v817
        %v895 = vunpack.c.l.b16 %v818
        %v896 = vunpack.c.h.b16 %v818
        %v897 = vunpack.c.l.b16 %v819
        %v898 = vunpack.c.h.b16 %v819
        %v899 = vunpack.c.l.b16 %v820
        %v900 = vunpack.c.h.b16 %v820
        %v901 = vunpack.c.l.b16 %v821
        %v902 = vunpack.c.h.b16 %v821
        %v903 = vunpack.c.l.b16 %v822
        %v904 = vunpack.c.h.b16 %v822
        %v905 = vunpack.c.l.b16 %v823
        %v906 = vunpack.c.h.b16 %v823
        %v907 = vunpack.c.l.b16 %v824
        %v908 = vunpack.c.h.b16 %v824
        %v909 = vunpack.c.l.b16 %v825
        %v910 = vunpack.c.h.b16 %v825
        %v911 = vunpack.c.l.b16 %v826
        %v912 = vunpack.c.h.b16 %v826
        %v913 = vunpack.c.l.b16 %v827
        %v914 = vunpack.c.h.b16 %v827
        %v915 = vunpack.c.l.b16 %v828
        %v916 = vunpack.c.h.b16 %v828
        %v917 = vunpack.c.l.b16 %v829
        %v918 = vunpack.c.h.b16 %v829
        %v919 = vunpack.c.l.b16 %v830
        %v920 = vunpack.c.h.b16 %v830
        %v921 = vunpack.c.l.b16 %v831
        %v922 = vunpack.c.h.b16 %v831
        %v923 = vunpack.c.l.b16 %v832
        %v924 = vunpack.c.h.b16 %v832
        %v925 = vunpack.c.l.b16 %v833
        %v926 = vunpack.c.h.b16 %v833
        %v927 = vunpack.c.l.b16 %v834
        %v928 = vunpack.c.h.b16 %v834
        %v929 = vunpack.c.l.b16 %v835
        %v930 = vunpack.c.h.b16 %v835
        %v931 = vunpack.c.l.b16 %v836
        %v932 = vunpack.c.h.b16 %v836
        %v933 = vunpack.c.l.b16 %v837
        %v934 = vunpack.c.h.b16 %v837
        %v935 = vunpack.c.l.b16 %v838
        %v936 = vunpack.c.h.b16 %v838
        %v937 = vunpack.c.l.b16 %v839
        %v938 = vunpack.c.h.b16 %v839
        %v939 = vunpack.c.l.b16 %v840
        %v940 = vunpack.c.h.b16 %v840
        %v941 = vunpack.c.l.b16 %v841
        %v942 = vunpack.c.h.b16 %v841
        %v943 = vunpack.c.l.b16 %v842
        %v944 = vunpack.c.h.b16 %v842
        %v945 = vunpack.c.l.b16 %v843
        %v946 = vunpack.c.h.b16 %v843
        %v947 = vunpack.c.l.b16 %v844
        %v948 = vunpack.c.h.b16 %v844
        %v949 = vunpack.c.l.b16 %v845
        %v950 = vunpack.c.h.b16 %v845
        %v951 = vunpack.c.l.b16 %v846
        %v952 = vunpack.c.h.b16 %v846
        %v953 = vunpack.c.l.b16 %v847
        %v954 = vunpack.c.h.b16 %v847
        %v955 = vunpack.c.l.b16 %v848
        %v956 = vunpack.c.h.b16 %v848
        %v957 = vpack.c.b16 %v895, %v893
        %v958 = vpack.c.b16 %v896, %v894
        %v959 = vpack.c.b16 %v899, %v897
        %v960 = vpack.c.b16 %v900, %v898
        %v961 = vpack.c.b16 %v903, %v901
        %v962 = vpack.c.b16 %v904, %v902
        %v963 = vpack.c.b16 %v907, %v905
        %v964 = vpack.c.b16 %v908, %v906
        %v965 = vpack.c.b16 %v911, %v909
        %v966 = vpack.c.b16 %v912, %v910
        %v967 = vpack.c.b16 %v915, %v913
        %v968 = vpack.c.b16 %v916, %v914
        %v969 = vpack.c.b16 %v919, %v917
        %v970 = vpack.c.b16 %v920, %v918
        %v971 = vpack.c.b16 %v923, %v921
        %v972 = vpack.c.b16 %v924, %v922
        %v973 = vpack.c.b16 %v927, %v925
        %v974 = vpack.c.b16 %v928, %v926
        %v975 = vpack.c.b16 %v931, %v929
        %v976 = vpack.c.b16 %v932, %v930
        %v977 = vpack.c.b16 %v935, %v933
        %v978 = vpack.c.b16 %v936, %v934
        %v979 = vpack.c.b16 %v939, %v937
        %v980 = vpack.c.b16 %v940, %v938
        %v981 = vpack.c.b16 %v943, %v941
        %v982 = vpack.c.b16 %v944, %v942
        %v983 = vpack.c.b16 %v947, %v945
        %v984 = vpack.c.b16 %v948, %v946
        %v985 = vpack.c.b16 %v951, %v949
        %v986 = vpack.c.b16 %v952, %v950
        %v987 = vpack.c.b16 %v955, %v953
        %v988 = vpack.c.b16 %v956, %v954
        %1021 = vmatprep.subr.bf16.mxu0 %v958
        %1022 = vmatpush1.bf16.msra.mxu0 %v957
        %1023 = vmatprep.subr.bf16.mxu0 %v960
        %1024 = vmatpush1.bf16.msra.mxu0 %v959
        %1025 = vmatprep.subr.bf16.mxu0 %v962
        %1026 = vmatpush1.bf16.msra.mxu0 %v961
        %1027 = vmatprep.subr.bf16.mxu0 %v964
        %1028 = vmatpush1.bf16.msra.mxu0 %v963
        %1029 = vmatprep.subr.bf16.mxu0 %v966
        %1030 = vmatpush1.bf16.msra.mxu0 %v965
        %1031 = vmatprep.subr.bf16.mxu0 %v968
        %1032 = vmatpush1.bf16.msra.mxu0 %v967
        %1033 = vmatprep.subr.bf16.mxu0 %v970
        %1034 = vmatpush1.bf16.msra.mxu0 %v969
        %1035 = vmatprep.subr.bf16.mxu0 %v972
        %1036 = vmatpush1.bf16.msra.mxu0 %v971
        %1037 = vmatprep.subr.bf16.mxu0 %v974
        %1038 = vmatpush1.bf16.msra.mxu0 %v973
        %1039 = vmatprep.subr.bf16.mxu0 %v976
        %1040 = vmatpush1.bf16.msra.mxu0 %v975
        %1041 = vmatprep.subr.bf16.mxu0 %v978
        %1042 = vmatpush1.bf16.msra.mxu0 %v977
        %1043 = vmatprep.subr.bf16.mxu0 %v980
        %1044 = vmatpush1.bf16.msra.mxu0 %v979
        %1045 = vmatprep.subr.bf16.mxu0 %v982
        %1046 = vmatpush1.bf16.msra.mxu0 %v981
        %1047 = vmatprep.subr.bf16.mxu0 %v984
        %1048 = vmatpush1.bf16.msra.mxu0 %v983
        %1049 = vmatprep.subr.bf16.mxu0 %v986
        %1050 = vmatpush1.bf16.msra.mxu0 %v985
        %1051 = vmatprep.subr.bf16.mxu0 %v988
        %1052 = vmatpush1.bf16.msra.mxu0 %v987
        %1053 = vmatprep.mubr.bf16.mxu0 %v814
        %1054 = vmatmul.mubr.bf16.gmra.mrb[0].mxu0 %v813
        %v1055 = vpop.f32.mrb[0].mxu0
        %v1056 = vadd.f32 %v854, %v1055
        %v1057 = vpop.f32.mrb[0].mxu0
        %v1058 = vadd.f32 %v858, %v1057
        %v1059 = vpop.f32.mrb[0].mxu0
        %v1060 = vadd.f32 %v854, %v1059
        %v1061 = vpop.f32.mrb[0].mxu0
        %v1062 = vadd.f32 %v858, %v1061
        %1063 = vmatprep.mubr.bf16.mxu0 %v816
        %1064 = vmatmul.mubr.bf16.gmra.mrb[0].mxu0 %v815
        %v1065 = vpop.f32.mrb[0].mxu0
        %v1066 = vadd.f32 %v854, %v1065
        %v1067 = vpop.f32.mrb[0].mxu0
        %v1068 = vadd.f32 %v858, %v1067
        %v1069 = vpop.f32.mrb[0].mxu0
        %v1070 = vadd.f32 %v854, %v1069
        %v1071 = vpop.f32.mrb[0].mxu0
        %v1072 = vadd.f32 %v858, %v1071
        %1073 = vdwg.mxu0
        %v1074 = vpack.c.bf16 %v1060, %v1056
        %v1075 = vpack.c.bf16 %v1062, %v1058
        %v1076 = vpack.c.bf16 %v1070, %v1066
        %v1077 = vpack.c.bf16 %v1072, %v1068
        %v1078 = vld [vmem:[%s441] sm:$0xf]
        %v1079 = vld [vmem:[%s441 + $0x4] sm:$0xf]
        %v1080 = vld [vmem:[%s441 + $0x8] sm:$0xf]
        %v1081 = vld [vmem:[%s441 + $0xc] sm:$0xf]
        %v1082 = vld [vmem:[%s441 + $0x10] sm:$0xf]
        %v1083 = vld [vmem:[%s441 + $0x14] sm:$0xf]
        %v1084 = vld [vmem:[%s441 + $0x18] sm:$0xf]
        %v1085 = vld [vmem:[%s441 + $0x1c] sm:$0xf]
        %v1086 = vld [vmem:[%s441 + $0x20] sm:$0xf]
        %v1087 = vld [vmem:[%s441 + $0x24] sm:$0xf]
        %v1088 = vld [vmem:[%s441 + $0x28] sm:$0xf]
        %v1089 = vld [vmem:[%s441 + $0x2c] sm:$0xf]
        %v1090 = vld [vmem:[%s441 + $0x30] sm:$0xf]
        %v1091 = vld [vmem:[%s441 + $0x34] sm:$0xf]
        %v1092 = vld [vmem:[%s441 + $0x38] sm:$0xf]
        %v1093 = vld [vmem:[%s441 + $0x3c] sm:$0xf]
        %v1094 = vld [vmem:[%s441 + $0x40] sm:$0xf]
        %v1095 = vld [vmem:[%s441 + $0x44] sm:$0xf]
        %v1096 = vld [vmem:[%s441 + $0x48] sm:$0xf]
        %v1097 = vld [vmem:[%s441 + $0x4c] sm:$0xf]
        %v1098 = vld [vmem:[%s441 + $0x50] sm:$0xf]
        %v1099 = vld [vmem:[%s441 + $0x54] sm:$0xf]
        %v1100 = vld [vmem:[%s441 + $0x58] sm:$0xf]
        %v1101 = vld [vmem:[%s441 + $0x5c] sm:$0xf]
        %v1102 = vld [vmem:[%s441 + $0x60] sm:$0xf]
        %v1103 = vld [vmem:[%s441 + $0x64] sm:$0xf]
        %v1104 = vld [vmem:[%s441 + $0x68] sm:$0xf]
        %v1105 = vld [vmem:[%s441 + $0x6c] sm:$0xf]
        %v1106 = vld [vmem:[%s441 + $0x70] sm:$0xf]
        %v1107 = vld [vmem:[%s441 + $0x74] sm:$0xf]
        %v1108 = vld [vmem:[%s441 + $0x78] sm:$0xf]
        %v1109 = vld [vmem:[%s441 + $0x7c] sm:$0xf]
        %v1110 = vld [vmem:[%s449] sm:$0x1]
        %v1112 = vlaneseq
        %v1113 = vshrl.u32 %v1112, 7
        %v1114 = vsub.s32 0, %v1113
        %v1115 = vrot.slane %v1110, %v1114
        %v1149 = vunpack.c.l.b16 %v1078
        %v1150 = vunpack.c.l.b16 %v1079
        %v1151 = vunpack.c.l.b16 %v1080
        %v1152 = vunpack.c.l.b16 %v1081
        %v1153 = vunpack.c.l.b16 %v1082
        %v1154 = vunpack.c.l.b16 %v1083
        %v1155 = vunpack.c.l.b16 %v1084
        %v1156 = vunpack.c.l.b16 %v1085
        %v1157 = vunpack.c.l.b16 %v1086
        %v1158 = vunpack.c.l.b16 %v1087
        %v1159 = vunpack.c.l.b16 %v1088
        %v1160 = vunpack.c.l.b16 %v1089
        %v1161 = vunpack.c.l.b16 %v1090
        %v1162 = vunpack.c.l.b16 %v1091
        %v1163 = vunpack.c.l.b16 %v1092
        %v1164 = vunpack.c.l.b16 %v1093
        %v1165 = vunpack.c.l.b16 %v1094
        %v1166 = vunpack.c.l.b16 %v1095
        %v1167 = vunpack.c.l.b16 %v1096
        %v1168 = vunpack.c.l.b16 %v1097
        %v1169 = vunpack.c.l.b16 %v1098
        %v1170 = vunpack.c.l.b16 %v1099
        %v1171 = vunpack.c.l.b16 %v1100
        %v1172 = vunpack.c.l.b16 %v1101
        %v1173 = vunpack.c.l.b16 %v1102
        %v1174 = vunpack.c.l.b16 %v1103
        %v1175 = vunpack.c.l.b16 %v1104
        %v1176 = vunpack.c.l.b16 %v1105
        %v1177 = vunpack.c.l.b16 %v1106
        %v1178 = vunpack.c.l.b16 %v1107
        %v1179 = vunpack.c.l.b16 %v1108
        %v1180 = vunpack.c.l.b16 %v1109
        %v1181 = vpack.c.b16 %v1150, %v1149
        %v1182 = vpack.c.b16 %v1152, %v1151
        %v1183 = vpack.c.b16 %v1154, %v1153
        %v1184 = vpack.c.b16 %v1156, %v1155
        %v1185 = vpack.c.b16 %v1158, %v1157
        %v1186 = vpack.c.b16 %v1160, %v1159
        %v1187 = vpack.c.b16 %v1162, %v1161
        %v1188 = vpack.c.b16 %v1164, %v1163
        %v1189 = vpack.c.b16 %v1166, %v1165
        %v1190 = vpack.c.b16 %v1168, %v1167
        %v1191 = vpack.c.b16 %v1170, %v1169
        %v1192 = vpack.c.b16 %v1172, %v1171
        %v1193 = vpack.c.b16 %v1174, %v1173
        %v1194 = vpack.c.b16 %v1176, %v1175
        %v1195 = vpack.c.b16 %v1178, %v1177
        %v1196 = vpack.c.b16 %v1180, %v1179
        %1213 = vmatprep.subr.bf16.mxu0 0
        %1214 = vmatpush1.bf16.msra.mxu0 %v1181
        %1215 = vmatprep.subr.bf16.mxu0 0
        %1216 = vmatpush1.bf16.msra.mxu0 %v1182
        %1217 = vmatprep.subr.bf16.mxu0 0
        %1218 = vmatpush1.bf16.msra.mxu0 %v1183
        %1219 = vmatprep.subr.bf16.mxu0 0
        %1220 = vmatpush1.bf16.msra.mxu0 %v1184
        %1221 = vmatprep.subr.bf16.mxu0 0
        %1222 = vmatpush1.bf16.msra.mxu0 %v1185
        %1223 = vmatprep.subr.bf16.mxu0 0
        %1224 = vmatpush1.bf16.msra.mxu0 %v1186
        %1225 = vmatprep.subr.bf16.mxu0 0
        %1226 = vmatpush1.bf16.msra.mxu0 %v1187
        %1227 = vmatprep.subr.bf16.mxu0 0
        %1228 = vmatpush1.bf16.msra.mxu0 %v1188
        %1229 = vmatprep.subr.bf16.mxu0 0
        %1230 = vmatpush1.bf16.msra.mxu0 %v1189
        %1231 = vmatprep.subr.bf16.mxu0 0
        %1232 = vmatpush1.bf16.msra.mxu0 %v1190
        %1233 = vmatprep.subr.bf16.mxu0 0
        %1234 = vmatpush1.bf16.msra.mxu0 %v1191
        %1235 = vmatprep.subr.bf16.mxu0 0
        %1236 = vmatpush1.bf16.msra.mxu0 %v1192
        %1237 = vmatprep.subr.bf16.mxu0 0
        %1238 = vmatpush1.bf16.msra.mxu0 %v1193
        %1239 = vmatprep.subr.bf16.mxu0 0
        %1240 = vmatpush1.bf16.msra.mxu0 %v1194
        %1241 = vmatprep.subr.bf16.mxu0 0
        %1242 = vmatpush1.bf16.msra.mxu0 %v1195
        %1243 = vmatprep.subr.bf16.mxu0 0
        %1244 = vmatpush1.bf16.msra.mxu0 %v1196
        %1245 = vmatprep.mubr.bf16.mxu0 %v1075
        %1246 = vmatmul.mubr.bf16.gmra.mrb[0].mxu0 %v1074
        %v1247 = vpop.f32.mrb[0].mxu0
        %v1248 = vadd.f32 %v1115, %v1247
        %v1249 = vpop.f32.mrb[0].mxu0
        %v1250 = vpop.f32.mrb[0].mxu0
        %v1251 = vadd.f32 %v1115, %v1250
        %v1252 = vpop.f32.mrb[0].mxu0
        %1253 = vmatprep.mubr.bf16.mxu0 %v1077
        %1254 = vmatmul.mubr.bf16.gmra.mrb[0].mxu0 %v1076
        %v1255 = vpop.f32.mrb[0].mxu0
        %v1256 = vadd.f32 %v1115, %v1255
        %v1257 = vpop.f32.mrb[0].mxu0
        %v1258 = vpop.f32.mrb[0].mxu0
        %v1259 = vadd.f32 %v1115, %v1258
        %v1260 = vpop.f32.mrb[0].mxu0
        %1261 = vdwg.mxu0
        %v1262 = vpack.c.bf16 %v1251, %v1248
        %v1263 = vpack.c.bf16 %v1259, %v1256
        %v1266 = vunpack.c.l.b16 %v1262
        %v1267 = vunpack.c.h.b16 %v1262
        %v1268 = vunpack.c.l.b16 %v1263
        %v1269 = vunpack.c.h.b16 %v1263
        %v1270 = vpack.c.b16 %v1266, %v1266
        %v1271 = vpack.c.b16 %v1267, %v1267
        %v1272 = vpack.c.b16 %v1268, %v1268
        %v1273 = vpack.c.b16 %v1269, %v1269
        %1278 = vst [vmem:[%s529] sm:$0xf] %v1270
        %1279 = vst [vmem:[%s529 + $0x4] sm:$0xf] %v1271
        %1280 = vst [vmem:[%s529 + $0x8] sm:$0xf] %v1272
        %1281 = vst [vmem:[%s529 + $0xc] sm:$0xf] %v1273
        %s1282 = smul.u32 4, %s34
        %p1283 = scmp.lt.s32.totalorder %s35, 2
        %s1284 = scalar_select %p1283, %s35, 2
        %p1285 = scmp.lt.s32.totalorder %s1282, 7
        %s1286 = scalar_select %p1285, %s1282, 7
        %s1287 = smul.addr %s1284, 8
        %s1288 = sadd.s32 %s1286, %s1287
        %s1289 = smul.addr %s1288, 4
        %s1290 = scalar_lea.vmem %s7, %s1289
        // Predicated region
        $region73: #{mlp_hand_forward.2} parent=47 // pred_check
          %p1291 = pneg %p244
        $region74: #{mlp_hand_forward.2} parent=47 // pred_check_branch
          %1293 = sbr.rel (%p1291) target = $region76
        $region75: #{mlp_hand_forward.2} parent=47 // pred_region
          %s1294 = smul.u32 4, %s34
        $region76: #{mlp_hand_forward.2} parent=47 // pred_fallthru
          _
      $region48: #{mlp_hand_forward.2} parent=5 // pred_fallthru
        _
      %p1295 = scmp.le.s32.totalorder 2, %s25
      // Predicated region
      $region77: #{mlp_hand_forward.2} parent=5 // pred_check
        %p1296 = pneg %p1295
      $region78: #{mlp_hand_forward.2} parent=5 // pred_check_branch
        %1298 = sbr.rel (%p1296) target = $region80
      $region79: #{mlp_hand_forward.2} parent=5 // pred_region
        %s1299 = ssub.s32 %s25, 2
        // Predicated region
        $region81: #{mlp_hand_forward.2} parent=79 // pred_check
          %p1300 = pneg %p250
        $region82: #{mlp_hand_forward.2} parent=79 // pred_check_branch
          %1302 = sbr.rel (%p1300) target = $region84
        $region83: #{mlp_hand_forward.2} parent=79 // pred_region
          %s1303 = smul.u32 4, %s36
          %p1304 = scmp.lt.s32.totalorder %s37, 2
          %s1305 = scalar_select %p1304, %s37, 2
          %p1306 = scmp.lt.s32.totalorder %s1303, 7
          %s1307 = scalar_select %p1306, %s1303, 7
          %s1308 = smul.addr %s1305, 8
          %s1309 = sadd.s32 %s1307, %s1308
          %s1310 = smul.addr %s1309, 4
          %s1311 = scalar_lea.vmem %s7, %s1310
        $region84: #{mlp_hand_forward.2} parent=79 // pred_fallthru
          _
      $region80: #{mlp_hand_forward.2} parent=5 // pred_fallthru
        _
    $region6: #{mlp_hand_forward.2} parent=1 // loop_footer
      %s29 = sadd.s32 1, %s25
    $region7: #{mlp_hand_forward.2} parent=1 // loop_footer_branch
      %24 = sbr.rel target = $region3
    $region8: #{mlp_hand_forward.2} parent=1 // loop_exit
      _
    %1312 = vsyncpa [#allocation3], 1
    %s1313 = scalar_lea.sflag [#allocation3], 1
    %1314 = vsyncpa %s1313, 1
    %1315 = vsyncpa [#allocation5], 1
    %s1316 = scalar_lea.sflag [#allocation5], 1
    %1317 = vsyncpa %s1316, 1
    %1318 = vsyncpa [#allocation8], 1
    %s1319 = scalar_lea.sflag [#allocation8], 1
    %1320 = vsyncpa %s1319, 1
    %1321 = vsyncpa [#allocation11], 1
    %s1322 = scalar_lea.sflag [#allocation11], 1
    %1323 = vsyncpa %s1322, 1

// kernel: mlp_hand_forward.3
$region0: #{mlp_hand_forward.3}
  #allocation0 [shape = 'u32[]', space=smem, size = 0x4, offset = 0x4, fixed_abs, tag = 'smem constant byte address 0x4 - core index']
  #allocation1 [shape = 'u32[144,128]{1,0:T(1,128)}', space=vmem, size = 0x12000, scoped, tag = 'internal scratch']
  %s0 = inlined_call_operand.vmem [shape: bf16[16,2688], index: 0, kind: input, shape index: {}]
  %s1 = inlined_call_operand.hbm [shape: bf16[2688,896], index: 1, kind: input, shape index: {}]
  %s2 = inlined_call_operand.vmem [shape: f32[16,896], index: 2, kind: output, shape index: {}]
  %s3 = sld [smem:[#allocation0]]
  $region79: #{mlp_hand_forward.3} parent=0
    _
  %s5 = ssub.s32 1, %s3
  %s6 = scalar_select 0, %s5, %s3
  $region1: #{mlp_hand_forward.3} parent=0
    #allocation2 [shape = 'u8[1376256]{0}', space=vmem, size = 0x150000, scoped, tag = 'input window, operand 1']
    #allocation3 [shape = 's32[2]{0}', space=sflag, size = 0x8, scoped, tag = 'scoped memory for mlp_hand_forward.3']
    #allocation4 [shape = 'u8[16384]{0}', space=vmem, size = 0x4000, scoped, tag = 'output window, operand 0']
    %7 = vsyncpa [#allocation3], 0
    %s8 = scalar_lea.sflag [#allocation3], 1
    %9 = vsyncpa %s8, 0
    loop: start=0, step=1, limit=9
    $region2: #{mlp_hand_forward.3} parent=1 // loop_pre_header
      _
    $region3: #{mlp_hand_forward.3} parent=1 // loop_header
      %s11 = sphi 0, %s15
      %p12 = scmp.ge.s32.totalorder %s11, 9
      %s18 = sphi 0, %s30
      %s19 = sphi 0, %s26
      %s20 = sphi 0, %s18
      %s21 = sphi 0, %s19
      %s22 = sphi 0, %s20
      %s23 = sphi 0, %s21
      %s33 = sphi 0, %s35
      %s36 = sphi 0, %s33
      %s37 = sphi 0, %s36
      %s53 = sphi 0, %s37
      %s59 = sphi 0, %s61
      %s62 = sphi 0, %s59
      %s63 = sphi 0, %s62
      %s79 = sphi 0, %s63
      %s87 = sphi 0, %s89
      %s90 = sphi 0, %s87
      %s91 = sphi 0, %s90
      %s107 = sphi 0, %s91
    $region4: #{mlp_hand_forward.3} parent=1 // loop_header_branch
      %14 = sbr.rel (%p12) target = $region8
    $region5: #{mlp_hand_forward.3} parent=1 // loop_body
      %s16 = ssub.s32 %s11, 1
      %s17 = ssub.s32 %s11, 2
      %s24 = sadd.s32 1, %s19
      %p25 = scmp.ge.s32.totalorder %s24, 1
      %s26 = scalar_select %p25, 0, %s24
      %s27 = sadd.s32 1, %s18
      %s28 = scalar_select %p25, %s27, %s18
      %p29 = scmp.ge.s32.totalorder %s28, 7
      %s30 = scalar_select %p29, 0, %s28
      %s31 = ssub.s32 %s19, %s26
      %p32 = scmp.eq.s32.totalorder %s31, 0
      %s34 = sadd.s32 %s33, 1
      %s35 = scalar_select %p32, %s33, %s34
      %p38 = pneg %p32
      %p39 = scmp.eq.s32.totalorder %s11, 6
      %p40 = por %p38, %p39
      %p41 = scmp.ne.s32.totalorder %s33, %s36
      %p42 = scmp.eq.s32.totalorder %s11, 0
      %p43 = por %p41, %p42
      %p44 = scmp.ne.s32.totalorder %s33, %s36
      %p45 = scmp.eq.s32.totalorder %s16, 6
      %p46 = por %p44, %p45
      %p47 = scmp.ne.s32.totalorder %s36, %s37
      %p48 = scmp.eq.s32.totalorder %s16, 0
      %p49 = por %p47, %p48
      %p50 = scmp.ne.s32.totalorder %s36, %s37
      %p51 = scmp.eq.s32.totalorder %s17, 6
      %p52 = por %p50, %p51
      %p54 = scmp.ne.s32.totalorder %s37, %s53
      %p55 = scmp.eq.s32.totalorder %s17, 0
      %p56 = por %p54, %p55
      %s57 = ssub.s32 %s18, %s30
      %p58 = scmp.eq.s32.totalorder %s57, 0
      %s60 = sadd.s32 %s59, 1
      %s61 = scalar_select %p58, %s59, %s60
      %p64 = pneg %p58
      %p65 = scmp.eq.s32.totalorder %s11, 6
      %p66 = por %p64, %p65
      %p67 = scmp.ne.s32.totalorder %s59, %s62
      %p68 = scmp.eq.s32.totalorder %s11, 0
      %p69 = por %p67, %p68
      %p70 = scmp.ne.s32.totalorder %s59, %s62
      %p71 = scmp.eq.s32.totalorder %s16, 6
      %p72 = por %p70, %p71
      %p73 = scmp.ne.s32.totalorder %s62, %s63
      %p74 = scmp.eq.s32.totalorder %s16, 0
      %p75 = por %p73, %p74
      %p76 = scmp.ne.s32.totalorder %s62, %s63
      %p77 = scmp.eq.s32.totalorder %s17, 6
      %p78 = por %p76, %p77
      %p80 = scmp.ne.s32.totalorder %s63, %s79
      %p81 = scmp.eq.s32.totalorder %s17, 0
      %p82 = por %p80, %p81
      %s83 = ssub.s32 %s19, %s26
      %s84 = ssub.s32 %s18, %s30
      %s85 = sor.u32 %s83, %s84
      %p86 = scmp.eq.s32.totalorder %s85, 0
      %s88 = sadd.s32 %s87, 1
      %s89 = scalar_select %p86, %s87, %s88
      %p92 = pneg %p86
      %p93 = scmp.eq.s32.totalorder %s11, 6
      %p94 = por %p92, %p93
      %p95 = scmp.ne.s32.totalorder %s87, %s90
      %p96 = scmp.eq.s32.totalorder %s11, 0
      %p97 = por %p95, %p96
      %p98 = scmp.ne.s32.totalorder %s87, %s90
      %p99 = scmp.eq.s32.totalorder %s16, 6
      %p100 = por %p98, %p99
      %p101 = scmp.ne.s32.totalorder %s90, %s91
      %p102 = scmp.eq.s32.totalorder %s16, 0
      %p103 = por %p101, %p102
      %p104 = scmp.ne.s32.totalorder %s90, %s91
      %p105 = scmp.eq.s32.totalorder %s17, 6
      %p106 = por %p104, %p105
      %p108 = scmp.ne.s32.totalorder %s91, %s107
      %p109 = scmp.eq.s32.totalorder %s17, 0
      %p110 = por %p108, %p109
      %p111 = scmp.le.s32.totalorder 1, %s11
      %p112 = scmp.lt.s32.totalorder %s11, 8
      %p113 = pnand %p111, %p112
      %p114 = pneg %p113
      // Predicated region
      $region9: #{mlp_hand_forward.3} parent=5 // pred_check
        _
      $region10: #{mlp_hand_forward.3} parent=5 // pred_check_branch
        %116 = sbr.rel (%p113) target = $region12
      $region11: #{mlp_hand_forward.3} parent=5 // pred_region
        %s117 = ssub.s32 %s11, 1
        // Predicated region
        $region13: #{mlp_hand_forward.3} parent=11 // pred_check
          %p118 = pneg %p49
        $region14: #{mlp_hand_forward.3} parent=11 // pred_check_branch
          %120 = sbr.rel (%p118) target = $region16
        $region15: #{mlp_hand_forward.3} parent=11 // pred_region
          %s121 = smul.u32 2, %s21
          %p122 = scmp.lt.s32.totalorder %s121, 1
          %s123 = scalar_select %p122, %s121, 1
          %s124 = smul.addr %s123, 21
          %s125 = smul.addr %s124, 4
          %s126 = scalar_lea.vmem %s0, %s125
          %s127 = smul.u32 2, %s21
        $region16: #{mlp_hand_forward.3} parent=11 // pred_fallthru
          _
      $region12: #{mlp_hand_forward.3} parent=5 // pred_fallthru
        _
      %p128 = scmp.lt.s32.totalorder %s11, 7
      // Predicated region
      $region17: #{mlp_hand_forward.3} parent=5 // pred_check
        %p129 = pneg %p128
      $region18: #{mlp_hand_forward.3} parent=5 // pred_check_branch
        %131 = sbr.rel (%p129) target = $region20
      $region19: #{mlp_hand_forward.3} parent=5 // pred_region
        // Predicated region
        $region21: #{mlp_hand_forward.3} parent=19 // pred_check
          %p132 = pneg %p69
        $region22: #{mlp_hand_forward.3} parent=19 // pred_check_branch
          %134 = sbr.rel (%p132) target = $region24
        $region23: #{mlp_hand_forward.3} parent=19 // pred_region
          %s135 = sand.u32 %s59, 1
          %s136 = scalar_lea.sflag [#allocation3], %s135
          %s137 = sand.u32 %s59, 1
          %s138 = smul.addr %s137, 1344
          %s139 = scalar_lea.vmem [#allocation2], %s138
          %s141 = ssub.s32 21504, 21504
          %142 = vsyncadd %s136, %s141
          %s143 = smul.addr %s18, 64
          %s144 = scalar_lea.hbm %s1, %s143
          %s145 = sshll.u32 %s139, 4
          %s146 = int_to_ptr.vmem [resolvable:$true] %s145
          %151 = dma.hbm_to_vmem [thread:$0]  %s144, 21504, %s146, %s136, 448, 64, 4
        $region24: #{mlp_hand_forward.3} parent=19 // pred_fallthru
          _
      $region20: #{mlp_hand_forward.3} parent=5 // pred_fallthru
        _
      %p152 = scmp.le.s32.totalorder 1, %s11
      %p153 = scmp.lt.s32.totalorder %s11, 8
      %p154 = pnand %p152, %p153
      %p155 = pneg %p154
      // Predicated region
      $region25: #{mlp_hand_forward.3} parent=5 // pred_check
        _
      $region26: #{mlp_hand_forward.3} parent=5 // pred_check_branch
        %157 = sbr.rel (%p154) target = $region28
      $region27: #{mlp_hand_forward.3} parent=5 // pred_region
        %s158 = ssub.s32 %s11, 1
        %s159 = sand.u32 %s62, 1
        %s160 = scalar_lea.sflag [#allocation3], %s159
        %s161 = sand.u32 %s62, 1
        %s162 = smul.addr %s161, 1344
        %s163 = scalar_lea.vmem [#allocation2], %s162
        // Predicated region
        $region29: #{mlp_hand_forward.3} parent=27 // pred_check
          %p164 = pneg %p75
        $region30: #{mlp_hand_forward.3} parent=27 // pred_check_branch
          %166 = sbr.rel (%p164) target = $region32
        $region31: #{mlp_hand_forward.3} parent=27 // pred_region
          %167 = dma.done %s160, 21504
        $region32: #{mlp_hand_forward.3} parent=27 // pred_fallthru
          _
        %s168 = smul.u32 2, %s21
        %p169 = scmp.lt.s32.totalorder %s168, 1
        %s170 = scalar_select %p169, %s168, 1
        %s171 = smul.addr %s170, 21
        %s172 = smul.addr %s171, 4
        %s173 = scalar_lea.vmem %s0, %s172
        %p174 = pneg %p49
        %p175 = pneg %p46
        %s176 = sand.u32 %s62, 1
        %s177 = scalar_lea.sflag [#allocation3], %s176
        %s178 = sand.u32 %s62, 1
        %s179 = smul.addr %s178, 1344
        %s180 = scalar_lea.vmem [#allocation2], %s179
        %p181 = pneg %p75
        %p182 = pneg %p72
        %p183 = pneg %p103
        %p184 = pneg %p100
        %s185 = sand.u32 %s90, 1
        %s186 = sand.u32 %s90, 1
        %s187 = smul.addr %s186, 16
        %s188 = scalar_lea.vmem [#allocation4], %s187
        %s189 = smul.u32 2, %s21
        %p190 = scmp.lt.s32.totalorder %s189, 1
        %s191 = scalar_select %p190, %s189, 1
        %s192 = smul.addr %s191, 21
        %s193 = smul.addr %s192, 4
        %s194 = scalar_lea.vmem %s0, %s193
        %s195 = smul.u32 2, %s21
        %s196 = smul.u32 2, %s21
        %v198 = vld [vmem:[%s194] sm:$0xff]
        %v199 = vld [vmem:[%s194 + $0x8] sm:$0xff]
        %v200 = vld [vmem:[%s194 + $0x10] sm:$0xff]
        %v201 = vld [vmem:[%s194 + $0x18] sm:$0xff]
        %v202 = vld [vmem:[%s194 + $0x20] sm:$0xff]
        %v203 = vld [vmem:[%s194 + $0x28] sm:$0xff]
        %v204 = vld [vmem:[%s194 + $0x30] sm:$0xff]
        %v205 = vld [vmem:[%s194 + $0x38] sm:$0xff]
        %v206 = vld [vmem:[%s194 + $0x40] sm:$0xff]
        %v207 = vld [vmem:[%s194 + $0x48] sm:$0xff]
        %v208 = vld [vmem:[%s194 + $0x50] sm:$0xf]
        %v209 = vld [vmem:[%s194 + $0x54] sm:$0xff]
        %v210 = vld [vmem:[%s194 + $0x5c] sm:$0xff]
        %v211 = vld [vmem:[%s194 + $0x64] sm:$0xff]
        %v212 = vld [vmem:[%s194 + $0x6c] sm:$0xff]
        %v213 = vld [vmem:[%s194 + $0x74] sm:$0xff]
        %v214 = vld [vmem:[%s194 + $0x7c] sm:$0xff]
        %v215 = vld [vmem:[%s194 + $0x84] sm:$0xff]
        %v216 = vld [vmem:[%s194 + $0x8c] sm:$0xff]
        %v217 = vld [vmem:[%s194 + $0x94] sm:$0xff]
        %v218 = vld [vmem:[%s194 + $0x9c] sm:$0xff]
        %v219 = vld [vmem:[%s194 + $0xa4] sm:$0xf]
        %v220 = vld [vmem:[%s163] sm:$0xf]
        %v221 = vld [vmem:[%s163 + $0x4] sm:$0xf]
        %v222 = vld [vmem:[%s163 + $0x8] sm:$0xf]
        %v223 = vld [vmem:[%s163 + $0xc] sm:$0xf]
        %v224 = vld [vmem:[%s163 + $0x10] sm:$0xf]
        %v225 = vld [vmem:[%s163 + $0x14] sm:$0xf]
        %v226 = vld [vmem:[%s163 + $0x18] sm:$0xf]
        %v227 = vld [vmem:[%s163 + $0x1c] sm:$0xf]
        %v228 = vld [vmem:[%s163 + $0x20] sm:$0xf]
        %v229 = vld [vmem:[%s163 + $0x24] sm:$0xf]
        %v230 = vld [vmem:[%s163 + $0x28] sm:$0xf]
        %v231 = vld [vmem:[%s163 + $0x2c] sm:$0xf]
        %v232 = vld [vmem:[%s163 + $0x30] sm:$0xf]
        %v233 = vld [vmem:[%s163 + $0x34] sm:$0xf]
        %v234 = vld [vmem:[%s163 + $0x38] sm:$0xf]
        %v235 = vld [vmem:[%s163 + $0x3c] sm:$0xf]
        %v236 = vld [vmem:[%s163 + $0x40] sm:$0xf]
        %v237 = vld [vmem:[%s163 + $0x44] sm:$0xf]
        %v238 = vld [vmem:[%s163 + $0x48] sm:$0xf]
        %v239 = vld [vmem:[%s163 + $0x4c] sm:$0xf]
        %v240 = vld [vmem:[%s163 + $0x50] sm:$0xf]
        %v241 = vld [vmem:[%s163 + $0x54] sm:$0xf]
        %v242 = vld [vmem:[%s163 + $0x58] sm:$0xf]
        %v243 = vld [vmem:[%s163 + $0x5c] sm:$0xf]
        %v244 = vld [vmem:[%s163 + $0x60] sm:$0xf]
        %v245 = vld [vmem:[%s163 + $0x64] sm:$0xf]
        %v246 = vld [vmem:[%s163 + $0x68] sm:$0xf]
        %v247 = vld [vmem:[%s163 + $0x6c] sm:$0xf]
        %v248 = vld [vmem:[%s163 + $0x70] sm:$0xf]
        %v249 = vld [vmem:[%s163 + $0x74] sm:$0xf]
        %v250 = vld [vmem:[%s163 + $0x78] sm:$0xf]
        %v251 = vld [vmem:[%s163 + $0x7c] sm:$0xf]
        %v252 = vld [vmem:[%s163 + $0x80] sm:$0xf]
        %v253 = vld [vmem:[%s163 + $0x84] sm:$0xf]
        %v254 = vld [vmem:[%s163 + $0x88] sm:$0xf]
        %v255 = vld [vmem:[%s163 + $0x8c] sm:$0xf]
        %v256 = vld [vmem:[%s163 + $0x90] sm:$0xf]
        %v257 = vld [vmem:[%s163 + $0x94] sm:$0xf]
        %v258 = vld [vmem:[%s163 + $0x98] sm:$0xf]
        %v259 = vld [vmem:[%s163 + $0x9c] sm:$0xf]
        %v260 = vld [vmem:[%s163 + $0xa0] sm:$0xf]
        %v261 = vld [vmem:[%s163 + $0xa4] sm:$0xf]
        %v262 = vld [vmem:[%s163 + $0xa8] sm:$0xf]
        %v263 = vld [vmem:[%s163 + $0xac] sm:$0xf]
        %v264 = vld [vmem:[%s163 + $0xb0] sm:$0xf]
        %v265 = vld [vmem:[%s163 + $0xb4] sm:$0xf]
        %v266 = vld [vmem:[%s163 + $0xb8] sm:$0xf]
        %v267 = vld [vmem:[%s163 + $0xbc] sm:$0xf]
        %v268 = vld [vmem:[%s163 + $0xc0] sm:$0xf]
        %v269 = vld [vmem:[%s163 + $0xc4] sm:$0xf]
        %v270 = vld [vmem:[%s163 + $0xc8] sm:$0xf]
        %v271 = vld [vmem:[%s163 + $0xcc] sm:$0xf]
        %v272 = vld [vmem:[%s163 + $0xd0] sm:$0xf]
        %v273 = vld [vmem:[%s163 + $0xd4] sm:$0xf]
        %v274 = vld [vmem:[%s163 + $0xd8] sm:$0xf]
        %v275 = vld [vmem:[%s163 + $0xdc] sm:$0xf]
        %v276 = vld [vmem:[%s163 + $0xe0] sm:$0xf]
        %v277 = vld [vmem:[%s163 + $0xe4] sm:$0xf]
        %v278 = vld [vmem:[%s163 + $0xe8] sm:$0xf]
        %v279 = vld [vmem:[%s163 + $0xec] sm:$0xf]
        %v280 = vld [vmem:[%s163 + $0xf0] sm:$0xf]
        %v281 = vld [vmem:[%s163 + $0xf4] sm:$0xf]
        %v282 = vld [vmem:[%s163 + $0xf8] sm:$0xf]
        %v283 = vld [vmem:[%s163 + $0xfc] sm:$0xf]
        %v284 = vld [vmem:[%s163 + $0x100] sm:$0xf]
        %v285 = vld [vmem:[%s163 + $0x104] sm:$0xf]
        %v286 = vld [vmem:[%s163 + $0x108] sm:$0xf]
        %v287 = vld [vmem:[%s163 + $0x10c] sm:$0xf]
        %v288 = vld [vmem:[%s163 + $0x110] sm:$0xf]
        %v289 = vld [vmem:[%s163 + $0x114] sm:$0xf]
        %v290 = vld [vmem:[%s163 + $0x118] sm:$0xf]
        %v291 = vld [vmem:[%s163 + $0x11c] sm:$0xf]
        %v292 = vld [vmem:[%s163 + $0x120] sm:$0xf]
        %v293 = vld [vmem:[%s163 + $0x124] sm:$0xf]
        %v294 = vld [vmem:[%s163 + $0x128] sm:$0xf]
        %v295 = vld [vmem:[%s163 + $0x12c] sm:$0xf]
        %v296 = vld [vmem:[%s163 + $0x130] sm:$0xf]
        %v297 = vld [vmem:[%s163 + $0x134] sm:$0xf]
        %v298 = vld [vmem:[%s163 + $0x138] sm:$0xf]
        %v299 = vld [vmem:[%s163 + $0x13c] sm:$0xf]
        %v300 = vld [vmem:[%s163 + $0x140] sm:$0xf]
        %v301 = vld [vmem:[%s163 + $0x144] sm:$0xf]
        %v302 = vld [vmem:[%s163 + $0x148] sm:$0xf]
        %v303 = vld [vmem:[%s163 + $0x14c] sm:$0xf]
        %v304 = vld [vmem:[%s163 + $0x150] sm:$0xf]
        %v305 = vld [vmem:[%s163 + $0x154] sm:$0xf]
        %v306 = vld [vmem:[%s163 + $0x158] sm:$0xf]
        %v307 = vld [vmem:[%s163 + $0x15c] sm:$0xf]
        %v308 = vld [vmem:[%s163 + $0x160] sm:$0xf]
        %v309 = vld [vmem:[%s163 + $0x164] sm:$0xf]
        %v310 = vld [vmem:[%s163 + $0x168] sm:$0xf]
        %v311 = vld [vmem:[%s163 + $0x16c] sm:$0xf]
        %v312 = vld [vmem:[%s163 + $0x170] sm:$0xf]
        %v313 = vld [vmem:[%s163 + $0x174] sm:$0xf]
        %v314 = vld [vmem:[%s163 + $0x178] sm:$0xf]
        %v315 = vld [vmem:[%s163 + $0x17c] sm:$0xf]
        %v316 = vld [vmem:[%s163 + $0x180] sm:$0xf]
        %v317 = vld [vmem:[%s163 + $0x184] sm:$0xf]
        %v318 = vld [vmem:[%s163 + $0x188] sm:$0xf]
        %v319 = vld [vmem:[%s163 + $0x18c] sm:$0xf]
        %v320 = vld [vmem:[%s163 + $0x190] sm:$0xf]
        %v321 = vld [vmem:[%s163 + $0x194] sm:$0xf]
        %v322 = vld [vmem:[%s163 + $0x198] sm:$0xf]
        %v323 = vld [vmem:[%s163 + $0x19c] sm:$0xf]
        %v324 = vld [vmem:[%s163 + $0x1a0] sm:$0xf]
        %v325 = vld [vmem:[%s163 + $0x1a4] sm:$0xf]
        %v326 = vld [vmem:[%s163 + $0x1a8] sm:$0xf]
        %v327 = vld [vmem:[%s163 + $0x1ac] sm:$0xf]
        %v328 = vld [vmem:[%s163 + $0x1b0] sm:$0xf]
        %v329 = vld [vmem:[%s163 + $0x1b4] sm:$0xf]
        %v330 = vld [vmem:[%s163 + $0x1b8] sm:$0xf]
        %v331 = vld [vmem:[%s163 + $0x1bc] sm:$0xf]
        %v332 = vld [vmem:[%s163 + $0x1c0] sm:$0xf]
        %v333 = vld [vmem:[%s163 + $0x1c4] sm:$0xf]
        %v334 = vld [vmem:[%s163 + $0x1c8] sm:$0xf]
        %v335 = vld [vmem:[%s163 + $0x1cc] sm:$0xf]
        %v336 = vld [vmem:[%s163 + $0x1d0] sm:$0xf]
        %v337 = vld [vmem:[%s163 + $0x1d4] sm:$0xf]
        %v338 = vld [vmem:[%s163 + $0x1d8] sm:$0xf]
        %v339 = vld [vmem:[%s163 + $0x1dc] sm:$0xf]
        %v340 = vld [vmem:[%s163 + $0x1e0] sm:$0xf]
        %v341 = vld [vmem:[%s163 + $0x1e4] sm:$0xf]
        %v342 = vld [vmem:[%s163 + $0x1e8] sm:$0xf]
        %v343 = vld [vmem:[%s163 + $0x1ec] sm:$0xf]
        %v344 = vld [vmem:[%s163 + $0x1f0] sm:$0xf]
        %v345 = vld [vmem:[%s163 + $0x1f4] sm:$0xf]
        %v346 = vld [vmem:[%s163 + $0x1f8] sm:$0xf]
        %v347 = vld [vmem:[%s163 + $0x1fc] sm:$0xf]
        %v348 = vld [vmem:[%s163 + $0x200] sm:$0xf]
        %v349 = vld [vmem:[%s163 + $0x204] sm:$0xf]
        %v350 = vld [vmem:[%s163 + $0x208] sm:$0xf]
        %v351 = vld [vmem:[%s163 + $0x20c] sm:$0xf]
        %v352 = vld [vmem:[%s163 + $0x210] sm:$0xf]
        %v353 = vld [vmem:[%s163 + $0x214] sm:$0xf]
        %v354 = vld [vmem:[%s163 + $0x218] sm:$0xf]
        %v355 = vld [vmem:[%s163 + $0x21c] sm:$0xf]
        %v356 = vld [vmem:[%s163 + $0x220] sm:$0xf]
        %v357 = vld [vmem:[%s163 + $0x224] sm:$0xf]
        %v358 = vld [vmem:[%s163 + $0x228] sm:$0xf]
        %v359 = vld [vmem:[%s163 + $0x22c] sm:$0xf]
        %v360 = vld [vmem:[%s163 + $0x230] sm:$0xf]
        %v361 = vld [vmem:[%s163 + $0x234] sm:$0xf]
        %v362 = vld [vmem:[%s163 + $0x238] sm:$0xf]
        %v363 = vld [vmem:[%s163 + $0x23c] sm:$0xf]
        %v364 = vld [vmem:[%s163 + $0x240] sm:$0xf]
        %v365 = vld [vmem:[%s163 + $0x244] sm:$0xf]
        %v366 = vld [vmem:[%s163 + $0x248] sm:$0xf]
        %v367 = vld [vmem:[%s163 + $0x24c] sm:$0xf]
        %v368 = vld [vmem:[%s163 + $0x250] sm:$0xf]
        %v369 = vld [vmem:[%s163 + $0x254] sm:$0xf]
        %v370 = vld [vmem:[%s163 + $0x258] sm:$0xf]
        %v371 = vld [vmem:[%s163 + $0x25c] sm:$0xf]
        %v372 = vld [vmem:[%s163 + $0x260] sm:$0xf]
        %v373 = vld [vmem:[%s163 + $0x264] sm:$0xf]
        %v374 = vld [vmem:[%s163 + $0x268] sm:$0xf]
        %v375 = vld [vmem:[%s163 + $0x26c] sm:$0xf]
        %v376 = vld [vmem:[%s163 + $0x270] sm:$0xf]
        %v377 = vld [vmem:[%s163 + $0x274] sm:$0xf]
        %v378 = vld [vmem:[%s163 + $0x278] sm:$0xf]
        %v379 = vld [vmem:[%s163 + $0x27c] sm:$0xf]
        %v380 = vld [vmem:[%s163 + $0x280] sm:$0xf]
        %v381 = vld [vmem:[%s163 + $0x284] sm:$0xf]
        %v382 = vld [vmem:[%s163 + $0x288] sm:$0xf]
        %v383 = vld [vmem:[%s163 + $0x28c] sm:$0xf]
        %v384 = vld [vmem:[%s163 + $0x290] sm:$0xf]
        %v385 = vld [vmem:[%s163 + $0x294] sm:$0xf]
        %v386 = vld [vmem:[%s163 + $0x298] sm:$0xf]
        %v387 = vld [vmem:[%s163 + $0x29c] sm:$0xf]
        %v388 = vld [vmem:[%s163 + $0x2a0] sm:$0xf]
        %v389 = vld [vmem:[%s163 + $0x2a4] sm:$0xf]
        %v390 = vld [vmem:[%s163 + $0x2a8] sm:$0xf]
        %v391 = vld [vmem:[%s163 + $0x2ac] sm:$0xf]
        %v392 = vld [vmem:[%s163 + $0x2b0] sm:$0xf]
        %v393 = vld [vmem:[%s163 + $0x2b4] sm:$0xf]
        %v394 = vld [vmem:[%s163 + $0x2b8] sm:$0xf]
        %v395 = vld [vmem:[%s163 + $0x2bc] sm:$0xf]
        %v396 = vld [vmem:[%s163 + $0x2c0] sm:$0xf]
        %v397 = vld [vmem:[%s163 + $0x2c4] sm:$0xf]
        %v398 = vld [vmem:[%s163 + $0x2c8] sm:$0xf]
        %v399 = vld [vmem:[%s163 + $0x2cc] sm:$0xf]
        %v400 = vld [vmem:[%s163 + $0x2d0] sm:$0xf]
        %v401 = vld [vmem:[%s163 + $0x2d4] sm:$0xf]
        %v402 = vld [vmem:[%s163 + $0x2d8] sm:$0xf]
        %v403 = vld [vmem:[%s163 + $0x2dc] sm:$0xf]
        %v404 = vld [vmem:[%s163 + $0x2e0] sm:$0xf]
        %v405 = vld [vmem:[%s163 + $0x2e4] sm:$0xf]
        %v406 = vld [vmem:[%s163 + $0x2e8] sm:$0xf]
        %v407 = vld [vmem:[%s163 + $0x2ec] sm:$0xf]
        %v408 = vld [vmem:[%s163 + $0x2f0] sm:$0xf]
        %v409 = vld [vmem:[%s163 + $0x2f4] sm:$0xf]
        %v410 = vld [vmem:[%s163 + $0x2f8] sm:$0xf]
        %v411 = vld [vmem:[%s163 + $0x2fc] sm:$0xf]
        %v412 = vld [vmem:[%s163 + $0x300] sm:$0xf]
        %v413 = vld [vmem:[%s163 + $0x304] sm:$0xf]
        %v414 = vld [vmem:[%s163 + $0x308] sm:$0xf]
        %v415 = vld [vmem:[%s163 + $0x30c] sm:$0xf]
        %v416 = vld [vmem:[%s163 + $0x310] sm:$0xf]
        %v417 = vld [vmem:[%s163 + $0x314] sm:$0xf]
        %v418 = vld [vmem:[%s163 + $0x318] sm:$0xf]
        %v419 = vld [vmem:[%s163 + $0x31c] sm:$0xf]
        %v420 = vld [vmem:[%s163 + $0x320] sm:$0xf]
        %v421 = vld [vmem:[%s163 + $0x324] sm:$0xf]
        %v422 = vld [vmem:[%s163 + $0x328] sm:$0xf]
        %v423 = vld [vmem:[%s163 + $0x32c] sm:$0xf]
        %v424 = vld [vmem:[%s163 + $0x330] sm:$0xf]
        %v425 = vld [vmem:[%s163 + $0x334] sm:$0xf]
        %v426 = vld [vmem:[%s163 + $0x338] sm:$0xf]
        %v427 = vld [vmem:[%s163 + $0x33c] sm:$0xf]
        %v428 = vld [vmem:[%s163 + $0x340] sm:$0xf]
        %v429 = vld [vmem:[%s163 + $0x344] sm:$0xf]
        %v430 = vld [vmem:[%s163 + $0x348] sm:$0xf]
        %v431 = vld [vmem:[%s163 + $0x34c] sm:$0xf]
        %v432 = vld [vmem:[%s163 + $0x350] sm:$0xf]
        %v433 = vld [vmem:[%s163 + $0x354] sm:$0xf]
        %v434 = vld [vmem:[%s163 + $0x358] sm:$0xf]
        %v435 = vld [vmem:[%s163 + $0x35c] sm:$0xf]
        %v436 = vld [vmem:[%s163 + $0x360] sm:$0xf]
        %v437 = vld [vmem:[%s163 + $0x364] sm:$0xf]
        %v438 = vld [vmem:[%s163 + $0x368] sm:$0xf]
        %v439 = vld [vmem:[%s163 + $0x36c] sm:$0xf]
        %v440 = vld [vmem:[%s163 + $0x370] sm:$0xf]
        %v441 = vld [vmem:[%s163 + $0x374] sm:$0xf]
        %v442 = vld [vmem:[%s163 + $0x378] sm:$0xf]
        %v443 = vld [vmem:[%s163 + $0x37c] sm:$0xf]
        %v444 = vld [vmem:[%s163 + $0x380] sm:$0xf]
        %v445 = vld [vmem:[%s163 + $0x384] sm:$0xf]
        %v446 = vld [vmem:[%s163 + $0x388] sm:$0xf]
        %v447 = vld [vmem:[%s163 + $0x38c] sm:$0xf]
        %v448 = vld [vmem:[%s163 + $0x390] sm:$0xf]
        %v449 = vld [vmem:[%s163 + $0x394] sm:$0xf]
        %v450 = vld [vmem:[%s163 + $0x398] sm:$0xf]
        %v451 = vld [vmem:[%s163 + $0x39c] sm:$0xf]
        %v452 = vld [vmem:[%s163 + $0x3a0] sm:$0xf]
        %v453 = vld [vmem:[%s163 + $0x3a4] sm:$0xf]
        %v454 = vld [vmem:[%s163 + $0x3a8] sm:$0xf]
        %v455 = vld [vmem:[%s163 + $0x3ac] sm:$0xf]
        %v456 = vld [vmem:[%s163 + $0x3b0] sm:$0xf]
        %v457 = vld [vmem:[%s163 + $0x3b4] sm:$0xf]
        %v458 = vld [vmem:[%s163 + $0x3b8] sm:$0xf]
        %v459 = vld [vmem:[%s163 + $0x3bc] sm:$0xf]
        %v460 = vld [vmem:[%s163 + $0x3c0] sm:$0xf]
        %v461 = vld [vmem:[%s163 + $0x3c4] sm:$0xf]
        %v462 = vld [vmem:[%s163 + $0x3c8] sm:$0xf]
        %v463 = vld [vmem:[%s163 + $0x3cc] sm:$0xf]
        %v464 = vld [vmem:[%s163 + $0x3d0] sm:$0xf]
        %v465 = vld [vmem:[%s163 + $0x3d4] sm:$0xf]
        %v466 = vld [vmem:[%s163 + $0x3d8] sm:$0xf]
        %v467 = vld [vmem:[%s163 + $0x3dc] sm:$0xf]
        %v468 = vld [vmem:[%s163 + $0x3e0] sm:$0xf]
        %v469 = vld [vmem:[%s163 + $0x3e4] sm:$0xf]
        %v470 = vld [vmem:[%s163 + $0x3e8] sm:$0xf]
        %v471 = vld [vmem:[%s163 + $0x3ec] sm:$0xf]
        %v472 = vld [vmem:[%s163 + $0x3f0] sm:$0xf]
        %v473 = vld [vmem:[%s163 + $0x3f4] sm:$0xf]
        %v474 = vld [vmem:[%s163 + $0x3f8] sm:$0xf]
        %v475 = vld [vmem:[%s163 + $0x3fc] sm:$0xf]
        %v476 = vld [vmem:[%s163 + $0x400] sm:$0xf]
        %v477 = vld [vmem:[%s163 + $0x404] sm:$0xf]
        %v478 = vld [vmem:[%s163 + $0x408] sm:$0xf]
        %v479 = vld [vmem:[%s163 + $0x40c] sm:$0xf]
        %v480 = vld [vmem:[%s163 + $0x410] sm:$0xf]
        %v481 = vld [vmem:[%s163 + $0x414] sm:$0xf]
        %v482 = vld [vmem:[%s163 + $0x418] sm:$0xf]
        %v483 = vld [vmem:[%s163 + $0x41c] sm:$0xf]
        %v484 = vld [vmem:[%s163 + $0x420] sm:$0xf]
        %v485 = vld [vmem:[%s163 + $0x424] sm:$0xf]
        %v486 = vld [vmem:[%s163 + $0x428] sm:$0xf]
        %v487 = vld [vmem:[%s163 + $0x42c] sm:$0xf]
        %v488 = vld [vmem:[%s163 + $0x430] sm:$0xf]
        %v489 = vld [vmem:[%s163 + $0x434] sm:$0xf]
        %v490 = vld [vmem:[%s163 + $0x438] sm:$0xf]
        %v491 = vld [vmem:[%s163 + $0x43c] sm:$0xf]
        %v492 = vld [vmem:[%s163 + $0x440] sm:$0xf]
        %v493 = vld [vmem:[%s163 + $0x444] sm:$0xf]
        %v494 = vld [vmem:[%s163 + $0x448] sm:$0xf]
        %v495 = vld [vmem:[%s163 + $0x44c] sm:$0xf]
        %v496 = vld [vmem:[%s163 + $0x450] sm:$0xf]
        %v497 = vld [vmem:[%s163 + $0x454] sm:$0xf]
        %v498 = vld [vmem:[%s163 + $0x458] sm:$0xf]
        %v499 = vld [vmem:[%s163 + $0x45c] sm:$0xf]
        %v500 = vld [vmem:[%s163 + $0x460] sm:$0xf]
        %v501 = vld [vmem:[%s163 + $0x464] sm:$0xf]
        %v502 = vld [vmem:[%s163 + $0x468] sm:$0xf]
        %v503 = vld [vmem:[%s163 + $0x46c] sm:$0xf]
        %v504 = vld [vmem:[%s163 + $0x470] sm:$0xf]
        %v505 = vld [vmem:[%s163 + $0x474] sm:$0xf]
        %v506 = vld [vmem:[%s163 + $0x478] sm:$0xf]
        %v507 = vld [vmem:[%s163 + $0x47c] sm:$0xf]
        %v508 = vld [vmem:[%s163 + $0x480] sm:$0xf]
        %v509 = vld [vmem:[%s163 + $0x484] sm:$0xf]
        %v510 = vld [vmem:[%s163 + $0x488] sm:$0xf]
        %v511 = vld [vmem:[%s163 + $0x48c] sm:$0xf]
        %v512 = vld [vmem:[%s163 + $0x490] sm:$0xf]
        %v513 = vld [vmem:[%s163 + $0x494] sm:$0xf]
        %v514 = vld [vmem:[%s163 + $0x498] sm:$0xf]
        %v515 = vld [vmem:[%s163 + $0x49c] sm:$0xf]
        %v516 = vld [vmem:[%s163 + $0x4a0] sm:$0xf]
        %v517 = vld [vmem:[%s163 + $0x4a4] sm:$0xf]
        %v518 = vld [vmem:[%s163 + $0x4a8] sm:$0xf]
        %v519 = vld [vmem:[%s163 + $0x4ac] sm:$0xf]
        %v520 = vld [vmem:[%s163 + $0x4b0] sm:$0xf]
        %v521 = vld [vmem:[%s163 + $0x4b4] sm:$0xf]
        %v522 = vld [vmem:[%s163 + $0x4b8] sm:$0xf]
        %v523 = vld [vmem:[%s163 + $0x4bc] sm:$0xf]
        %v524 = vld [vmem:[%s163 + $0x4c0] sm:$0xf]
        %v525 = vld [vmem:[%s163 + $0x4c4] sm:$0xf]
        %v526 = vld [vmem:[%s163 + $0x4c8] sm:$0xf]
        %v527 = vld [vmem:[%s163 + $0x4cc] sm:$0xf]
        %v528 = vld [vmem:[%s163 + $0x4d0] sm:$0xf]
        %v529 = vld [vmem:[%s163 + $0x4d4] sm:$0xf]
        %v530 = vld [vmem:[%s163 + $0x4d8] sm:$0xf]
        %v531 = vld [vmem:[%s163 + $0x4dc] sm:$0xf]
        %v532 = vld [vmem:[%s163 + $0x4e0] sm:$0xf]
        %v533 = vld [vmem:[%s163 + $0x4e4] sm:$0xf]
        %v534 = vld [vmem:[%s163 + $0x4e8] sm:$0xf]
        %v535 = vld [vmem:[%s163 + $0x4ec] sm:$0xf]
        %v536 = vld [vmem:[%s163 + $0x4f0] sm:$0xf]
        %v537 = vld [vmem:[%s163 + $0x4f4] sm:$0xf]
        %v538 = vld [vmem:[%s163 + $0x4f8] sm:$0xf]
        %v539 = vld [vmem:[%s163 + $0x4fc] sm:$0xf]
        %v540 = vld [vmem:[%s163 + $0x500] sm:$0xf]
        %v541 = vld [vmem:[%s163 + $0x504] sm:$0xf]
        %v542 = vld [vmem:[%s163 + $0x508] sm:$0xf]
        %v543 = vld [vmem:[%s163 + $0x50c] sm:$0xf]
        %v544 = vld [vmem:[%s163 + $0x510] sm:$0xf]
        %v545 = vld [vmem:[%s163 + $0x514] sm:$0xf]
        %v546 = vld [vmem:[%s163 + $0x518] sm:$0xf]
        %v547 = vld [vmem:[%s163 + $0x51c] sm:$0xf]
        %v548 = vld [vmem:[%s163 + $0x520] sm:$0xf]
        %v549 = vld [vmem:[%s163 + $0x524] sm:$0xf]
        %v550 = vld [vmem:[%s163 + $0x528] sm:$0xf]
        %v551 = vld [vmem:[%s163 + $0x52c] sm:$0xf]
        %v552 = vld [vmem:[%s163 + $0x530] sm:$0xf]
        %v553 = vld [vmem:[%s163 + $0x534] sm:$0xf]
        %v554 = vld [vmem:[%s163 + $0x538] sm:$0xf]
        %v555 = vld [vmem:[%s163 + $0x53c] sm:$0xf]
        %v578 = vunpack.c.l.b16 %v198
        %v579 = vunpack.c.h.b16 %v198
        %v580 = vunpack.c.l.b16 %v199
        %v581 = vunpack.c.h.b16 %v199
        %v582 = vunpack.c.l.b16 %v200
        %v583 = vunpack.c.h.b16 %v200
        %v584 = vunpack.c.l.b16 %v201
        %v585 = vunpack.c.h.b16 %v201
        %v586 = vunpack.c.l.b16 %v202
        %v587 = vunpack.c.h.b16 %v202
        %v588 = vunpack.c.l.b16 %v203
        %v589 = vunpack.c.h.b16 %v203
        %v590 = vunpack.c.l.b16 %v204
        %v591 = vunpack.c.h.b16 %v204
        %v592 = vunpack.c.l.b16 %v205
        %v593 = vunpack.c.h.b16 %v205
        %v594 = vunpack.c.l.b16 %v206
        %v595 = vunpack.c.h.b16 %v206
        %v596 = vunpack.c.l.b16 %v207
        %v597 = vunpack.c.h.b16 %v207
        %v598 = vunpack.c.l.b16 %v208
        %v599 = vunpack.c.l.b16 %v209
        %v600 = vunpack.c.h.b16 %v209
        %v601 = vunpack.c.l.b16 %v210
        %v602 = vunpack.c.h.b16 %v210
        %v603 = vunpack.c.l.b16 %v211
        %v604 = vunpack.c.h.b16 %v211
        %v605 = vunpack.c.l.b16 %v212
        %v606 = vunpack.c.h.b16 %v212
        %v607 = vunpack.c.l.b16 %v213
        %v608 = vunpack.c.h.b16 %v213
        %v609 = vunpack.c.l.b16 %v214
        %v610 = vunpack.c.h.b16 %v214
        %v611 = vunpack.c.l.b16 %v215
        %v612 = vunpack.c.h.b16 %v215
        %v613 = vunpack.c.l.b16 %v216
        %v614 = vunpack.c.h.b16 %v216
        %v615 = vunpack.c.l.b16 %v217
        %v616 = vunpack.c.h.b16 %v217
        %v617 = vunpack.c.l.b16 %v218
        %v618 = vunpack.c.h.b16 %v218
        %v619 = vunpack.c.l.b16 %v219
        %v620 = vpack.c.b16 %v599, %v578
        %v621 = vpack.c.b16 %v600, %v579
        %v622 = vpack.c.b16 %v601, %v580
        %v623 = vpack.c.b16 %v602, %v581
        %v624 = vpack.c.b16 %v603, %v582
        %v625 = vpack.c.b16 %v604, %v583
        %v626 = vpack.c.b16 %v605, %v584
        %v627 = vpack.c.b16 %v606, %v585
        %v628 = vpack.c.b16 %v607, %v586
        %v629 = vpack.c.b16 %v608, %v587
        %v630 = vpack.c.b16 %v609, %v588
        %v631 = vpack.c.b16 %v610, %v589
        %v632 = vpack.c.b16 %v611, %v590
        %v633 = vpack.c.b16 %v612, %v591
        %v634 = vpack.c.b16 %v613, %v592
        %v635 = vpack.c.b16 %v614, %v593
        %v636 = vpack.c.b16 %v615, %v594
        %v637 = vpack.c.b16 %v616, %v595
        %v638 = vpack.c.b16 %v617, %v596
        %v639 = vpack.c.b16 %v618, %v597
        %v640 = vpack.c.b16 %v619, %v598
        %v998 = vunpack.c.l.b16 %v220
        %v999 = vunpack.c.l.b16 %v221
        %v1000 = vunpack.c.l.b16 %v222
        %v1001 = vunpack.c.l.b16 %v223
        %v1002 = vunpack.c.l.b16 %v224
        %v1003 = vunpack.c.l.b16 %v225
        %v1004 = vunpack.c.l.b16 %v226
        %v1005 = vunpack.c.l.b16 %v227
        %v1006 = vunpack.c.l.b16 %v228
        %v1007 = vunpack.c.l.b16 %v229
        %v1008 = vunpack.c.l.b16 %v230
        %v1009 = vunpack.c.l.b16 %v231
        %v1010 = vunpack.c.l.b16 %v232
        %v1011 = vunpack.c.l.b16 %v233
        %v1012 = vunpack.c.l.b16 %v234
        %v1013 = vunpack.c.l.b16 %v235
        %v1014 = vunpack.c.l.b16 %v236
        %v1015 = vunpack.c.l.b16 %v237
        %v1016 = vunpack.c.l.b16 %v238
        %v1017 = vunpack.c.l.b16 %v239
        %v1018 = vunpack.c.l.b16 %v240
        %v1019 = vunpack.c.l.b16 %v241
        %v1020 = vunpack.c.l.b16 %v242
        %v1021 = vunpack.c.l.b16 %v243
        %v1022 = vunpack.c.l.b16 %v244
        %v1023 = vunpack.c.l.b16 %v245
        %v1024 = vunpack.c.l.b16 %v246
        %v1025 = vunpack.c.l.b16 %v247
        %v1026 = vunpack.c.l.b16 %v248
        %v1027 = vunpack.c.l.b16 %v249
        %v1028 = vunpack.c.l.b16 %v250
        %v1029 = vunpack.c.l.b16 %v251
        %v1030 = vunpack.c.l.b16 %v252
        %v1031 = vunpack.c.l.b16 %v253
        %v1032 = vunpack.c.l.b16 %v254
        %v1033 = vunpack.c.l.b16 %v255
        %v1034 = vunpack.c.l.b16 %v256
        %v1035 = vunpack.c.l.b16 %v257
        %v1036 = vunpack.c.l.b16 %v258
        %v1037 = vunpack.c.l.b16 %v259
        %v1038 = vunpack.c.l.b16 %v260
        %v1039 = vunpack.c.l.b16 %v261
        %v1040 = vunpack.c.l.b16 %v262
        %v1041 = vunpack.c.l.b16 %v263
        %v1042 = vunpack.c.l.b16 %v264
        %v1043 = vunpack.c.l.b16 %v265
        %v1044 = vunpack.c.l.b16 %v266
        %v1045 = vunpack.c.l.b16 %v267
        %v1046 = vunpack.c.l.b16 %v268
        %v1047 = vunpack.c.l.b16 %v269
        %v1048 = vunpack.c.l.b16 %v270
        %v1049 = vunpack.c.l.b16 %v271
        %v1050 = vunpack.c.l.b16 %v272
        %v1051 = vunpack.c.l.b16 %v273
        %v1052 = vunpack.c.l.b16 %v274
        %v1053 = vunpack.c.l.b16 %v275
        %v1054 = vunpack.c.l.b16 %v276
        %v1055 = vunpack.c.l.b16 %v277
        %v1056 = vunpack.c.l.b16 %v278
        %v1057 = vunpack.c.l.b16 %v279
        %v1058 = vunpack.c.l.b16 %v280
        %v1059 = vunpack.c.l.b16 %v281
        %v1060 = vunpack.c.l.b16 %v282
        %v1061 = vunpack.c.l.b16 %v283
        %v1062 = vunpack.c.l.b16 %v284
        %v1063 = vunpack.c.l.b16 %v285
        %v1064 = vunpack.c.l.b16 %v286
        %v1065 = vunpack.c.l.b16 %v287
        %v1066 = vunpack.c.l.b16 %v288
        %v1067 = vunpack.c.l.b16 %v289
        %v1068 = vunpack.c.l.b16 %v290
        %v1069 = vunpack.c.l.b16 %v291
        %v1070 = vunpack.c.l.b16 %v292
        %v1071 = vunpack.c.l.b16 %v293
        %v1072 = vunpack.c.l.b16 %v294
        %v1073 = vunpack.c.l.b16 %v295
        %v1074 = vunpack.c.l.b16 %v296
        %v1075 = vunpack.c.l.b16 %v297
        %v1076 = vunpack.c.l.b16 %v298
        %v1077 = vunpack.c.l.b16 %v299
        %v1078 = vunpack.c.l.b16 %v300
        %v1079 = vunpack.c.l.b16 %v301
        %v1080 = vunpack.c.l.b16 %v302
        %v1081 = vunpack.c.l.b16 %v303
        %v1082 = vunpack.c.l.b16 %v304
        %v1083 = vunpack.c.l.b16 %v305
        %v1084 = vunpack.c.l.b16 %v306
        %v1085 = vunpack.c.l.b16 %v307
        %v1086 = vunpack.c.l.b16 %v308
        %v1087 = vunpack.c.l.b16 %v309
        %v1088 = vunpack.c.l.b16 %v310
        %v1089 = vunpack.c.l.b16 %v311
        %v1090 = vunpack.c.l.b16 %v312
        %v1091 = vunpack.c.l.b16 %v313
        %v1092 = vunpack.c.l.b16 %v314
        %v1093 = vunpack.c.l.b16 %v315
        %v1094 = vunpack.c.l.b16 %v316
        %v1095 = vunpack.c.l.b16 %v317
        %v1096 = vunpack.c.l.b16 %v318
        %v1097 = vunpack.c.l.b16 %v319
        %v1098 = vunpack.c.l.b16 %v320
        %v1099 = vunpack.c.l.b16 %v321
        %v1100 = vunpack.c.l.b16 %v322
        %v1101 = vunpack.c.l.b16 %v323
        %v1102 = vunpack.c.l.b16 %v324
        %v1103 = vunpack.c.l.b16 %v325
        %v1104 = vunpack.c.l.b16 %v326
        %v1105 = vunpack.c.l.b16 %v327
        %v1106 = vunpack.c.l.b16 %v328
        %v1107 = vunpack.c.l.b16 %v329
        %v1108 = vunpack.c.l.b16 %v330
        %v1109 = vunpack.c.l.b16 %v331
        %v1110 = vunpack.c.l.b16 %v332
        %v1111 = vunpack.c.l.b16 %v333
        %v1112 = vunpack.c.l.b16 %v334
        %v1113 = vunpack.c.l.b16 %v335
        %v1114 = vunpack.c.l.b16 %v336
        %v1115 = vunpack.c.l.b16 %v337
        %v1116 = vunpack.c.l.b16 %v338
        %v1117 = vunpack.c.l.b16 %v339
        %v1118 = vunpack.c.l.b16 %v340
        %v1119 = vunpack.c.l.b16 %v341
        %v1120 = vunpack.c.l.b16 %v342
        %v1121 = vunpack.c.l.b16 %v343
        %v1122 = vunpack.c.l.b16 %v344
        %v1123 = vunpack.c.l.b16 %v345
        %v1124 = vunpack.c.l.b16 %v346
        %v1125 = vunpack.c.l.b16 %v347
        %v1126 = vunpack.c.l.b16 %v348
        %v1127 = vunpack.c.l.b16 %v349
        %v1128 = vunpack.c.l.b16 %v350
        %v1129 = vunpack.c.l.b16 %v351
        %v1130 = vunpack.c.l.b16 %v352
        %v1131 = vunpack.c.l.b16 %v353
        %v1132 = vunpack.c.l.b16 %v354
        %v1133 = vunpack.c.l.b16 %v355
        %v1134 = vunpack.c.l.b16 %v356
        %v1135 = vunpack.c.l.b16 %v357
        %v1136 = vunpack.c.l.b16 %v358
        %v1137 = vunpack.c.l.b16 %v359
        %v1138 = vunpack.c.l.b16 %v360
        %v1139 = vunpack.c.l.b16 %v361
        %v1140 = vunpack.c.l.b16 %v362
        %v1141 = vunpack.c.l.b16 %v363
        %v1142 = vunpack.c.l.b16 %v364
        %v1143 = vunpack.c.l.b16 %v365
        %v1144 = vunpack.c.l.b16 %v366
        %v1145 = vunpack.c.l.b16 %v367
        %v1146 = vunpack.c.l.b16 %v368
        %v1147 = vunpack.c.l.b16 %v369
        %v1148 = vunpack.c.l.b16 %v370
        %v1149 = vunpack.c.l.b16 %v371
        %v1150 = vunpack.c.l.b16 %v372
        %v1151 = vunpack.c.l.b16 %v373
        %v1152 = vunpack.c.l.b16 %v374
        %v1153 = vunpack.c.l.b16 %v375
        %v1154 = vunpack.c.l.b16 %v376
        %v1155 = vunpack.c.l.b16 %v377
        %v1156 = vunpack.c.l.b16 %v378
        %v1157 = vunpack.c.l.b16 %v379
        %v1158 = vunpack.c.l.b16 %v380
        %v1159 = vunpack.c.l.b16 %v381
        %v1160 = vunpack.c.l.b16 %v382
        %v1161 = vunpack.c.l.b16 %v383
        %v1162 = vunpack.c.l.b16 %v384
        %v1163 = vunpack.c.l.b16 %v385
        %v1164 = vunpack.c.l.b16 %v386
        %v1165 = vunpack.c.l.b16 %v387
        %v1166 = vunpack.c.l.b16 %v388
        %v1167 = vunpack.c.l.b16 %v389
        %v1168 = vunpack.c.l.b16 %v390
        %v1169 = vunpack.c.l.b16 %v391
        %v1170 = vunpack.c.l.b16 %v392
        %v1171 = vunpack.c.l.b16 %v393
        %v1172 = vunpack.c.l.b16 %v394
        %v1173 = vunpack.c.l.b16 %v395
        %v1174 = vunpack.c.l.b16 %v396
        %v1175 = vunpack.c.l.b16 %v397
        %v1176 = vunpack.c.l.b16 %v398
        %v1177 = vunpack.c.l.b16 %v399
        %v1178 = vunpack.c.l.b16 %v400
        %v1179 = vunpack.c.l.b16 %v401
        %v1180 = vunpack.c.l.b16 %v402
        %v1181 = vunpack.c.l.b16 %v403
        %v1182 = vunpack.c.l.b16 %v404
        %v1183 = vunpack.c.l.b16 %v405
        %v1184 = vunpack.c.l.b16 %v406
        %v1185 = vunpack.c.l.b16 %v407
        %v1186 = vunpack.c.l.b16 %v408
        %v1187 = vunpack.c.l.b16 %v409
        %v1188 = vunpack.c.l.b16 %v410
        %v1189 = vunpack.c.l.b16 %v411
        %v1190 = vunpack.c.l.b16 %v412
        %v1191 = vunpack.c.l.b16 %v413
        %v1192 = vunpack.c.l.b16 %v414
        %v1193 = vunpack.c.l.b16 %v415
        %v1194 = vunpack.c.l.b16 %v416
        %v1195 = vunpack.c.l.b16 %v417
        %v1196 = vunpack.c.l.b16 %v418
        %v1197 = vunpack.c.l.b16 %v419
        %v1198 = vunpack.c.l.b16 %v420
        %v1199 = vunpack.c.l.b16 %v421
        %v1200 = vunpack.c.l.b16 %v422
        %v1201 = vunpack.c.l.b16 %v423
        %v1202 = vunpack.c.l.b16 %v424
        %v1203 = vunpack.c.l.b16 %v425
        %v1204 = vunpack.c.l.b16 %v426
        %v1205 = vunpack.c.l.b16 %v427
        %v1206 = vunpack.c.l.b16 %v428
        %v1207 = vunpack.c.l.b16 %v429
        %v1208 = vunpack.c.l.b16 %v430
        %v1209 = vunpack.c.l.b16 %v431
        %v1210 = vunpack.c.l.b16 %v432
        %v1211 = vunpack.c.l.b16 %v433
        %v1212 = vunpack.c.l.b16 %v434
        %v1213 = vunpack.c.l.b16 %v435
        %v1214 = vunpack.c.l.b16 %v436
        %v1215 = vunpack.c.l.b16 %v437
        %v1216 = vunpack.c.l.b16 %v438
        %v1217 = vunpack.c.l.b16 %v439
        %v1218 = vunpack.c.l.b16 %v440
        %v1219 = vunpack.c.l.b16 %v441
        %v1220 = vunpack.c.l.b16 %v442
        %v1221 = vunpack.c.l.b16 %v443
        %v1222 = vunpack.c.l.b16 %v444
        %v1223 = vunpack.c.l.b16 %v445
        %v1224 = vunpack.c.l.b16 %v446
        %v1225 = vunpack.c.l.b16 %v447
        %v1226 = vunpack.c.l.b16 %v448
        %v1227 = vunpack.c.l.b16 %v449
        %v1228 = vunpack.c.l.b16 %v450
        %v1229 = vunpack.c.l.b16 %v451
        %v1230 = vunpack.c.l.b16 %v452
        %v1231 = vunpack.c.l.b16 %v453
        %v1232 = vunpack.c.l.b16 %v454
        %v1233 = vunpack.c.l.b16 %v455
        %v1234 = vunpack.c.l.b16 %v456
        %v1235 = vunpack.c.l.b16 %v457
        %v1236 = vunpack.c.l.b16 %v458
        %v1237 = vunpack.c.l.b16 %v459
        %v1238 = vunpack.c.l.b16 %v460
        %v1239 = vunpack.c.l.b16 %v461
        %v1240 = vunpack.c.l.b16 %v462
        %v1241 = vunpack.c.l.b16 %v463
        %v1242 = vunpack.c.l.b16 %v464
        %v1243 = vunpack.c.l.b16 %v465
        %v1244 = vunpack.c.l.b16 %v466
        %v1245 = vunpack.c.l.b16 %v467
        %v1246 = vunpack.c.l.b16 %v468
        %v1247 = vunpack.c.l.b16 %v469
        %v1248 = vunpack.c.l.b16 %v470
        %v1249 = vunpack.c.l.b16 %v471
        %v1250 = vunpack.c.l.b16 %v472
        %v1251 = vunpack.c.l.b16 %v473
        %v1252 = vunpack.c.l.b16 %v474
        %v1253 = vunpack.c.l.b16 %v475
        %v1254 = vunpack.c.l.b16 %v476
        %v1255 = vunpack.c.l.b16 %v477
        %v1256 = vunpack.c.l.b16 %v478
        %v1257 = vunpack.c.l.b16 %v479
        %v1258 = vunpack.c.l.b16 %v480
        %v1259 = vunpack.c.l.b16 %v481
        %v1260 = vunpack.c.l.b16 %v482
        %v1261 = vunpack.c.l.b16 %v483
        %v1262 = vunpack.c.l.b16 %v484
        %v1263 = vunpack.c.l.b16 %v485
        %v1264 = vunpack.c.l.b16 %v486
        %v1265 = vunpack.c.l.b16 %v487
        %v1266 = vunpack.c.l.b16 %v488
        %v1267 = vunpack.c.l.b16 %v489
        %v1268 = vunpack.c.l.b16 %v490
        %v1269 = vunpack.c.l.b16 %v491
        %v1270 = vunpack.c.l.b16 %v492
        %v1271 = vunpack.c.l.b16 %v493
        %v1272 = vunpack.c.l.b16 %v494
        %v1273 = vunpack.c.l.b16 %v495
        %v1274 = vunpack.c.l.b16 %v496
        %v1275 = vunpack.c.l.b16 %v497
        %v1276 = vunpack.c.l.b16 %v498
        %v1277 = vunpack.c.l.b16 %v499
        %v1278 = vunpack.c.l.b16 %v500
        %v1279 = vunpack.c.l.b16 %v501
        %v1280 = vunpack.c.l.b16 %v502
        %v1281 = vunpack.c.l.b16 %v503
        %v1282 = vunpack.c.l.b16 %v504
        %v1283 = vunpack.c.l.b16 %v505
        %v1284 = vunpack.c.l.b16 %v506
        %v1285 = vunpack.c.l.b16 %v507
        %v1286 = vunpack.c.l.b16 %v508
        %v1287 = vunpack.c.l.b16 %v509
        %v1288 = vunpack.c.l.b16 %v510
        %v1289 = vunpack.c.l.b16 %v511
        %v1290 = vunpack.c.l.b16 %v512
        %v1291 = vunpack.c.l.b16 %v513
        %v1292 = vunpack.c.l.b16 %v514
        %v1293 = vunpack.c.l.b16 %v515
        %v1294 = vunpack.c.l.b16 %v516
        %v1295 = vunpack.c.l.b16 %v517
        %v1296 = vunpack.c.l.b16 %v518
        %v1297 = vunpack.c.l.b16 %v519
        %v1298 = vunpack.c.l.b16 %v520
        %v1299 = vunpack.c.l.b16 %v521
        %v1300 = vunpack.c.l.b16 %v522
        %v1301 = vunpack.c.l.b16 %v523
        %v1302 = vunpack.c.l.b16 %v524
        %v1303 = vunpack.c.l.b16 %v525
        %v1304 = vunpack.c.l.b16 %v526
        %v1305 = vunpack.c.l.b16 %v527
        %v1306 = vunpack.c.l.b16 %v528
        %v1307 = vunpack.c.l.b16 %v529
        %v1308 = vunpack.c.l.b16 %v530
        %v1309 = vunpack.c.l.b16 %v531
        %v1310 = vunpack.c.l.b16 %v532
        %v1311 = vunpack.c.l.b16 %v533
        %v1312 = vunpack.c.l.b16 %v534
        %v1313 = vunpack.c.l.b16 %v535
        %v1314 = vunpack.c.l.b16 %v536
        %v1315 = vunpack.c.l.b16 %v537
        %v1316 = vunpack.c.l.b16 %v538
        %v1317 = vunpack.c.l.b16 %v539
        %v1318 = vunpack.c.l.b16 %v540
        %v1319 = vunpack.c.l.b16 %v541
        %v1320 = vunpack.c.l.b16 %v542
        %v1321 = vunpack.c.l.b16 %v543
        %v1322 = vunpack.c.l.b16 %v544
        %v1323 = vunpack.c.l.b16 %v545
        %v1324 = vunpack.c.l.b16 %v546
        %v1325 = vunpack.c.l.b16 %v547
        %v1326 = vunpack.c.l.b16 %v548
        %v1327 = vunpack.c.l.b16 %v549
        %v1328 = vunpack.c.l.b16 %v550
        %v1329 = vunpack.c.l.b16 %v551
        %v1330 = vunpack.c.l.b16 %v552
        %v1331 = vunpack.c.l.b16 %v553
        %v1332 = vunpack.c.l.b16 %v554
        %v1333 = vunpack.c.l.b16 %v555
        %v1334 = vpack.c.b16 %v999, %v998
        %v1335 = vpack.c.b16 %v1001, %v1000
        %v1336 = vpack.c.b16 %v1003, %v1002
        %v1337 = vpack.c.b16 %v1005, %v1004
        %v1338 = vpack.c.b16 %v1007, %v1006
        %v1339 = vpack.c.b16 %v1009, %v1008
        %v1340 = vpack.c.b16 %v1011, %v1010
        %v1341 = vpack.c.b16 %v1013, %v1012
        %v1342 = vpack.c.b16 %v1015, %v1014
        %v1343 = vpack.c.b16 %v1017, %v1016
        %v1344 = vpack.c.b16 %v1019, %v1018
        %v1345 = vpack.c.b16 %v1021, %v1020
        %v1346 = vpack.c.b16 %v1023, %v1022
        %v1347 = vpack.c.b16 %v1025, %v1024
        %v1348 = vpack.c.b16 %v1027, %v1026
        %v1349 = vpack.c.b16 %v1029, %v1028
        %v1350 = vpack.c.b16 %v1031, %v1030
        %v1351 = vpack.c.b16 %v1033, %v1032
        %v1352 = vpack.c.b16 %v1035, %v1034
        %v1353 = vpack.c.b16 %v1037, %v1036
        %v1354 = vpack.c.b16 %v1039, %v1038
        %v1355 = vpack.c.b16 %v1041, %v1040
        %v1356 = vpack.c.b16 %v1043, %v1042
        %v1357 = vpack.c.b16 %v1045, %v1044
        %v1358 = vpack.c.b16 %v1047, %v1046
        %v1359 = vpack.c.b16 %v1049, %v1048
        %v1360 = vpack.c.b16 %v1051, %v1050
        %v1361 = vpack.c.b16 %v1053, %v1052
        %v1362 = vpack.c.b16 %v1055, %v1054
        %v1363 = vpack.c.b16 %v1057, %v1056
        %v1364 = vpack.c.b16 %v1059, %v1058
        %v1365 = vpack.c.b16 %v1061, %v1060
        %v1366 = vpack.c.b16 %v1063, %v1062
        %v1367 = vpack.c.b16 %v1065, %v1064
        %v1368 = vpack.c.b16 %v1067, %v1066
        %v1369 = vpack.c.b16 %v1069, %v1068
        %v1370 = vpack.c.b16 %v1071, %v1070
        %v1371 = vpack.c.b16 %v1073, %v1072
        %v1372 = vpack.c.b16 %v1075, %v1074
        %v1373 = vpack.c.b16 %v1077, %v1076
        %v1374 = vpack.c.b16 %v1079, %v1078
        %v1375 = vpack.c.b16 %v1081, %v1080
        %v1376 = vpack.c.b16 %v1083, %v1082
        %v1377 = vpack.c.b16 %v1085, %v1084
        %v1378 = vpack.c.b16 %v1087, %v1086
        %v1379 = vpack.c.b16 %v1089, %v1088
        %v1380 = vpack.c.b16 %v1091, %v1090
        %v1381 = vpack.c.b16 %v1093, %v1092
        %v1382 = vpack.c.b16 %v1095, %v1094
        %v1383 = vpack.c.b16 %v1097, %v1096
        %v1384 = vpack.c.b16 %v1099, %v1098
        %v1385 = vpack.c.b16 %v1101, %v1100
        %v1386 = vpack.c.b16 %v1103, %v1102
        %v1387 = vpack.c.b16 %v1105, %v1104
        %v1388 = vpack.c.b16 %v1107, %v1106
        %v1389 = vpack.c.b16 %v1109, %v1108
        %v1390 = vpack.c.b16 %v1111, %v1110
        %v1391 = vpack.c.b16 %v1113, %v1112
        %v1392 = vpack.c.b16 %v1115, %v1114
        %v1393 = vpack.c.b16 %v1117, %v1116
        %v1394 = vpack.c.b16 %v1119, %v1118
        %v1395 = vpack.c.b16 %v1121, %v1120
        %v1396 = vpack.c.b16 %v1123, %v1122
        %v1397 = vpack.c.b16 %v1125, %v1124
        %v1398 = vpack.c.b16 %v1127, %v1126
        %v1399 = vpack.c.b16 %v1129, %v1128
        %v1400 = vpack.c.b16 %v1131, %v1130
        %v1401 = vpack.c.b16 %v1133, %v1132
        %v1402 = vpack.c.b16 %v1135, %v1134
        %v1403 = vpack.c.b16 %v1137, %v1136
        %v1404 = vpack.c.b16 %v1139, %v1138
        %v1405 = vpack.c.b16 %v1141, %v1140
        %v1406 = vpack.c.b16 %v1143, %v1142
        %v1407 = vpack.c.b16 %v1145, %v1144
        %v1408 = vpack.c.b16 %v1147, %v1146
        %v1409 = vpack.c.b16 %v1149, %v1148
        %v1410 = vpack.c.b16 %v1151, %v1150
        %v1411 = vpack.c.b16 %v1153, %v1152
        %v1412 = vpack.c.b16 %v1155, %v1154
        %v1413 = vpack.c.b16 %v1157, %v1156
        %v1414 = vpack.c.b16 %v1159, %v1158
        %v1415 = vpack.c.b16 %v1161, %v1160
        %v1416 = vpack.c.b16 %v1163, %v1162
        %v1417 = vpack.c.b16 %v1165, %v1164
        %v1418 = vpack.c.b16 %v1167, %v1166
        %v1419 = vpack.c.b16 %v1169, %v1168
        %v1420 = vpack.c.b16 %v1171, %v1170
        %v1421 = vpack.c.b16 %v1173, %v1172
        %v1422 = vpack.c.b16 %v1175, %v1174
        %v1423 = vpack.c.b16 %v1177, %v1176
        %v1424 = vpack.c.b16 %v1179, %v1178
        %v1425 = vpack.c.b16 %v1181, %v1180
        %v1426 = vpack.c.b16 %v1183, %v1182
        %v1427 = vpack.c.b16 %v1185, %v1184
        %v1428 = vpack.c.b16 %v1187, %v1186
        %v1429 = vpack.c.b16 %v1189, %v1188
        %v1430 = vpack.c.b16 %v1191, %v1190
        %v1431 = vpack.c.b16 %v1193, %v1192
        %v1432 = vpack.c.b16 %v1195, %v1194
        %v1433 = vpack.c.b16 %v1197, %v1196
        %v1434 = vpack.c.b16 %v1199, %v1198
        %v1435 = vpack.c.b16 %v1201, %v1200
        %v1436 = vpack.c.b16 %v1203, %v1202
        %v1437 = vpack.c.b16 %v1205, %v1204
        %v1438 = vpack.c.b16 %v1207, %v1206
        %v1439 = vpack.c.b16 %v1209, %v1208
        %v1440 = vpack.c.b16 %v1211, %v1210
        %v1441 = vpack.c.b16 %v1213, %v1212
        %v1442 = vpack.c.b16 %v1215, %v1214
        %v1443 = vpack.c.b16 %v1217, %v1216
        %v1444 = vpack.c.b16 %v1219, %v1218
        %v1445 = vpack.c.b16 %v1221, %v1220
        %v1446 = vpack.c.b16 %v1223, %v1222
        %v1447 = vpack.c.b16 %v1225, %v1224
        %v1448 = vpack.c.b16 %v1227, %v1226
        %v1449 = vpack.c.b16 %v1229, %v1228
        %v1450 = vpack.c.b16 %v1231, %v1230
        %v1451 = vpack.c.b16 %v1233, %v1232
        %v1452 = vpack.c.b16 %v1235, %v1234
        %v1453 = vpack.c.b16 %v1237, %v1236
        %v1454 = vpack.c.b16 %v1239, %v1238
        %v1455 = vpack.c.b16 %v1241, %v1240
        %v1456 = vpack.c.b16 %v1243, %v1242
        %v1457 = vpack.c.b16 %v1245, %v1244
        %v1458 = vpack.c.b16 %v1247, %v1246
        %v1459 = vpack.c.b16 %v1249, %v1248
        %v1460 = vpack.c.b16 %v1251, %v1250
        %v1461 = vpack.c.b16 %v1253, %v1252
        %v1462 = vpack.c.b16 %v1255, %v1254
        %v1463 = vpack.c.b16 %v1257, %v1256
        %v1464 = vpack.c.b16 %v1259, %v1258
        %v1465 = vpack.c.b16 %v1261, %v1260
        %v1466 = vpack.c.b16 %v1263, %v1262
        %v1467 = vpack.c.b16 %v1265, %v1264
        %v1468 = vpack.c.b16 %v1267, %v1266
        %v1469 = vpack.c.b16 %v1269, %v1268
        %v1470 = vpack.c.b16 %v1271, %v1270
        %v1471 = vpack.c.b16 %v1273, %v1272
        %v1472 = vpack.c.b16 %v1275, %v1274
        %v1473 = vpack.c.b16 %v1277, %v1276
        %v1474 = vpack.c.b16 %v1279, %v1278
        %v1475 = vpack.c.b16 %v1281, %v1280
        %v1476 = vpack.c.b16 %v1283, %v1282
        %v1477 = vpack.c.b16 %v1285, %v1284
        %v1478 = vpack.c.b16 %v1287, %v1286
        %v1479 = vpack.c.b16 %v1289, %v1288
        %v1480 = vpack.c.b16 %v1291, %v1290
        %v1481 = vpack.c.b16 %v1293, %v1292
        %v1482 = vpack.c.b16 %v1295, %v1294
        %v1483 = vpack.c.b16 %v1297, %v1296
        %v1484 = vpack.c.b16 %v1299, %v1298
        %v1485 = vpack.c.b16 %v1301, %v1300
        %v1486 = vpack.c.b16 %v1303, %v1302
        %v1487 = vpack.c.b16 %v1305, %v1304
        %v1488 = vpack.c.b16 %v1307, %v1306
        %v1489 = vpack.c.b16 %v1309, %v1308
        %v1490 = vpack.c.b16 %v1311, %v1310
        %v1491 = vpack.c.b16 %v1313, %v1312
        %v1492 = vpack.c.b16 %v1315, %v1314
        %v1493 = vpack.c.b16 %v1317, %v1316
        %v1494 = vpack.c.b16 %v1319, %v1318
        %v1495 = vpack.c.b16 %v1321, %v1320
        %v1496 = vpack.c.b16 %v1323, %v1322
        %v1497 = vpack.c.b16 %v1325, %v1324
        %v1498 = vpack.c.b16 %v1327, %v1326
        %v1499 = vpack.c.b16 %v1329, %v1328
        %v1500 = vpack.c.b16 %v1331, %v1330
        %v1501 = vpack.c.b16 %v1333, %v1332
        %1670 = vmatprep.subr.bf16.mxu0 0
        %1671 = vmatpush1.bf16.msra.mxu0 %v1334
        %1672 = vmatprep.subr.bf16.mxu0 0
        %1673 = vmatpush1.bf16.msra.mxu0 %v1335
        %1674 = vmatprep.subr.bf16.mxu0 0
        %1675 = vmatpush1.bf16.msra.mxu0 %v1336
        %1676 = vmatprep.subr.bf16.mxu0 0
        %1677 = vmatpush1.bf16.msra.mxu0 %v1337
        %1678 = vmatprep.subr.bf16.mxu0 0
        %1679 = vmatpush1.bf16.msra.mxu0 %v1338
        %1680 = vmatprep.subr.bf16.mxu0 0
        %1681 = vmatpush1.bf16.msra.mxu0 %v1339
        %1682 = vmatprep.subr.bf16.mxu0 0
        %1683 = vmatpush1.bf16.msra.mxu0 %v1340
        %1684 = vmatprep.subr.bf16.mxu0 0
        %1685 = vmatpush1.bf16.msra.mxu0 %v1341
        %1686 = vmatprep.subr.bf16.mxu0 0
        %1687 = vmatpush1.bf16.msra.mxu0 %v1342
        %1688 = vmatprep.subr.bf16.mxu0 0
        %1689 = vmatpush1.bf16.msra.mxu0 %v1343
        %1690 = vmatprep.subr.bf16.mxu0 0
        %1691 = vmatpush1.bf16.msra.mxu0 %v1344
        %1692 = vmatprep.subr.bf16.mxu0 0
        %1693 = vmatpush1.bf16.msra.mxu0 %v1345
        %1694 = vmatprep.subr.bf16.mxu0 0
        %1695 = vmatpush1.bf16.msra.mxu0 %v1346
        %1696 = vmatprep.subr.bf16.mxu0 0
        %1697 = vmatpush1.bf16.msra.mxu0 %v1347
        %1698 = vmatprep.subr.bf16.mxu0 0
        %1699 = vmatpush1.bf16.msra.mxu0 %v1348
        %1700 = vmatprep.subr.bf16.mxu0 0
        %1701 = vmatpush1.bf16.msra.mxu0 %v1349
        %1702 = vmatprep.mubr.bf16.mxu0 %v621
        %1703 = vmatmul.mubr.bf16.gmra.mrb[0].mxu0 %v620
        %v1704 = vpop.f32.mrb[0].mxu0
        %v1705 = vadd.f32 0.0, %v1704
        %v1706 = vpop.f32.mrb[0].mxu0
        %v1707 = vpop.f32.mrb[0].mxu0
        %v1708 = vadd.f32 0.0, %v1707
        %v1709 = vpop.f32.mrb[0].mxu0
        %1710 = vdwg.mxu0
        %1711 = vmatprep.subr.bf16.mxu0 0
        %1712 = vmatpush1.bf16.msra.mxu0 %v1350
        %1713 = vmatprep.subr.bf16.mxu0 0
        %1714 = vmatpush1.bf16.msra.mxu0 %v1351
        %1715 = vmatprep.subr.bf16.mxu0 0
        %1716 = vmatpush1.bf16.msra.mxu0 %v1352
        %1717 = vmatprep.subr.bf16.mxu0 0
        %1718 = vmatpush1.bf16.msra.mxu0 %v1353
        %1719 = vmatprep.subr.bf16.mxu0 0
        %1720 = vmatpush1.bf16.msra.mxu0 %v1354
        %1721 = vmatprep.subr.bf16.mxu0 0
        %1722 = vmatpush1.bf16.msra.mxu0 %v1355
        %1723 = vmatprep.subr.bf16.mxu0 0
        %1724 = vmatpush1.bf16.msra.mxu0 %v1356
        %1725 = vmatprep.subr.bf16.mxu0 0
        %1726 = vmatpush1.bf16.msra.mxu0 %v1357
        %1727 = vmatprep.subr.bf16.mxu0 0
        %1728 = vmatpush1.bf16.msra.mxu0 %v1358
        %1729 = vmatprep.subr.bf16.mxu0 0
        %1730 = vmatpush1.bf16.msra.mxu0 %v1359
        %1731 = vmatprep.subr.bf16.mxu0 0
        %1732 = vmatpush1.bf16.msra.mxu0 %v1360
        %1733 = vmatprep.subr.bf16.mxu0 0
        %1734 = vmatpush1.bf16.msra.mxu0 %v1361
        %1735 = vmatprep.subr.bf16.mxu0 0
        %1736 = vmatpush1.bf16.msra.mxu0 %v1362
        %1737 = vmatprep.subr.bf16.mxu0 0
        %1738 = vmatpush1.bf16.msra.mxu0 %v1363
        %1739 = vmatprep.subr.bf16.mxu0 0
        %1740 = vmatpush1.bf16.msra.mxu0 %v1364
        %1741 = vmatprep.subr.bf16.mxu0 0
        %1742 = vmatpush1.bf16.msra.mxu0 %v1365
        %1743 = vmatprep.mubr.bf16.mxu0 %v623
        %1744 = vmatmul.mubr.bf16.gmra.mrb[0].mxu0 %v622
        %v1745 = vpop.f32.mrb[0].mxu0
        %v1746 = vadd.f32 %v1705, %v1745
        %v1747 = vpop.f32.mrb[0].mxu0
        %v1748 = vpop.f32.mrb[0].mxu0
        %v1749 = vadd.f32 %v1708, %v1748
        %v1750 = vpop.f32.mrb[0].mxu0
        %1751 = vdwg.mxu0
        %1752 = vmatprep.subr.bf16.mxu0 0
        %1753 = vmatpush1.bf16.msra.mxu0 %v1366
        %1754 = vmatprep.subr.bf16.mxu0 0
        %1755 = vmatpush1.bf16.msra.mxu0 %v1367
        %1756 = vmatprep.subr.bf16.mxu0 0
        %1757 = vmatpush1.bf16.msra.mxu0 %v1368
        %1758 = vmatprep.subr.bf16.mxu0 0
        %1759 = vmatpush1.bf16.msra.mxu0 %v1369
        %1760 = vmatprep.subr.bf16.mxu0 0
        %1761 = vmatpush1.bf16.msra.mxu0 %v1370
        %1762 = vmatprep.subr.bf16.mxu0 0
        %1763 = vmatpush1.bf16.msra.mxu0 %v1371
        %1764 = vmatprep.subr.bf16.mxu0 0
        %1765 = vmatpush1.bf16.msra.mxu0 %v1372
        %1766 = vmatprep.subr.bf16.mxu0 0
        %1767 = vmatpush1.bf16.msra.mxu0 %v1373
        %1768 = vmatprep.subr.bf16.mxu0 0
        %1769 = vmatpush1.bf16.msra.mxu0 %v1374
        %1770 = vmatprep.subr.bf16.mxu0 0
        %1771 = vmatpush1.bf16.msra.mxu0 %v1375
        %1772 = vmatprep.subr.bf16.mxu0 0
        %1773 = vmatpush1.bf16.msra.mxu0 %v1376
        %1774 = vmatprep.subr.bf16.mxu0 0
        %1775 = vmatpush1.bf16.msra.mxu0 %v1377
        %1776 = vmatprep.subr.bf16.mxu0 0
        %1777 = vmatpush1.bf16.msra.mxu0 %v1378
        %1778 = vmatprep.subr.bf16.mxu0 0
        %1779 = vmatpush1.bf16.msra.mxu0 %v1379
        %1780 = vmatprep.subr.bf16.mxu0 0
        %1781 = vmatpush1.bf16.msra.mxu0 %v1380
        %1782 = vmatprep.subr.bf16.mxu0 0
        %1783 = vmatpush1.bf16.msra.mxu0 %v1381
        %1784 = vmatprep.mubr.bf16.mxu0 %v625
        %1785 = vmatmul.mubr.bf16.gmra.mrb[0].mxu0 %v624
        %v1786 = vpop.f32.mrb[0].mxu0
        %v1787 = vadd.f32 %v1746, %v1786
        %v1788 = vpop.f32.mrb[0].mxu0
        %v1789 = vpop.f32.mrb[0].mxu0
        %v1790 = vadd.f32 %v1749, %v1789
        %v1791 = vpop.f32.mrb[0].mxu0
        %1792 = vdwg.mxu0
        %1793 = vmatprep.subr.bf16.mxu0 0
        %1794 = vmatpush1.bf16.msra.mxu0 %v1382
        %1795 = vmatprep.subr.bf16.mxu0 0
        %1796 = vmatpush1.bf16.msra.mxu0 %v1383
        %1797 = vmatprep.subr.bf16.mxu0 0
        %1798 = vmatpush1.bf16.msra.mxu0 %v1384
        %1799 = vmatprep.subr.bf16.mxu0 0
        %1800 = vmatpush1.bf16.msra.mxu0 %v1385
        %1801 = vmatprep.subr.bf16.mxu0 0
        %1802 = vmatpush1.bf16.msra.mxu0 %v1386
        %1803 = vmatprep.subr.bf16.mxu0 0
        %1804 = vmatpush1.bf16.msra.mxu0 %v1387
        %1805 = vmatprep.subr.bf16.mxu0 0
        %1806 = vmatpush1.bf16.msra.mxu0 %v1388
        %1807 = vmatprep.subr.bf16.mxu0 0
        %1808 = vmatpush1.bf16.msra.mxu0 %v1389
        %1809 = vmatprep.subr.bf16.mxu0 0
        %1810 = vmatpush1.bf16.msra.mxu0 %v1390
        %1811 = vmatprep.subr.bf16.mxu0 0
        %1812 = vmatpush1.bf16.msra.mxu0 %v1391
        %1813 = vmatprep.subr.bf16.mxu0 0
        %1814 = vmatpush1.bf16.msra.mxu0 %v1392
        %1815 = vmatprep.subr.bf16.mxu0 0
        %1816 = vmatpush1.bf16.msra.mxu0 %v1393
        %1817 = vmatprep.subr.bf16.mxu0 0
        %1818 = vmatpush1.bf16.msra.mxu0 %v1394
        %1819 = vmatprep.subr.bf16.mxu0 0
        %1820 = vmatpush1.bf16.msra.mxu0 %v1395
        %1821 = vmatprep.subr.bf16.mxu0 0
        %1822 = vmatpush1.bf16.msra.mxu0 %v1396
        %1823 = vmatprep.subr.bf16.mxu0 0
        %1824 = vmatpush1.bf16.msra.mxu0 %v1397
        %1825 = vmatprep.mubr.bf16.mxu0 %v627
        %1826 = vmatmul.mubr.bf16.gmra.mrb[0].mxu0 %v626
        %v1827 = vpop.f32.mrb[0].mxu0
        %v1828 = vadd.f32 %v1787, %v1827
        %v1829 = vpop.f32.mrb[0].mxu0
        %v1830 = vpop.f32.mrb[0].mxu0
        %v1831 = vadd.f32 %v1790, %v1830
        %v1832 = vpop.f32.mrb[0].mxu0
        %1833 = vdwg.mxu0
        %1834 = vmatprep.subr.bf16.mxu0 0
        %1835 = vmatpush1.bf16.msra.mxu0 %v1398
        %1836 = vmatprep.subr.bf16.mxu0 0
        %1837 = vmatpush1.bf16.msra.mxu0 %v1399
        %1838 = vmatprep.subr.bf16.mxu0 0
        %1839 = vmatpush1.bf16.msra.mxu0 %v1400
        %1840 = vmatprep.subr.bf16.mxu0 0
        %1841 = vmatpush1.bf16.msra.mxu0 %v1401
        %1842 = vmatprep.subr.bf16.mxu0 0
        %1843 = vmatpush1.bf16.msra.mxu0 %v1402
        %1844 = vmatprep.subr.bf16.mxu0 0
        %1845 = vmatpush1.bf16.msra.mxu0 %v1403
        %1846 = vmatprep.subr.bf16.mxu0 0
        %1847 = vmatpush1.bf16.msra.mxu0 %v1404
        %1848 = vmatprep.subr.bf16.mxu0 0
        %1849 = vmatpush1.bf16.msra.mxu0 %v1405
        %1850 = vmatprep.subr.bf16.mxu0 0
        %1851 = vmatpush1.bf16.msra.mxu0 %v1406
        %1852 = vmatprep.subr.bf16.mxu0 0
        %1853 = vmatpush1.bf16.msra.mxu0 %v1407
        %1854 = vmatprep.subr.bf16.mxu0 0
        %1855 = vmatpush1.bf16.msra.mxu0 %v1408
        %1856 = vmatprep.subr.bf16.mxu0 0
        %1857 = vmatpush1.bf16.msra.mxu0 %v1409
        %1858 = vmatprep.subr.bf16.mxu0 0
        %1859 = vmatpush1.bf16.msra.mxu0 %v1410
        %1860 = vmatprep.subr.bf16.mxu0 0
        %1861 = vmatpush1.bf16.msra.mxu0 %v1411
        %1862 = vmatprep.subr.bf16.mxu0 0
        %1863 = vmatpush1.bf16.msra.mxu0 %v1412
        %1864 = vmatprep.subr.bf16.mxu0 0
        %1865 = vmatpush1.bf16.msra.mxu0 %v1413
        %1866 = vmatprep.mubr.bf16.mxu0 %v629
        %1867 = vmatmul.mubr.bf16.gmra.mrb[0].mxu0 %v628
        %v1868 = vpop.f32.mrb[0].mxu0
        %v1869 = vadd.f32 %v1828, %v1868
        %v1870 = vpop.f32.mrb[0].mxu0
        %v1871 = vpop.f32.mrb[0].mxu0
        %v1872 = vadd.f32 %v1831, %v1871
        %v1873 = vpop.f32.mrb[0].mxu0
        %1874 = vdwg.mxu0
        %1875 = vmatprep.subr.bf16.mxu0 0
        %1876 = vmatpush1.bf16.msra.mxu0 %v1414
        %1877 = vmatprep.subr.bf16.mxu0 0
        %1878 = vmatpush1.bf16.msra.mxu0 %v1415
        %1879 = vmatprep.subr.bf16.mxu0 0
        %1880 = vmatpush1.bf16.msra.mxu0 %v1416
        %1881 = vmatprep.subr.bf16.mxu0 0
        %1882 = vmatpush1.bf16.msra.mxu0 %v1417
        %1883 = vmatprep.subr.bf16.mxu0 0
        %1884 = vmatpush1.bf16.msra.mxu0 %v1418
        %1885 = vmatprep.subr.bf16.mxu0 0
        %1886 = vmatpush1.bf16.msra.mxu0 %v1419
        %1887 = vmatprep.subr.bf16.mxu0 0
        %1888 = vmatpush1.bf16.msra.mxu0 %v1420
        %1889 = vmatprep.subr.bf16.mxu0 0
        %1890 = vmatpush1.bf16.msra.mxu0 %v1421
        %1891 = vmatprep.subr.bf16.mxu0 0
        %1892 = vmatpush1.bf16.msra.mxu0 %v1422
        %1893 = vmatprep.subr.bf16.mxu0 0
        %1894 = vmatpush1.bf16.msra.mxu0 %v1423
        %1895 = vmatprep.subr.bf16.mxu0 0
        %1896 = vmatpush1.bf16.msra.mxu0 %v1424
        %1897 = vmatprep.subr.bf16.mxu0 0
        %1898 = vmatpush1.bf16.msra.mxu0 %v1425
        %1899 = vmatprep.subr.bf16.mxu0 0
        %1900 = vmatpush1.bf16.msra.mxu0 %v1426
        %1901 = vmatprep.subr.bf16.mxu0 0
        %1902 = vmatpush1.bf16.msra.mxu0 %v1427
        %1903 = vmatprep.subr.bf16.mxu0 0
        %1904 = vmatpush1.bf16.msra.mxu0 %v1428
        %1905 = vmatprep.subr.bf16.mxu0 0
        %1906 = vmatpush1.bf16.msra.mxu0 %v1429
        %1907 = vmatprep.mubr.bf16.mxu0 %v631
        %1908 = vmatmul.mubr.bf16.gmra.mrb[0].mxu0 %v630
        %v1909 = vpop.f32.mrb[0].mxu0
        %v1910 = vadd.f32 %v1869, %v1909
        %v1911 = vpop.f32.mrb[0].mxu0
        %v1912 = vpop.f32.mrb[0].mxu0
        %v1913 = vadd.f32 %v1872, %v1912
        %v1914 = vpop.f32.mrb[0].mxu0
        %1915 = vdwg.mxu0
        %1916 = vmatprep.subr.bf16.mxu0 0
        %1917 = vmatpush1.bf16.msra.mxu0 %v1430
        %1918 = vmatprep.subr.bf16.mxu0 0
        %1919 = vmatpush1.bf16.msra.mxu0 %v1431
        %1920 = vmatprep.subr.bf16.mxu0 0
        %1921 = vmatpush1.bf16.msra.mxu0 %v1432
        %1922 = vmatprep.subr.bf16.mxu0 0
        %1923 = vmatpush1.bf16.msra.mxu0 %v1433
        %1924 = vmatprep.subr.bf16.mxu0 0
        %1925 = vmatpush1.bf16.msra.mxu0 %v1434
        %1926 = vmatprep.subr.bf16.mxu0 0
        %1927 = vmatpush1.bf16.msra.mxu0 %v1435
        %1928 = vmatprep.subr.bf16.mxu0 0
        %1929 = vmatpush1.bf16.msra.mxu0 %v1436
        %1930 = vmatprep.subr.bf16.mxu0 0
        %1931 = vmatpush1.bf16.msra.mxu0 %v1437
        %1932 = vmatprep.subr.bf16.mxu0 0
        %1933 = vmatpush1.bf16.msra.mxu0 %v1438
        %1934 = vmatprep.subr.bf16.mxu0 0
        %1935 = vmatpush1.bf16.msra.mxu0 %v1439
        %1936 = vmatprep.subr.bf16.mxu0 0
        %1937 = vmatpush1.bf16.msra.mxu0 %v1440
        %1938 = vmatprep.subr.bf16.mxu0 0
        %1939 = vmatpush1.bf16.msra.mxu0 %v1441
        %1940 = vmatprep.subr.bf16.mxu0 0
        %1941 = vmatpush1.bf16.msra.mxu0 %v1442
        %1942 = vmatprep.subr.bf16.mxu0 0
        %1943 = vmatpush1.bf16.msra.mxu0 %v1443
        %1944 = vmatprep.subr.bf16.mxu0 0
        %1945 = vmatpush1.bf16.msra.mxu0 %v1444
        %1946 = vmatprep.subr.bf16.mxu0 0
        %1947 = vmatpush1.bf16.msra.mxu0 %v1445
        %1948 = vmatprep.mubr.bf16.mxu0 %v633
        %1949 = vmatmul.mubr.bf16.gmra.mrb[0].mxu0 %v632
        %v1950 = vpop.f32.mrb[0].mxu0
        %v1951 = vadd.f32 %v1910, %v1950
        %v1952 = vpop.f32.mrb[0].mxu0
        %v1953 = vpop.f32.mrb[0].mxu0
        %v1954 = vadd.f32 %v1913, %v1953
        %v1955 = vpop.f32.mrb[0].mxu0
        %1956 = vdwg.mxu0
        %1957 = vmatprep.subr.bf16.mxu0 0
        %1958 = vmatpush1.bf16.msra.mxu0 %v1446
        %1959 = vmatprep.subr.bf16.mxu0 0
        %1960 = vmatpush1.bf16.msra.mxu0 %v1447
        %1961 = vmatprep.subr.bf16.mxu0 0
        %1962 = vmatpush1.bf16.msra.mxu0 %v1448
        %1963 = vmatprep.subr.bf16.mxu0 0
        %1964 = vmatpush1.bf16.msra.mxu0 %v1449
        %1965 = vmatprep.subr.bf16.mxu0 0
        %1966 = vmatpush1.bf16.msra.mxu0 %v1450
        %1967 = vmatprep.subr.bf16.mxu0 0
        %1968 = vmatpush1.bf16.msra.mxu0 %v1451
        %1969 = vmatprep.subr.bf16.mxu0 0
        %1970 = vmatpush1.bf16.msra.mxu0 %v1452
        %1971 = vmatprep.subr.bf16.mxu0 0
        %1972 = vmatpush1.bf16.msra.mxu0 %v1453
        %1973 = vmatprep.subr.bf16.mxu0 0
        %1974 = vmatpush1.bf16.msra.mxu0 %v1454
        %1975 = vmatprep.subr.bf16.mxu0 0
        %1976 = vmatpush1.bf16.msra.mxu0 %v1455
        %1977 = vmatprep.subr.bf16.mxu0 0
        %1978 = vmatpush1.bf16.msra.mxu0 %v1456
        %1979 = vmatprep.subr.bf16.mxu0 0
        %1980 = vmatpush1.bf16.msra.mxu0 %v1457
        %1981 = vmatprep.subr.bf16.mxu0 0
        %1982 = vmatpush1.bf16.msra.mxu0 %v1458
        %1983 = vmatprep.subr.bf16.mxu0 0
        %1984 = vmatpush1.bf16.msra.mxu0 %v1459
        %1985 = vmatprep.subr.bf16.mxu0 0
        %1986 = vmatpush1.bf16.msra.mxu0 %v1460
        %1987 = vmatprep.subr.bf16.mxu0 0
        %1988 = vmatpush1.bf16.msra.mxu0 %v1461
        %1989 = vmatprep.mubr.bf16.mxu0 %v635
        %1990 = vmatmul.mubr.bf16.gmra.mrb[0].mxu0 %v634
        %v1991 = vpop.f32.mrb[0].mxu0
        %v1992 = vadd.f32 %v1951, %v1991
        %v1993 = vpop.f32.mrb[0].mxu0
        %v1994 = vpop.f32.mrb[0].mxu0
        %v1995 = vadd.f32 %v1954, %v1994
        %v1996 = vpop.f32.mrb[0].mxu0
        %1997 = vdwg.mxu0
        %1998 = vmatprep.subr.bf16.mxu0 0
        %1999 = vmatpush1.bf16.msra.mxu0 %v1462
        %2000 = vmatprep.subr.bf16.mxu0 0
        %2001 = vmatpush1.bf16.msra.mxu0 %v1463
        %2002 = vmatprep.subr.bf16.mxu0 0
        %2003 = vmatpush1.bf16.msra.mxu0 %v1464
        %2004 = vmatprep.subr.bf16.mxu0 0
        %2005 = vmatpush1.bf16.msra.mxu0 %v1465
        %2006 = vmatprep.subr.bf16.mxu0 0
        %2007 = vmatpush1.bf16.msra.mxu0 %v1466
        %2008 = vmatprep.subr.bf16.mxu0 0
        %2009 = vmatpush1.bf16.msra.mxu0 %v1467
        %2010 = vmatprep.subr.bf16.mxu0 0
        %2011 = vmatpush1.bf16.msra.mxu0 %v1468
        %2012 = vmatprep.subr.bf16.mxu0 0
        %2013 = vmatpush1.bf16.msra.mxu0 %v1469
        %2014 = vmatprep.subr.bf16.mxu0 0
        %2015 = vmatpush1.bf16.msra.mxu0 %v1470
        %2016 = vmatprep.subr.bf16.mxu0 0
        %2017 = vmatpush1.bf16.msra.mxu0 %v1471
        %2018 = vmatprep.subr.bf16.mxu0 0
        %2019 = vmatpush1.bf16.msra.mxu0 %v1472
        %2020 = vmatprep.subr.bf16.mxu0 0
        %2021 = vmatpush1.bf16.msra.mxu0 %v1473
        %2022 = vmatprep.subr.bf16.mxu0 0
        %2023 = vmatpush1.bf16.msra.mxu0 %v1474
        %2024 = vmatprep.subr.bf16.mxu0 0
        %2025 = vmatpush1.bf16.msra.mxu0 %v1475
        %2026 = vmatprep.subr.bf16.mxu0 0
        %2027 = vmatpush1.bf16.msra.mxu0 %v1476
        %2028 = vmatprep.subr.bf16.mxu0 0
        %2029 = vmatpush1.bf16.msra.mxu0 %v1477
        %2030 = vmatprep.mubr.bf16.mxu0 %v637
        %2031 = vmatmul.mubr.bf16.gmra.mrb[0].mxu0 %v636
        %v2032 = vpop.f32.mrb[0].mxu0
        %v2033 = vadd.f32 %v1992, %v2032
        %v2034 = vpop.f32.mrb[0].mxu0
        %v2035 = vpop.f32.mrb[0].mxu0
        %v2036 = vadd.f32 %v1995, %v2035
        %v2037 = vpop.f32.mrb[0].mxu0
        %2038 = vdwg.mxu0
        %2039 = vmatprep.subr.bf16.mxu0 0
        %2040 = vmatpush1.bf16.msra.mxu0 %v1478
        %2041 = vmatprep.subr.bf16.mxu0 0
        %2042 = vmatpush1.bf16.msra.mxu0 %v1479
        %2043 = vmatprep.subr.bf16.mxu0 0
        %2044 = vmatpush1.bf16.msra.mxu0 %v1480
        %2045 = vmatprep.subr.bf16.mxu0 0
        %2046 = vmatpush1.bf16.msra.mxu0 %v1481
        %2047 = vmatprep.subr.bf16.mxu0 0
        %2048 = vmatpush1.bf16.msra.mxu0 %v1482
        %2049 = vmatprep.subr.bf16.mxu0 0
        %2050 = vmatpush1.bf16.msra.mxu0 %v1483
        %2051 = vmatprep.subr.bf16.mxu0 0
        %2052 = vmatpush1.bf16.msra.mxu0 %v1484
        %2053 = vmatprep.subr.bf16.mxu0 0
        %2054 = vmatpush1.bf16.msra.mxu0 %v1485
        %2055 = vmatprep.subr.bf16.mxu0 0
        %2056 = vmatpush1.bf16.msra.mxu0 %v1486
        %2057 = vmatprep.subr.bf16.mxu0 0
        %2058 = vmatpush1.bf16.msra.mxu0 %v1487
        %2059 = vmatprep.subr.bf16.mxu0 0
        %2060 = vmatpush1.bf16.msra.mxu0 %v1488
        %2061 = vmatprep.subr.bf16.mxu0 0
        %2062 = vmatpush1.bf16.msra.mxu0 %v1489
        %2063 = vmatprep.subr.bf16.mxu0 0
        %2064 = vmatpush1.bf16.msra.mxu0 %v1490
        %2065 = vmatprep.subr.bf16.mxu0 0
        %2066 = vmatpush1.bf16.msra.mxu0 %v1491
        %2067 = vmatprep.subr.bf16.mxu0 0
        %2068 = vmatpush1.bf16.msra.mxu0 %v1492
        %2069 = vmatprep.subr.bf16.mxu0 0
        %2070 = vmatpush1.bf16.msra.mxu0 %v1493
        %2071 = vmatprep.mubr.bf16.mxu0 %v639
        %2072 = vmatmul.mubr.bf16.gmra.mrb[0].mxu0 %v638
        %v2073 = vpop.f32.mrb[0].mxu0
        %v2074 = vadd.f32 %v2033, %v2073
        %v2075 = vpop.f32.mrb[0].mxu0
        %v2076 = vpop.f32.mrb[0].mxu0
        %v2077 = vadd.f32 %v2036, %v2076
        %v2078 = vpop.f32.mrb[0].mxu0
        %2079 = vdwg.mxu0
        %2080 = vmatprep.subr.bf16.mxu0 0
        %2081 = vmatpush1.bf16.msra.mxu0 %v1494
        %2082 = vmatprep.subr.bf16.mxu0 0
        %2083 = vmatpush1.bf16.msra.mxu0 %v1495
        %2084 = vmatprep.subr.bf16.mxu0 0
        %2085 = vmatpush1.bf16.msra.mxu0 %v1496
        %2086 = vmatprep.subr.bf16.mxu0 0
        %2087 = vmatpush1.bf16.msra.mxu0 %v1497
        %2088 = vmatprep.subr.bf16.mxu0 0
        %2089 = vmatpush1.bf16.msra.mxu0 %v1498
        %2090 = vmatprep.subr.bf16.mxu0 0
        %2091 = vmatpush1.bf16.msra.mxu0 %v1499
        %2092 = vmatprep.subr.bf16.mxu0 0
        %2093 = vmatpush1.bf16.msra.mxu0 %v1500
        %2094 = vmatprep.subr.bf16.mxu0 0
        %2095 = vmatpush1.bf16.msra.mxu0 %v1501
        %2096 = vmatprep.subr.bf16.mxu0 0
        %2097 = vmatpush1.bf16.msra.mxu0 0
        %2098 = vmatprep.subr.bf16.mxu0 0
        %2099 = vmatpush1.bf16.msra.mxu0 0
        %2100 = vmatprep.subr.bf16.mxu0 0
        %2101 = vmatpush1.bf16.msra.mxu0 0
        %2102 = vmatprep.subr.bf16.mxu0 0
        %2103 = vmatpush1.bf16.msra.mxu0 0
        %2104 = vmatprep.subr.bf16.mxu0 0
        %2105 = vmatpush1.bf16.msra.mxu0 0
        %2106 = vmatprep.subr.bf16.mxu0 0
        %2107 = vmatpush1.bf16.msra.mxu0 0
        %2108 = vmatprep.subr.bf16.mxu0 0
        %2109 = vmatpush1.bf16.msra.mxu0 0
        %2110 = vmatprep.subr.bf16.mxu0 0
        %2111 = vmatpush1.bf16.msra.mxu0 0
        %2112 = vmatprep.mubr.bf16.mxu0 0
        %2113 = vmatmul.mubr.bf16.gmra.mrb[0].mxu0 %v640
        %v2114 = vpop.f32.mrb[0].mxu0
        %v2115 = vadd.f32 %v2074, %v2114
        %v2116 = vpop.f32.mrb[0].mxu0
        %v2117 = vpop.f32.mrb[0].mxu0
        %v2118 = vadd.f32 %v2077, %v2117
        %v2119 = vpop.f32.mrb[0].mxu0
        %2120 = vdwg.mxu0
        %2121 = vst [vmem:[%s188] sm:$0xff] %v2115
        %2122 = vst [vmem:[%s188 + $0x8] sm:$0xff] %v2118
        %s2123 = sand.u32 %s90, 1
        %s2124 = sand.u32 %s90, 1
        %s2125 = smul.addr %s2124, 16
        %s2126 = scalar_lea.vmem [#allocation4], %s2125
        // Predicated region
        $region33: #{mlp_hand_forward.3} parent=27 // pred_check
          %p2127 = pneg %p100
        $region34: #{mlp_hand_forward.3} parent=27 // pred_check_branch
          %2129 = sbr.rel (%p2127) target = $region36
        $region35: #{mlp_hand_forward.3} parent=27 // pred_region
          %s2130 = smul.u32 2, %s21
          %s2131 = smul.addr %s2130, 7
          %s2132 = sadd.s32 %s20, %s2131
          %s2133 = smul.addr %s2132, 8
          %s2134 = scalar_lea.vmem %s2, %s2133
          // Predicated region
          $region37: #{mlp_hand_forward.3} parent=35 // pred_check
            _
          $region38: #{mlp_hand_forward.3} parent=35 // pred_check_branch
            %2136 = sbr.rel (0) target = $region40
          $region39: #{mlp_hand_forward.3} parent=35 // pred_region
            // Predicated region
            $region41: #{mlp_hand_forward.3} parent=39 // pred_check
              _
            $region42: #{mlp_hand_forward.3} parent=39 // pred_check_branch
              %2138 = sbr.rel (0) target = $region44
            $region43: #{mlp_hand_forward.3} parent=39 // pred_region
              // Predicated region
              $region56: #{mlp_hand_forward.3} parent=43 // pred_check
                _
              $region57: #{mlp_hand_forward.3} parent=43 // pred_check_branch
                %2155 = sbr.rel (0) target = $region59
              $region58: #{mlp_hand_forward.3} parent=43 // pred_region
                loop: start=0, step=1, limit=1
                $region60: #{mlp_hand_forward.3} parent=58 // loop_pre_header
                  _
                $region61: #{mlp_hand_forward.3} parent=58 // loop_header
                  %s2157 = sphi 0, %s2161
                  %p2158 = scmp.ge.s32.totalorder %s2157, 1
                  %s2162 = sphi %s2126, %s2126
                  %s2163 = sphi %s2134, %s2134
                $region62: #{mlp_hand_forward.3} parent=58 // loop_header_branch
                  %2160 = sbr.rel (%p2158) target = $region66
                $region63: #{mlp_hand_forward.3} parent=58 // loop_body
                  %v2164 = vld [vmem:[%s2162] sm:$0xff]
                  %2165 = vst [vmem:[%s2163] sm:$0xff] %v2164
                  %v2166 = vld [vmem:[%s2162 + $0x8] sm:$0xff]
                  %2167 = vst [vmem:[%s2163 + $0x38] sm:$0xff] %v2166
                $region64: #{mlp_hand_forward.3} parent=58 // loop_footer
                  %s2161 = sadd.s32 1, %s2157
                $region65: #{mlp_hand_forward.3} parent=58 // loop_footer_branch
                  %2156 = sbr.rel target = $region61
                $region66: #{mlp_hand_forward.3} parent=58 // loop_exit
                  _
              $region59: #{mlp_hand_forward.3} parent=43 // pred_fallthru
                _
              // Predicated region
              $region67: #{mlp_hand_forward.3} parent=43 // pred_check
                _
              $region68: #{mlp_hand_forward.3} parent=43 // pred_check_branch
                %2169 = sbr.rel target = $region70
              $region69: #{mlp_hand_forward.3} parent=43 // pred_region
                _
              $region70: #{mlp_hand_forward.3} parent=43 // pred_fallthru
                _
            $region44: #{mlp_hand_forward.3} parent=39 // pred_fallthru
              _
            // Predicated region
            $region45: #{mlp_hand_forward.3} parent=39 // pred_check
              _
            $region46: #{mlp_hand_forward.3} parent=39 // pred_check_branch
              %2140 = sbr.rel target = $region48
            $region47: #{mlp_hand_forward.3} parent=39 // pred_region
              loop: start=0, step=1, limit=1
              $region49: #{mlp_hand_forward.3} parent=47 // loop_pre_header
                _
              $region50: #{mlp_hand_forward.3} parent=47 // loop_header
                %s2143 = sphi 0, %s2147
                %p2144 = scmp.ge.s32.totalorder %s2143, 1
                %s2148 = sphi %s2126, %s2126
                %s2149 = sphi %s2134, %s2134
              $region51: #{mlp_hand_forward.3} parent=47 // loop_header_branch
                %2146 = sbr.rel (%p2144) target = $region55
              $region52: #{mlp_hand_forward.3} parent=47 // loop_body
                %v2150 = vld [vmem:[%s2148] sm:$0xff]
                %2151 = vst [vmem:[%s2149] sm:$0xff] %v2150
                %v2152 = vld [vmem:[%s2148 + $0x8] sm:$0xff]
                %2153 = vst [vmem:[%s2149 + $0x38] sm:$0xff] %v2152
              $region53: #{mlp_hand_forward.3} parent=47 // loop_footer
                %s2147 = sadd.s32 1, %s2143
              $region54: #{mlp_hand_forward.3} parent=47 // loop_footer_branch
                %2142 = sbr.rel target = $region50
              $region55: #{mlp_hand_forward.3} parent=47 // loop_exit
                _
            $region48: #{mlp_hand_forward.3} parent=39 // pred_fallthru
              _
          $region40: #{mlp_hand_forward.3} parent=35 // pred_fallthru
            _
          %2170 = vnop
        $region36: #{mlp_hand_forward.3} parent=27 // pred_fallthru
          _
      $region28: #{mlp_hand_forward.3} parent=5 // pred_fallthru
        _
      %p2171 = scmp.le.s32.totalorder 2, %s11
      // Predicated region
      $region71: #{mlp_hand_forward.3} parent=5 // pred_check
        %p2172 = pneg %p2171
      $region72: #{mlp_hand_forward.3} parent=5 // pred_check_branch
        %2174 = sbr.rel (%p2172) target = $region74
      $region73: #{mlp_hand_forward.3} parent=5 // pred_region
        %s2175 = ssub.s32 %s11, 2
        // Predicated region
        $region75: #{mlp_hand_forward.3} parent=73 // pred_check
          %p2176 = pneg %p106
        $region76: #{mlp_hand_forward.3} parent=73 // pred_check_branch
          %2178 = sbr.rel (%p2176) target = $region78
        $region77: #{mlp_hand_forward.3} parent=73 // pred_region
          %s2179 = sand.u32 %s91, 1
          %s2180 = sand.u32 %s91, 1
          %s2181 = smul.addr %s2180, 16
          %s2182 = scalar_lea.vmem [#allocation4], %s2181
        $region78: #{mlp_hand_forward.3} parent=73 // pred_fallthru
          _
      $region74: #{mlp_hand_forward.3} parent=5 // pred_fallthru
        _
    $region6: #{mlp_hand_forward.3} parent=1 // loop_footer
      %s15 = sadd.s32 1, %s11
    $region7: #{mlp_hand_forward.3} parent=1 // loop_footer_branch
      %10 = sbr.rel target = $region3
    $region8: #{mlp_hand_forward.3} parent=1 // loop_exit
      _
    %2183 = vsyncpa [#allocation3], 1
    %s2184 = scalar_lea.sflag [#allocation3], 1
    %2185 = vsyncpa %s2184, 1

</llo_original>
